<compile_context>
chip_gen: v6e
topology: v6e:2x2x1
jax: 0.10.0
libtpu: 0.0.40
codegen_flags: <defaults>
</compile_context>

<pallas_src>
import functools

import numpy as np
import jax
import jax.numpy as jnp
from jax.experimental import pallas as pl
from jax.experimental.pallas import tpu as pltpu

C_MID = 24          # hidden channels of the conv stack
LRELU_SLOPE = 0.01  # InPlaceABNSync default activation_param
BN_EPS = 1e-5


# ----------------------------------------------------------------------------
# Pallas kernel: resize(alpha,gamma) -> conv1x1 -> BN+lrelu -> conv3x3 ->
#                BN+lrelu -> conv1x1+bias.   One grid step per batch element.
# Activations live in a channel-major, lane-dense (C, H*W) layout.
# ----------------------------------------------------------------------------
def _hb_combine_kernel(a_ref, b_ref, g_ref,
                       rxa_ref, kya_ref, rxg_ref, kyg_ref,
                       w1_ref, b1_ref, w2_ref, b2_ref, w3_ref, b3_ref,
                       o_ref, rows_sc, flat_sc, *, c, h, w):
    hw = h * w

    def resize_to_chw(src_ref, rx_ref, ky_ref):
        # src_ref block: (1, c*h_src, w_src) f32, rows = (channel, src-row).
        t = jnp.dot(src_ref[0], rx_ref[...],
                    preferred_element_type=jnp.float32)          # (c*h_src, w)
        rows_sc[...] = jnp.dot(ky_ref[...], t,
                               preferred_element_type=jnp.float32)  # (c*h, w)
        # (c*h, w) -> (c, h*w) relayout through VMEM: for each output row y,
        # gather the c rows {ci*h + y} with one strided sublane read.
        for y in range(h):
            flat_sc[:, y * w:(y + 1) * w] = rows_sc[pl.ds(y, c, stride=h), :]
        return flat_sc[...].astype(jnp.bfloat16)                 # (c, hw)

    # ---- conv1x1 #1 (BN scale folded), accumulated per source ----
    ra = resize_to_chw(a_ref, rxa_ref, kya_ref)
    y1 = jnp.dot(w1_ref[0], ra, preferred_element_type=jnp.float32)
    xb = b_ref[0].astype(jnp.bfloat16)
    y1 = y1 + jnp.dot(w1_ref[1], xb, preferred_element_type=jnp.float32)
    rg = resize_to_chw(g_ref, rxg_ref, kyg_ref)
    y1 = y1 + jnp.dot(w1_ref[2], rg, preferred_element_type=jnp.float32)

    y1 = y1 + b1_ref[...]
    y1 = jnp.where(y1 >= 0.0, y1, LRELU_SLOPE * y1)              # (24, hw) f32

    # ---- border masks for the pad=1 3x3 conv, built from a lane iota ----
    pos = jax.lax.broadcasted_iota(jnp.int32, (1, hw), 1)
    col = pos % w
    m_top = (pos >= w).astype(jnp.float32)            # row >= 1     (di = -1)
    m_bot = (pos < (h - 1) * w).astype(jnp.float32)   # row <= h-2   (di = +1)
    m_lft = (col >= 1).astype(jnp.float32)            # col >= 1     (dj = -1)
    m_rgt = (col <= w - 2).astype(jnp.float32)        # col <= w-2   (dj = +1)
    row_mask = {-1: m_top, 0: None, 1: m_bot}
    col_mask = {-1: m_lft, 0: None, 1: m_rgt}

    # ---- conv3x3 (BN scale folded): 9x roll + mask + per-tap dot accumulate
    acc = None
    k = 0
    for di in (-1, 0, 1):
        for dj in (-1, 0, 1):
            off = di * w + dj                 # flat-index offset of this tap
            tap = y1 if off == 0 else pltpu.roll(y1, shift=(-off) % hw, axis=1)
            rm, cm = row_mask[di], col_mask[dj]
            if rm is not None and cm is not None:
                mask = rm * cm
            elif rm is not None:
                mask = rm
            else:
                mask = cm
            if mask is not None:
                tap = tap * mask
            d = jnp.dot(w2_ref[k], tap.astype(jnp.bfloat16),
                        preferred_element_type=jnp.float32)
            acc = d if acc is None else acc + d
            k += 1

    y2 = acc + b2_ref[...]
    y2 = jnp.where(y2 >= 0.0, y2, LRELU_SLOPE * y2)              # (24, hw) f32

    # ---- conv1x1 #2 + bias ----
    out = jnp.dot(w3_ref[...], y2.astype(jnp.bfloat16),
                  preferred_element_type=jnp.float32)
    o_ref[0] = (out + b3_ref[...]).astype(o_ref.dtype)


# ----------------------------------------------------------------------------
# Host-side helpers (static shapes -> plain numpy)
# ----------------------------------------------------------------------------
def _resize_matrix(out_size, in_size):
    """(out_size, in_size) bilinear interpolation matrix, align_corners=True."""
    m = np.zeros((out_size, in_size), np.float32)
    if in_size == 1 or out_size == 1:
        m[:, 0] = 1.0
        return m
    coords = np.arange(out_size, dtype=np.float64) * (in_size - 1) / (out_size - 1)
    lo = np.clip(np.floor(coords).astype(np.int64), 0, in_size - 1)
    hi = np.minimum(lo + 1, in_size - 1)
    frac = coords - lo
    for o in range(out_size):
        m[o, lo[o]] += 1.0 - frac[o]
        m[o, hi[o]] += frac[o]
    return m


# ----------------------------------------------------------------------------
# Forward wrapper
# ----------------------------------------------------------------------------
def hb_combine_block_forward(alpha_x, beta_x, gamma_x, params):
    n, c, h, w = beta_x.shape            # c == hb_cls
    _, _, ha, wa = alpha_x.shape
    _, _, hg, wg = gamma_x.shape
    hw = h * w

    # Free contiguous reshapes: NCHW -> rows=(channel, src-row), cols=src-col.
    a_flat = alpha_x.reshape(n, c * ha, wa).astype(jnp.float32)
    b_flat = beta_x.reshape(n, c, hw).astype(jnp.float32)
    g_flat = gamma_x.reshape(n, c * hg, wg).astype(jnp.float32)

    # Small static resize operators (align_corners=True bilinear).
    eye_c = np.eye(c, dtype=np.float32)
    rxa = jnp.asarray(_resize_matrix(w, wa).T)                       # (wa, w)
    kya = jnp.asarray(np.kron(eye_c, _resize_matrix(h, ha)))        # (c*h, c*ha)
    rxg = jnp.asarray(_resize_matrix(w, wg).T)                       # (wg, w)
    kyg = jnp.asarray(np.kron(eye_c, _resize_matrix(h, hg)))        # (c*h, c*hg)

    # Fold BN scales into conv weights; (c_out, c_in) layout; bf16 for MXU.
    w1 = params["w1"] * params["scale1"][None, :]                    # (3c, 24)
    w1_blocks = jnp.stack([w1[0:c].T, w1[c:2 * c].T, w1[2 * c:].T]
                          ).astype(jnp.bfloat16)                     # (3,24,c)
    b1 = params["shift1"].reshape(C_MID, 1).astype(jnp.float32)
    w2s = params["w2"] * params["scale2"][None, None, :]             # (9,ci,co)
    w2_blocks = jnp.transpose(w2s, (0, 2, 1)).astype(jnp.bfloat16)   # (9,co,ci)
    b2 = params["shift2"].reshape(C_MID, 1).astype(jnp.float32)
    w3t = params["w3"].T.astype(jnp.bfloat16)                        # (c, 24)
    b3 = params["b3"].reshape(c, 1).astype(jnp.float32)

    kernel = functools.partial(_hb_combine_kernel, c=c, h=h, w=w)

    out_flat = pl.pallas_call(
        kernel,
        out_shape=jax.ShapeDtypeStruct((n, c, hw), jnp.float32),
        grid=(n,),
        in_specs=[
            pl.BlockSpec((1, c * ha, wa), lambda i: (i, 0, 0)),      # alpha
            pl.BlockSpec((1, c, hw), lambda i: (i, 0, 0)),           # beta
            pl.BlockSpec((1, c * hg, wg), lambda i: (i, 0, 0)),      # gamma
            pl.BlockSpec((wa, w), lambda i: (0, 0)),                 # rxa
            pl.BlockSpec((c * h, c * ha), lambda i: (0, 0)),         # kya
            pl.BlockSpec((wg, w), lambda i: (0, 0)),                 # rxg
            pl.BlockSpec((c * h, c * hg), lambda i: (0, 0)),         # kyg
            pl.BlockSpec((3, C_MID, c), lambda i: (0, 0, 0)),        # w1 blocks
            pl.BlockSpec((C_MID, 1), lambda i: (0, 0)),              # b1
            pl.BlockSpec((9, C_MID, C_MID), lambda i: (0, 0, 0)),    # w2 blocks
            pl.BlockSpec((C_MID, 1), lambda i: (0, 0)),              # b2
            pl.BlockSpec((c, C_MID), lambda i: (0, 0)),              # w3
            pl.BlockSpec((c, 1), lambda i: (0, 0)),                  # b3
        ],
        out_specs=pl.BlockSpec((1, c, hw), lambda i: (i, 0, 0)),
        scratch_shapes=[pltpu.VMEM((c * h, w), jnp.float32),         # rows_sc
                        pltpu.VMEM((c, hw), jnp.float32)],           # flat_sc
        compiler_params=pltpu.CompilerParams(
            dimension_semantics=("parallel",),
            vmem_limit_bytes=32 * 1024 * 1024),
    )(a_flat, b_flat, g_flat, rxa, kya, rxg, kyg,
      w1_blocks, b1, w2_blocks, b2, w3t, b3)

    return out_flat.reshape(n, c, h, w)                              # NCHW


# ----------------------------------------------------------------------------
# Deterministic synthetic parameters (shapes from the module's __init__)
# ----------------------------------------------------------------------------
def init_params(key, hb_cls):
    cin = 3 * hb_cls
    ks = jax.random.split(key, 12)

    def bn_fold(kg, kb, km, kv):
        gamma = 1.0 + 0.1 * jax.random.normal(kg, (C_MID,), jnp.float32)
        beta = 0.1 * jax.random.normal(kb, (C_MID,), jnp.float32)
        mean = 0.1 * jax.random.normal(km, (C_MID,), jnp.float32)
        var = 1.0 + 0.1 * jnp.abs(jax.random.normal(kv, (C_MID,), jnp.float32))
        scale = gamma / jnp.sqrt(var + BN_EPS)
        shift = beta - mean * scale
        return scale, shift

    scale1, shift1 = bn_fold(ks[1], ks[2], ks[3], ks[4])
    scale2, shift2 = bn_fold(ks[6], ks[7], ks[8], ks[9])
    return {
        "w1": 0.2 * jax.random.normal(ks[0], (cin, C_MID), jnp.float32),
        "scale1": scale1, "shift1": shift1,
        # w2[k, c_in, c_out] with k = kh*3 + kw
        "w2": 0.1 * jax.random.normal(ks[5], (9, C_MID, C_MID), jnp.float32),
        "scale2": scale2, "shift2": shift2,
        "w3": 0.2 * jax.random.normal(ks[10], (C_MID, hb_cls), jnp.float32),
        "b3": 0.1 * jax.random.normal(ks[11], (hb_cls,), jnp.float32),
    }


# ----------------------------------------------------------------------------
# Pure-JAX f32 reference (XLA convs, gather-based resize) for sanity check
# ----------------------------------------------------------------------------
def _resize_bilinear_gather(img, out_h, out_w):
    n, c, h, w = img.shape
    if (h, w) == (out_h, out_w):
        return img

    def src_coords(out_size, in_size):
        if out_size > 1 and in_size > 1:
            return (jnp.arange(out_size, dtype=jnp.float32)
                    * ((in_size - 1.0) / (out_size - 1.0)))
        return jnp.zeros((out_size,), jnp.float32)

    ys = src_coords(out_h, h)
    xs = src_coords(out_w, w)
    y0 = jnp.clip(jnp.floor(ys), 0, h - 1).astype(jnp.int32)
    y1 = jnp.minimum(y0 + 1, h - 1)
    wy = ys - y0.astype(jnp.float32)
    x0 = jnp.clip(jnp.floor(xs), 0, w - 1).astype(jnp.int32)
    x1 = jnp.minimum(x0 + 1, w - 1)
    wx = xs - x0.astype(jnp.float32)

    r0 = jnp.take(img, y0, axis=2)
    r1 = jnp.take(img, y1, axis=2)
    r00 = jnp.take(r0, x0, axis=3)
    r01 = jnp.take(r0, x1, axis=3)
    r10 = jnp.take(r1, x0, axis=3)
    r11 = jnp.take(r1, x1, axis=3)

    wx_b = wx[None, None, None, :]
    wy_b = wy[None, None, :, None]
    top = r00 * (1.0 - wx_b) + r01 * wx_b
    bot = r10 * (1.0 - wx_b) + r11 * wx_b
    return top * (1.0 - wy_b) + bot * wy_b


def _reference(alpha_x, beta_x, gamma_x, p):
    h, w = beta_x.shape[2], beta_x.shape[3]
    a = _resize_bilinear_gather(alpha_x, h, w)
    g = _resize_bilinear_gather(gamma_x, h, w)
    x = jnp.concatenate([a, beta_x, g], axis=1)
    dn = ("NCHW", "OIHW", "NCHW")
    hp = jax.lax.Precision.HIGHEST

    w1 = jnp.transpose(p["w1"])[:, :, None, None]
    y = jax.lax.conv_general_dilated(x, w1, (1, 1), "VALID",
                                     dimension_numbers=dn, precision=hp)
    y = y * p["scale1"][None, :, None, None] + p["shift1"][None, :, None, None]
    y = jnp.where(y >= 0.0, y, LRELU_SLOPE * y)

    w2 = jnp.transpose(p["w2"].reshape(3, 3, C_MID, C_MID), (3, 2, 0, 1))
    y = jax.lax.conv_general_dilated(y, w2, (1, 1), ((1, 1), (1, 1)),
                                     dimension_numbers=dn, precision=hp)
    y = y * p["scale2"][None, :, None, None] + p["shift2"][None, :, None, None]
    y = jnp.where(y >= 0.0, y, LRELU_SLOPE * y)

    w3 = jnp.transpose(p["w3"])[:, :, None, None]
    y = jax.lax.conv_general_dilated(y, w3, (1, 1), "VALID",
                                     dimension_numbers=dn, precision=hp)
    return y + p["b3"][None, :, None, None]


if __name__ == "__main__":
    hb_cls = 4
    key = jax.random.PRNGKey(0)
    k_in, k_par = jax.random.split(key)
    ka, kb, kg = jax.random.split(k_in, 3)

    # alpha / gamma come in at different resolutions and get resized to beta's.
    alpha_x = jax.random.normal(ka, (2, hb_cls, 8, 8), jnp.float32)
    beta_x = jax.random.normal(kb, (2, hb_cls, 16, 16), jnp.float32)
    gamma_x = jax.random.normal(kg, (2, hb_cls, 32, 32), jnp.float32)

    params = init_params(k_par, hb_cls)

    fwd = jax.jit(hb_combine_block_forward)
    out = jax.block_until_ready(fwd(alpha_x, beta_x, gamma_x, params))
    assert out.shape == (2, hb_cls, 16, 16)

    ref = jax.block_until_ready(_reference(alpha_x, beta_x, gamma_x, params))
    rel_err = float(jnp.max(jnp.abs(out - ref)) /
                    (jnp.max(jnp.abs(ref)) + 1e-6))
    # bf16 MXU operands with f32 accumulation: expect ~1e-2 scale error.
    if rel_err < 2e-2:
        print("KERNEL_OK")
    else:
        raise SystemExit(f"mismatch vs reference: rel_err={rel_err}")
</pallas_src>

<mosaic_0001>
module attributes {stable_mosaic.version = 11 : i64} {
  func.func @_hb_combine_kernel(%arg0: i32, %arg1: memref<1x32x8xf32, #tpu.memory_space<vmem>>, %arg2: memref<1x4x256xf32, #tpu.memory_space<vmem>>, %arg3: memref<1x128x32xf32, #tpu.memory_space<vmem>>, %arg4: memref<8x16xf32, #tpu.memory_space<vmem>>, %arg5: memref<64x32xf32, #tpu.memory_space<vmem>>, %arg6: memref<32x16xf32, #tpu.memory_space<vmem>>, %arg7: memref<64x128xf32, #tpu.memory_space<vmem>>, %arg8: memref<3x24x4xbf16, #tpu.memory_space<vmem>>, %arg9: memref<24x1xf32, #tpu.memory_space<vmem>>, %arg10: memref<9x24x24xbf16, #tpu.memory_space<vmem>>, %arg11: memref<24x1xf32, #tpu.memory_space<vmem>>, %arg12: memref<4x24xbf16, #tpu.memory_space<vmem>>, %arg13: memref<4x1xf32, #tpu.memory_space<vmem>>, %arg14: memref<1x4x256xf32, #tpu.memory_space<vmem>>, %arg15: memref<64x16xf32, #tpu.memory_space<vmem>>, %arg16: memref<4x256xf32, #tpu.memory_space<vmem>>) attributes {dimension_semantics = [#tpu.dimension_semantics<parallel>], iteration_bounds = array<i64: 2>, scalar_prefetch = 0 : i64, scratch_operands = 2 : i64, tpu.core_type = #tpu.core_type<tc>, window_params = [{transform_indices = @transform_0, window_bounds = array<i64: 1, 32, 8>}, {transform_indices = @transform_1, window_bounds = array<i64: 1, 4, 256>}, {transform_indices = @transform_2, window_bounds = array<i64: 1, 128, 32>}, {pipeline_mode = #tpu.pipeline_mode<synchronous>, transform_indices = @transform_3, window_bounds = array<i64: 8, 16>}, {pipeline_mode = #tpu.pipeline_mode<synchronous>, transform_indices = @transform_4, window_bounds = array<i64: 64, 32>}, {pipeline_mode = #tpu.pipeline_mode<synchronous>, transform_indices = @transform_5, window_bounds = array<i64: 32, 16>}, {pipeline_mode = #tpu.pipeline_mode<synchronous>, transform_indices = @transform_6, window_bounds = array<i64: 64, 128>}, {pipeline_mode = #tpu.pipeline_mode<synchronous>, transform_indices = @transform_7, window_bounds = array<i64: 3, 24, 4>}, {pipeline_mode = #tpu.pipeline_mode<synchronous>, transform_indices = @transform_8, window_bounds = array<i64: 24, 1>}, {pipeline_mode = #tpu.pipeline_mode<synchronous>, transform_indices = @transform_9, window_bounds = array<i64: 9, 24, 24>}, {pipeline_mode = #tpu.pipeline_mode<synchronous>, transform_indices = @transform_10, window_bounds = array<i64: 24, 1>}, {pipeline_mode = #tpu.pipeline_mode<synchronous>, transform_indices = @transform_11, window_bounds = array<i64: 4, 24>}, {pipeline_mode = #tpu.pipeline_mode<synchronous>, transform_indices = @transform_12, window_bounds = array<i64: 4, 1>}, {transform_indices = @transform_13, window_bounds = array<i64: 1, 4, 256>}]} {
    %c0 = arith.constant 0 : index
    %c0_0 = arith.constant 0 : index
    %c0_1 = arith.constant 0 : index
    %0 = vector.load %arg1[%c0, %c0_0, %c0_1] : memref<1x32x8xf32, #tpu.memory_space<vmem>>, vector<1x32x8xf32>
    %1 = vector.shape_cast %0 : vector<1x32x8xf32> to vector<32x8xf32>
    %c0_2 = arith.constant 0 : index
    %c0_3 = arith.constant 0 : index
    %2 = vector.load %arg4[%c0_2, %c0_3] : memref<8x16xf32, #tpu.memory_space<vmem>>, vector<8x16xf32>
    %cst = arith.constant dense<0.000000e+00> : vector<32x16xf32>
    %3 = tpu.matmul %1, %2, %cst {dimension_numbers = #tpu.dot_dimension_numbers<[1], [0], [0], [1], [0, 0, 1, 1], [], []>} : vector<32x8xf32>, vector<8x16xf32>, vector<32x16xf32> -> vector<32x16xf32>
    %c0_4 = arith.constant 0 : index
    %c0_5 = arith.constant 0 : index
    %4 = vector.load %arg5[%c0_4, %c0_5] : memref<64x32xf32, #tpu.memory_space<vmem>>, vector<64x32xf32>
    %cst_6 = arith.constant dense<0.000000e+00> : vector<64x16xf32>
    %5 = tpu.matmul %4, %3, %cst_6 {dimension_numbers = #tpu.dot_dimension_numbers<[1], [0], [0], [1], [0, 0, 1, 1], [], []>} : vector<64x32xf32>, vector<32x16xf32>, vector<64x16xf32> -> vector<64x16xf32>
    %c0_7 = arith.constant 0 : index
    %c0_8 = arith.constant 0 : index
    %6 = vector.load %arg15[%c0_7, %c0_8] : memref<64x16xf32, #tpu.memory_space<vmem>>, vector<64x16xf32>
    tpu.vector_store %arg15[%c0_7, %c0_8], %5 {strides = array<i32>} : memref<64x16xf32, #tpu.memory_space<vmem>>, vector<64x16xf32>,
    %c0_9 = arith.constant 0 : index
    %c0_10 = arith.constant 0 : index
    %7 = tpu.strided_load %arg15[%c0_9, %c0_10] {strides = array<i32: 16, 1>} : memref<64x16xf32, #tpu.memory_space<vmem>>, vector<4x16xf32>
    %c0_11 = arith.constant 0 : index
    %c0_12 = arith.constant 0 : index
    %8 = vector.load %arg16[%c0_11, %c0_12] : memref<4x256xf32, #tpu.memory_space<vmem>>, vector<4x16xf32>
    tpu.vector_store %arg16[%c0_11, %c0_12], %7 {strides = array<i32>} : memref<4x256xf32, #tpu.memory_space<vmem>>, vector<4x16xf32>,
    %c1 = arith.constant 1 : index
    %c0_13 = arith.constant 0 : index
    %9 = tpu.strided_load %arg15[%c1, %c0_13] {strides = array<i32: 16, 1>} : memref<64x16xf32, #tpu.memory_space<vmem>>, vector<4x16xf32>
    %c0_14 = arith.constant 0 : index
    %c16 = arith.constant 16 : index
    %10 = vector.load %arg16[%c0_14, %c16] : memref<4x256xf32, #tpu.memory_space<vmem>>, vector<4x16xf32>
    tpu.vector_store %arg16[%c0_14, %c16], %9 {strides = array<i32>} : memref<4x256xf32, #tpu.memory_space<vmem>>, vector<4x16xf32>,
    %c2 = arith.constant 2 : index
    %c0_15 = arith.constant 0 : index
    %11 = tpu.strided_load %arg15[%c2, %c0_15] {strides = array<i32: 16, 1>} : memref<64x16xf32, #tpu.memory_space<vmem>>, vector<4x16xf32>
    %c0_16 = arith.constant 0 : index
    %c32 = arith.constant 32 : index
    %12 = vector.load %arg16[%c0_16, %c32] : memref<4x256xf32, #tpu.memory_space<vmem>>, vector<4x16xf32>
    tpu.vector_store %arg16[%c0_16, %c32], %11 {strides = array<i32>} : memref<4x256xf32, #tpu.memory_space<vmem>>, vector<4x16xf32>,
    %c3 = arith.constant 3 : index
    %c0_17 = arith.constant 0 : index
    %13 = tpu.strided_load %arg15[%c3, %c0_17] {strides = array<i32: 16, 1>} : memref<64x16xf32, #tpu.memory_space<vmem>>, vector<4x16xf32>
    %c0_18 = arith.constant 0 : index
    %c48 = arith.constant 48 : index
    %14 = vector.load %arg16[%c0_18, %c48] : memref<4x256xf32, #tpu.memory_space<vmem>>, vector<4x16xf32>
    tpu.vector_store %arg16[%c0_18, %c48], %13 {strides = array<i32>} : memref<4x256xf32, #tpu.memory_space<vmem>>, vector<4x16xf32>,
    %c4 = arith.constant 4 : index
    %c0_19 = arith.constant 0 : index
    %15 = tpu.strided_load %arg15[%c4, %c0_19] {strides = array<i32: 16, 1>} : memref<64x16xf32, #tpu.memory_space<vmem>>, vector<4x16xf32>
    %c0_20 = arith.constant 0 : index
    %c64 = arith.constant 64 : index
    %16 = vector.load %arg16[%c0_20, %c64] : memref<4x256xf32, #tpu.memory_space<vmem>>, vector<4x16xf32>
    tpu.vector_store %arg16[%c0_20, %c64], %15 {strides = array<i32>} : memref<4x256xf32, #tpu.memory_space<vmem>>, vector<4x16xf32>,
    %c5 = arith.constant 5 : index
    %c0_21 = arith.constant 0 : index
    %17 = tpu.strided_load %arg15[%c5, %c0_21] {strides = array<i32: 16, 1>} : memref<64x16xf32, #tpu.memory_space<vmem>>, vector<4x16xf32>
    %c0_22 = arith.constant 0 : index
    %c80 = arith.constant 80 : index
    %18 = vector.load %arg16[%c0_22, %c80] : memref<4x256xf32, #tpu.memory_space<vmem>>, vector<4x16xf32>
    tpu.vector_store %arg16[%c0_22, %c80], %17 {strides = array<i32>} : memref<4x256xf32, #tpu.memory_space<vmem>>, vector<4x16xf32>,
    %c6 = arith.constant 6 : index
    %c0_23 = arith.constant 0 : index
    %19 = tpu.strided_load %arg15[%c6, %c0_23] {strides = array<i32: 16, 1>} : memref<64x16xf32, #tpu.memory_space<vmem>>, vector<4x16xf32>
    %c0_24 = arith.constant 0 : index
    %c96 = arith.constant 96 : index
    %20 = vector.load %arg16[%c0_24, %c96] : memref<4x256xf32, #tpu.memory_space<vmem>>, vector<4x16xf32>
    tpu.vector_store %arg16[%c0_24, %c96], %19 {strides = array<i32>} : memref<4x256xf32, #tpu.memory_space<vmem>>, vector<4x16xf32>,
    %c7 = arith.constant 7 : index
    %c0_25 = arith.constant 0 : index
    %21 = tpu.strided_load %arg15[%c7, %c0_25] {strides = array<i32: 16, 1>} : memref<64x16xf32, #tpu.memory_space<vmem>>, vector<4x16xf32>
    %c0_26 = arith.constant 0 : index
    %c112 = arith.constant 112 : index
    %22 = vector.load %arg16[%c0_26, %c112] : memref<4x256xf32, #tpu.memory_space<vmem>>, vector<4x16xf32>
    tpu.vector_store %arg16[%c0_26, %c112], %21 {strides = array<i32>} : memref<4x256xf32, #tpu.memory_space<vmem>>, vector<4x16xf32>,
    %c8 = arith.constant 8 : index
    %c0_27 = arith.constant 0 : index
    %23 = tpu.strided_load %arg15[%c8, %c0_27] {strides = array<i32: 16, 1>} : memref<64x16xf32, #tpu.memory_space<vmem>>, vector<4x16xf32>
    %c0_28 = arith.constant 0 : index
    %c128 = arith.constant 128 : index
    %24 = vector.load %arg16[%c0_28, %c128] : memref<4x256xf32, #tpu.memory_space<vmem>>, vector<4x16xf32>
    tpu.vector_store %arg16[%c0_28, %c128], %23 {strides = array<i32>} : memref<4x256xf32, #tpu.memory_space<vmem>>, vector<4x16xf32>,
    %c9 = arith.constant 9 : index
    %c0_29 = arith.constant 0 : index
    %25 = tpu.strided_load %arg15[%c9, %c0_29] {strides = array<i32: 16, 1>} : memref<64x16xf32, #tpu.memory_space<vmem>>, vector<4x16xf32>
    %c0_30 = arith.constant 0 : index
    %c144 = arith.constant 144 : index
    %26 = vector.load %arg16[%c0_30, %c144] : memref<4x256xf32, #tpu.memory_space<vmem>>, vector<4x16xf32>
    tpu.vector_store %arg16[%c0_30, %c144], %25 {strides = array<i32>} : memref<4x256xf32, #tpu.memory_space<vmem>>, vector<4x16xf32>,
    %c10 = arith.constant 10 : index
    %c0_31 = arith.constant 0 : index
    %27 = tpu.strided_load %arg15[%c10, %c0_31] {strides = array<i32: 16, 1>} : memref<64x16xf32, #tpu.memory_space<vmem>>, vector<4x16xf32>
    %c0_32 = arith.constant 0 : index
    %c160 = arith.constant 160 : index
    %28 = vector.load %arg16[%c0_32, %c160] : memref<4x256xf32, #tpu.memory_space<vmem>>, vector<4x16xf32>
    tpu.vector_store %arg16[%c0_32, %c160], %27 {strides = array<i32>} : memref<4x256xf32, #tpu.memory_space<vmem>>, vector<4x16xf32>,
    %c11 = arith.constant 11 : index
    %c0_33 = arith.constant 0 : index
    %29 = tpu.strided_load %arg15[%c11, %c0_33] {strides = array<i32: 16, 1>} : memref<64x16xf32, #tpu.memory_space<vmem>>, vector<4x16xf32>
    %c0_34 = arith.constant 0 : index
    %c176 = arith.constant 176 : index
    %30 = vector.load %arg16[%c0_34, %c176] : memref<4x256xf32, #tpu.memory_space<vmem>>, vector<4x16xf32>
    tpu.vector_store %arg16[%c0_34, %c176], %29 {strides = array<i32>} : memref<4x256xf32, #tpu.memory_space<vmem>>, vector<4x16xf32>,
    %c12 = arith.constant 12 : index
    %c0_35 = arith.constant 0 : index
    %31 = tpu.strided_load %arg15[%c12, %c0_35] {strides = array<i32: 16, 1>} : memref<64x16xf32, #tpu.memory_space<vmem>>, vector<4x16xf32>
    %c0_36 = arith.constant 0 : index
    %c192 = arith.constant 192 : index
    %32 = vector.load %arg16[%c0_36, %c192] : memref<4x256xf32, #tpu.memory_space<vmem>>, vector<4x16xf32>
    tpu.vector_store %arg16[%c0_36, %c192], %31 {strides = array<i32>} : memref<4x256xf32, #tpu.memory_space<vmem>>, vector<4x16xf32>,
    %c13 = arith.constant 13 : index
    %c0_37 = arith.constant 0 : index
    %33 = tpu.strided_load %arg15[%c13, %c0_37] {strides = array<i32: 16, 1>} : memref<64x16xf32, #tpu.memory_space<vmem>>, vector<4x16xf32>
    %c0_38 = arith.constant 0 : index
    %c208 = arith.constant 208 : index
    %34 = vector.load %arg16[%c0_38, %c208] : memref<4x256xf32, #tpu.memory_space<vmem>>, vector<4x16xf32>
    tpu.vector_store %arg16[%c0_38, %c208], %33 {strides = array<i32>} : memref<4x256xf32, #tpu.memory_space<vmem>>, vector<4x16xf32>,
    %c14 = arith.constant 14 : index
    %c0_39 = arith.constant 0 : index
    %35 = tpu.strided_load %arg15[%c14, %c0_39] {strides = array<i32: 16, 1>} : memref<64x16xf32, #tpu.memory_space<vmem>>, vector<4x16xf32>
    %c0_40 = arith.constant 0 : index
    %c224 = arith.constant 224 : index
    %36 = vector.load %arg16[%c0_40, %c224] : memref<4x256xf32, #tpu.memory_space<vmem>>, vector<4x16xf32>
    tpu.vector_store %arg16[%c0_40, %c224], %35 {strides = array<i32>} : memref<4x256xf32, #tpu.memory_space<vmem>>, vector<4x16xf32>,
    %c15 = arith.constant 15 : index
    %c0_41 = arith.constant 0 : index
    %37 = tpu.strided_load %arg15[%c15, %c0_41] {strides = array<i32: 16, 1>} : memref<64x16xf32, #tpu.memory_space<vmem>>, vector<4x16xf32>
    %c0_42 = arith.constant 0 : index
    %c240 = arith.constant 240 : index
    %38 = vector.load %arg16[%c0_42, %c240] : memref<4x256xf32, #tpu.memory_space<vmem>>, vector<4x16xf32>
    tpu.vector_store %arg16[%c0_42, %c240], %37 {strides = array<i32>} : memref<4x256xf32, #tpu.memory_space<vmem>>, vector<4x16xf32>,
    %c0_43 = arith.constant 0 : index
    %c0_44 = arith.constant 0 : index
    %39 = vector.load %arg16[%c0_43, %c0_44] : memref<4x256xf32, #tpu.memory_space<vmem>>, vector<4x256xf32>
    %40 = arith.truncf %39 : vector<4x256xf32> to vector<4x256xbf16>
    %c0_45 = arith.constant 0 : index
    %c0_46 = arith.constant 0 : index
    %c0_47 = arith.constant 0 : index
    %41 = vector.load %arg8[%c0_45, %c0_46, %c0_47] : memref<3x24x4xbf16, #tpu.memory_space<vmem>>, vector<1x24x4xbf16>
    %42 = vector.shape_cast %41 : vector<1x24x4xbf16> to vector<24x4xbf16>
    %cst_48 = arith.constant dense<0.000000e+00> : vector<24x256xf32>
    %43 = tpu.matmul %42, %40, %cst_48 {dimension_numbers = #tpu.dot_dimension_numbers<[1], [0], [0], [1], [0, 0, 1, 1], [], []>} : vector<24x4xbf16>, vector<4x256xbf16>, vector<24x256xf32> -> vector<24x256xf32>
    %c0_49 = arith.constant 0 : index
    %c0_50 = arith.constant 0 : index
    %c0_51 = arith.constant 0 : index
    %44 = vector.load %arg2[%c0_49, %c0_50, %c0_51] : memref<1x4x256xf32, #tpu.memory_space<vmem>>, vector<1x4x256xf32>
    %45 = vector.shape_cast %44 : vector<1x4x256xf32> to vector<4x256xf32>
    %46 = arith.truncf %45 : vector<4x256xf32> to vector<4x256xbf16>
    %c1_52 = arith.constant 1 : index
    %c0_53 = arith.constant 0 : index
    %c0_54 = arith.constant 0 : index
    %47 = vector.load %arg8[%c1_52, %c0_53, %c0_54] : memref<3x24x4xbf16, #tpu.memory_space<vmem>>, vector<1x24x4xbf16>
    %48 = vector.shape_cast %47 : vector<1x24x4xbf16> to vector<24x4xbf16>
    %cst_55 = arith.constant dense<0.000000e+00> : vector<24x256xf32>
    %49 = tpu.matmul %48, %46, %cst_55 {dimension_numbers = #tpu.dot_dimension_numbers<[1], [0], [0], [1], [0, 0, 1, 1], [], []>} : vector<24x4xbf16>, vector<4x256xbf16>, vector<24x256xf32> -> vector<24x256xf32>
    %50 = arith.addf %43, %49 : vector<24x256xf32>
    %c0_56 = arith.constant 0 : index
    %c0_57 = arith.constant 0 : index
    %c0_58 = arith.constant 0 : index
    %51 = vector.load %arg3[%c0_56, %c0_57, %c0_58] : memref<1x128x32xf32, #tpu.memory_space<vmem>>, vector<1x128x32xf32>
    %52 = vector.shape_cast %51 : vector<1x128x32xf32> to vector<128x32xf32>
    %c0_59 = arith.constant 0 : index
    %c0_60 = arith.constant 0 : index
    %53 = vector.load %arg6[%c0_59, %c0_60] : memref<32x16xf32, #tpu.memory_space<vmem>>, vector<32x16xf32>
    %cst_61 = arith.constant dense<0.000000e+00> : vector<128x16xf32>
    %54 = tpu.matmul %52, %53, %cst_61 {dimension_numbers = #tpu.dot_dimension_numbers<[1], [0], [0], [1], [0, 0, 1, 1], [], []>} : vector<128x32xf32>, vector<32x16xf32>, vector<128x16xf32> -> vector<128x16xf32>
    %c0_62 = arith.constant 0 : index
    %c0_63 = arith.constant 0 : index
    %55 = vector.load %arg7[%c0_62, %c0_63] : memref<64x128xf32, #tpu.memory_space<vmem>>, vector<64x128xf32>
    %cst_64 = arith.constant dense<0.000000e+00> : vector<64x16xf32>
    %56 = tpu.matmul %55, %54, %cst_64 {dimension_numbers = #tpu.dot_dimension_numbers<[1], [0], [0], [1], [0, 0, 1, 1], [], []>} : vector<64x128xf32>, vector<128x16xf32>, vector<64x16xf32> -> vector<64x16xf32>
    %c0_65 = arith.constant 0 : index
    %c0_66 = arith.constant 0 : index
    %57 = vector.load %arg15[%c0_65, %c0_66] : memref<64x16xf32, #tpu.memory_space<vmem>>, vector<64x16xf32>
    tpu.vector_store %arg15[%c0_65, %c0_66], %56 {strides = array<i32>} : memref<64x16xf32, #tpu.memory_space<vmem>>, vector<64x16xf32>,
    %c0_67 = arith.constant 0 : index
    %c0_68 = arith.constant 0 : index
    %58 = tpu.strided_load %arg15[%c0_67, %c0_68] {strides = array<i32: 16, 1>} : memref<64x16xf32, #tpu.memory_space<vmem>>, vector<4x16xf32>
    %c0_69 = arith.constant 0 : index
    %c0_70 = arith.constant 0 : index
    %59 = vector.load %arg16[%c0_69, %c0_70] : memref<4x256xf32, #tpu.memory_space<vmem>>, vector<4x16xf32>
    tpu.vector_store %arg16[%c0_69, %c0_70], %58 {strides = array<i32>} : memref<4x256xf32, #tpu.memory_space<vmem>>, vector<4x16xf32>,
    %c1_71 = arith.constant 1 : index
    %c0_72 = arith.constant 0 : index
    %60 = tpu.strided_load %arg15[%c1_71, %c0_72] {strides = array<i32: 16, 1>} : memref<64x16xf32, #tpu.memory_space<vmem>>, vector<4x16xf32>
    %c0_73 = arith.constant 0 : index
    %c16_74 = arith.constant 16 : index
    %61 = vector.load %arg16[%c0_73, %c16_74] : memref<4x256xf32, #tpu.memory_space<vmem>>, vector<4x16xf32>
    tpu.vector_store %arg16[%c0_73, %c16_74], %60 {strides = array<i32>} : memref<4x256xf32, #tpu.memory_space<vmem>>, vector<4x16xf32>,
    %c2_75 = arith.constant 2 : index
    %c0_76 = arith.constant 0 : index
    %62 = tpu.strided_load %arg15[%c2_75, %c0_76] {strides = array<i32: 16, 1>} : memref<64x16xf32, #tpu.memory_space<vmem>>, vector<4x16xf32>
    %c0_77 = arith.constant 0 : index
    %c32_78 = arith.constant 32 : index
    %63 = vector.load %arg16[%c0_77, %c32_78] : memref<4x256xf32, #tpu.memory_space<vmem>>, vector<4x16xf32>
    tpu.vector_store %arg16[%c0_77, %c32_78], %62 {strides = array<i32>} : memref<4x256xf32, #tpu.memory_space<vmem>>, vector<4x16xf32>,
    %c3_79 = arith.constant 3 : index
    %c0_80 = arith.constant 0 : index
    %64 = tpu.strided_load %arg15[%c3_79, %c0_80] {strides = array<i32: 16, 1>} : memref<64x16xf32, #tpu.memory_space<vmem>>, vector<4x16xf32>
    %c0_81 = arith.constant 0 : index
    %c48_82 = arith.constant 48 : index
    %65 = vector.load %arg16[%c0_81, %c48_82] : memref<4x256xf32, #tpu.memory_space<vmem>>, vector<4x16xf32>
    tpu.vector_store %arg16[%c0_81, %c48_82], %64 {strides = array<i32>} : memref<4x256xf32, #tpu.memory_space<vmem>>, vector<4x16xf32>,
    %c4_83 = arith.constant 4 : index
    %c0_84 = arith.constant 0 : index
    %66 = tpu.strided_load %arg15[%c4_83, %c0_84] {strides = array<i32: 16, 1>} : memref<64x16xf32, #tpu.memory_space<vmem>>, vector<4x16xf32>
    %c0_85 = arith.constant 0 : index
    %c64_86 = arith.constant 64 : index
    %67 = vector.load %arg16[%c0_85, %c64_86] : memref<4x256xf32, #tpu.memory_space<vmem>>, vector<4x16xf32>
    tpu.vector_store %arg16[%c0_85, %c64_86], %66 {strides = array<i32>} : memref<4x256xf32, #tpu.memory_space<vmem>>, vector<4x16xf32>,
    %c5_87 = arith.constant 5 : index
    %c0_88 = arith.constant 0 : index
    %68 = tpu.strided_load %arg15[%c5_87, %c0_88] {strides = array<i32: 16, 1>} : memref<64x16xf32, #tpu.memory_space<vmem>>, vector<4x16xf32>
    %c0_89 = arith.constant 0 : index
    %c80_90 = arith.constant 80 : index
    %69 = vector.load %arg16[%c0_89, %c80_90] : memref<4x256xf32, #tpu.memory_space<vmem>>, vector<4x16xf32>
    tpu.vector_store %arg16[%c0_89, %c80_90], %68 {strides = array<i32>} : memref<4x256xf32, #tpu.memory_space<vmem>>, vector<4x16xf32>,
    %c6_91 = arith.constant 6 : index
    %c0_92 = arith.constant 0 : index
    %70 = tpu.strided_load %arg15[%c6_91, %c0_92] {strides = array<i32: 16, 1>} : memref<64x16xf32, #tpu.memory_space<vmem>>, vector<4x16xf32>
    %c0_93 = arith.constant 0 : index
    %c96_94 = arith.constant 96 : index
    %71 = vector.load %arg16[%c0_93, %c96_94] : memref<4x256xf32, #tpu.memory_space<vmem>>, vector<4x16xf32>
    tpu.vector_store %arg16[%c0_93, %c96_94], %70 {strides = array<i32>} : memref<4x256xf32, #tpu.memory_space<vmem>>, vector<4x16xf32>,
    %c7_95 = arith.constant 7 : index
    %c0_96 = arith.constant 0 : index
    %72 = tpu.strided_load %arg15[%c7_95, %c0_96] {strides = array<i32: 16, 1>} : memref<64x16xf32, #tpu.memory_space<vmem>>, vector<4x16xf32>
    %c0_97 = arith.constant 0 : index
    %c112_98 = arith.constant 112 : index
    %73 = vector.load %arg16[%c0_97, %c112_98] : memref<4x256xf32, #tpu.memory_space<vmem>>, vector<4x16xf32>
    tpu.vector_store %arg16[%c0_97, %c112_98], %72 {strides = array<i32>} : memref<4x256xf32, #tpu.memory_space<vmem>>, vector<4x16xf32>,
    %c8_99 = arith.constant 8 : index
    %c0_100 = arith.constant 0 : index
    %74 = tpu.strided_load %arg15[%c8_99, %c0_100] {strides = array<i32: 16, 1>} : memref<64x16xf32, #tpu.memory_space<vmem>>, vector<4x16xf32>
    %c0_101 = arith.constant 0 : index
    %c128_102 = arith.constant 128 : index
    %75 = vector.load %arg16[%c0_101, %c128_102] : memref<4x256xf32, #tpu.memory_space<vmem>>, vector<4x16xf32>
    tpu.vector_store %arg16[%c0_101, %c128_102], %74 {strides = array<i32>} : memref<4x256xf32, #tpu.memory_space<vmem>>, vector<4x16xf32>,
    %c9_103 = arith.constant 9 : index
    %c0_104 = arith.constant 0 : index
    %76 = tpu.strided_load %arg15[%c9_103, %c0_104] {strides = array<i32: 16, 1>} : memref<64x16xf32, #tpu.memory_space<vmem>>, vector<4x16xf32>
    %c0_105 = arith.constant 0 : index
    %c144_106 = arith.constant 144 : index
    %77 = vector.load %arg16[%c0_105, %c144_106] : memref<4x256xf32, #tpu.memory_space<vmem>>, vector<4x16xf32>
    tpu.vector_store %arg16[%c0_105, %c144_106], %76 {strides = array<i32>} : memref<4x256xf32, #tpu.memory_space<vmem>>, vector<4x16xf32>,
    %c10_107 = arith.constant 10 : index
    %c0_108 = arith.constant 0 : index
    %78 = tpu.strided_load %arg15[%c10_107, %c0_108] {strides = array<i32: 16, 1>} : memref<64x16xf32, #tpu.memory_space<vmem>>, vector<4x16xf32>
    %c0_109 = arith.constant 0 : index
    %c160_110 = arith.constant 160 : index
    %79 = vector.load %arg16[%c0_109, %c160_110] : memref<4x256xf32, #tpu.memory_space<vmem>>, vector<4x16xf32>
    tpu.vector_store %arg16[%c0_109, %c160_110], %78 {strides = array<i32>} : memref<4x256xf32, #tpu.memory_space<vmem>>, vector<4x16xf32>,
    %c11_111 = arith.constant 11 : index
    %c0_112 = arith.constant 0 : index
    %80 = tpu.strided_load %arg15[%c11_111, %c0_112] {strides = array<i32: 16, 1>} : memref<64x16xf32, #tpu.memory_space<vmem>>, vector<4x16xf32>
    %c0_113 = arith.constant 0 : index
    %c176_114 = arith.constant 176 : index
    %81 = vector.load %arg16[%c0_113, %c176_114] : memref<4x256xf32, #tpu.memory_space<vmem>>, vector<4x16xf32>
    tpu.vector_store %arg16[%c0_113, %c176_114], %80 {strides = array<i32>} : memref<4x256xf32, #tpu.memory_space<vmem>>, vector<4x16xf32>,
    %c12_115 = arith.constant 12 : index
    %c0_116 = arith.constant 0 : index
    %82 = tpu.strided_load %arg15[%c12_115, %c0_116] {strides = array<i32: 16, 1>} : memref<64x16xf32, #tpu.memory_space<vmem>>, vector<4x16xf32>
    %c0_117 = arith.constant 0 : index
    %c192_118 = arith.constant 192 : index
    %83 = vector.load %arg16[%c0_117, %c192_118] : memref<4x256xf32, #tpu.memory_space<vmem>>, vector<4x16xf32>
    tpu.vector_store %arg16[%c0_117, %c192_118], %82 {strides = array<i32>} : memref<4x256xf32, #tpu.memory_space<vmem>>, vector<4x16xf32>,
    %c13_119 = arith.constant 13 : index
    %c0_120 = arith.constant 0 : index
    %84 = tpu.strided_load %arg15[%c13_119, %c0_120] {strides = array<i32: 16, 1>} : memref<64x16xf32, #tpu.memory_space<vmem>>, vector<4x16xf32>
    %c0_121 = arith.constant 0 : index
    %c208_122 = arith.constant 208 : index
    %85 = vector.load %arg16[%c0_121, %c208_122] : memref<4x256xf32, #tpu.memory_space<vmem>>, vector<4x16xf32>
    tpu.vector_store %arg16[%c0_121, %c208_122], %84 {strides = array<i32>} : memref<4x256xf32, #tpu.memory_space<vmem>>, vector<4x16xf32>,
    %c14_123 = arith.constant 14 : index
    %c0_124 = arith.constant 0 : index
    %86 = tpu.strided_load %arg15[%c14_123, %c0_124] {strides = array<i32: 16, 1>} : memref<64x16xf32, #tpu.memory_space<vmem>>, vector<4x16xf32>
    %c0_125 = arith.constant 0 : index
    %c224_126 = arith.constant 224 : index
    %87 = vector.load %arg16[%c0_125, %c224_126] : memref<4x256xf32, #tpu.memory_space<vmem>>, vector<4x16xf32>
    tpu.vector_store %arg16[%c0_125, %c224_126], %86 {strides = array<i32>} : memref<4x256xf32, #tpu.memory_space<vmem>>, vector<4x16xf32>,
    %c15_127 = arith.constant 15 : index
    %c0_128 = arith.constant 0 : index
    %88 = tpu.strided_load %arg15[%c15_127, %c0_128] {strides = array<i32: 16, 1>} : memref<64x16xf32, #tpu.memory_space<vmem>>, vector<4x16xf32>
    %c0_129 = arith.constant 0 : index
    %c240_130 = arith.constant 240 : index
    %89 = vector.load %arg16[%c0_129, %c240_130] : memref<4x256xf32, #tpu.memory_space<vmem>>, vector<4x16xf32>
    tpu.vector_store %arg16[%c0_129, %c240_130], %88 {strides = array<i32>} : memref<4x256xf32, #tpu.memory_space<vmem>>, vector<4x16xf32>,
    %c0_131 = arith.constant 0 : index
    %c0_132 = arith.constant 0 : index
    %90 = vector.load %arg16[%c0_131, %c0_132] : memref<4x256xf32, #tpu.memory_space<vmem>>, vector<4x256xf32>
    %91 = arith.truncf %90 : vector<4x256xf32> to vector<4x256xbf16>
    %c2_133 = arith.constant 2 : index
    %c0_134 = arith.constant 0 : index
    %c0_135 = arith.constant 0 : index
    %92 = vector.load %arg8[%c2_133, %c0_134, %c0_135] : memref<3x24x4xbf16, #tpu.memory_space<vmem>>, vector<1x24x4xbf16>
    %93 = vector.shape_cast %92 : vector<1x24x4xbf16> to vector<24x4xbf16>
    %cst_136 = arith.constant dense<0.000000e+00> : vector<24x256xf32>
    %94 = tpu.matmul %93, %91, %cst_136 {dimension_numbers = #tpu.dot_dimension_numbers<[1], [0], [0], [1], [0, 0, 1, 1], [], []>} : vector<24x4xbf16>, vector<4x256xbf16>, vector<24x256xf32> -> vector<24x256xf32>
    %95 = arith.addf %50, %94 : vector<24x256xf32>
    %c0_137 = arith.constant 0 : index
    %c0_138 = arith.constant 0 : index
    %96 = vector.load %arg9[%c0_137, %c0_138] : memref<24x1xf32, #tpu.memory_space<vmem>>, vector<24x1xf32>
    %97 = vector.broadcast %96 : vector<24x1xf32> to vector<24x256xf32>
    %98 = arith.addf %95, %97 : vector<24x256xf32>
    %cst_139 = arith.constant 0.000000e+00 : f32
    %99 = vector.broadcast %cst_139 : f32 to vector<24x256xf32>
    %100 = arith.cmpf oge, %98, %99 : vector<24x256xf32>
    %cst_140 = arith.constant 0.00999999977 : f32
    %101 = vector.broadcast %cst_140 : f32 to vector<24x256xf32>
    %102 = arith.mulf %101, %98 : vector<24x256xf32>
    %103 = arith.select %100, %98, %102 : vector<24x256xi1>, vector<24x256xf32>
    %104 = tpu.iota {dimensions = array<i32: 1>} : vector<1x256xi32>
    %c16_i32 = arith.constant 16 : i32
    %c0_i32 = arith.constant 0 : i32
    %105 = arith.cmpi eq, %c16_i32, %c0_i32 : i32
    %c1_i32 = arith.constant 1 : i32
    %106 = arith.select %105, %c1_i32, %c16_i32 : i32
    %107 = vector.broadcast %106 : i32 to vector<1x256xi32>
    %108 = arith.remsi %104, %107 : vector<1x256xi32>
    %c0_i32_141 = arith.constant 0 : i32
    %109 = vector.broadcast %c0_i32_141 : i32 to vector<1x256xi32>
    %110 = arith.cmpi ne, %108, %109 : vector<1x256xi32>
    %c0_i32_142 = arith.constant 0 : i32
    %111 = vector.broadcast %c0_i32_142 : i32 to vector<1x256xi32>
    %112 = arith.cmpi slt, %108, %111 : vector<1x256xi32>
    %c0_i32_143 = arith.constant 0 : i32
    %113 = arith.cmpi slt, %106, %c0_i32_143 : i32
    %114 = vector.broadcast %113 : i1 to vector<1x256xi1>
    %115 = vector.broadcast %114 : vector<1x256xi1> to vector<1x256xi1>
    %116 = arith.xori %112, %115 : vector<1x256xi1>
    %117 = arith.andi %116, %110 : vector<1x256xi1>
    %118 = vector.broadcast %106 : i32 to vector<1x256xi32>
    %119 = arith.addi %108, %118 : vector<1x256xi32>
    %120 = arith.select %117, %119, %108 : vector<1x256xi1>, vector<1x256xi32>
    %c16_i32_144 = arith.constant 16 : i32
    %121 = vector.broadcast %c16_i32_144 : i32 to vector<1x256xi32>
    %122 = arith.cmpi sge, %104, %121 : vector<1x256xi32>
    %123 = arith.extui %122 : vector<1x256xi1> to vector<1x256xi32>
    %124 = arith.sitofp %123 : vector<1x256xi32> to vector<1x256xf32>
    %c240_i32 = arith.constant 240 : i32
    %125 = vector.broadcast %c240_i32 : i32 to vector<1x256xi32>
    %126 = arith.cmpi slt, %104, %125 : vector<1x256xi32>
    %127 = arith.extui %126 : vector<1x256xi1> to vector<1x256xi32>
    %128 = arith.sitofp %127 : vector<1x256xi32> to vector<1x256xf32>
    %c1_i32_145 = arith.constant 1 : i32
    %129 = vector.broadcast %c1_i32_145 : i32 to vector<1x256xi32>
    %130 = arith.cmpi sge, %120, %129 : vector<1x256xi32>
    %131 = arith.extui %130 : vector<1x256xi1> to vector<1x256xi32>
    %132 = arith.sitofp %131 : vector<1x256xi32> to vector<1x256xf32>
    %c14_i32 = arith.constant 14 : i32
    %133 = vector.broadcast %c14_i32 : i32 to vector<1x256xi32>
    %134 = arith.cmpi sle, %120, %133 : vector<1x256xi32>
    %135 = arith.extui %134 : vector<1x256xi1> to vector<1x256xi32>
    %136 = arith.sitofp %135 : vector<1x256xi32> to vector<1x256xf32>
    %c17_i32 = arith.constant 17 : i32
    %137 = tpu.dynamic_rotate %103 by %c17_i32 dim 1 : vector<24x256xf32>, i32 -> vector<24x256xf32>
    %138 = arith.mulf %124, %132 : vector<1x256xf32>
    %139 = vector.broadcast %138 : vector<1x256xf32> to vector<24x256xf32>
    %140 = arith.mulf %137, %139 : vector<24x256xf32>
    %c0_146 = arith.constant 0 : index
    %c0_147 = arith.constant 0 : index
    %c0_148 = arith.constant 0 : index
    %141 = vector.load %arg10[%c0_146, %c0_147, %c0_148] : memref<9x24x24xbf16, #tpu.memory_space<vmem>>, vector<1x24x24xbf16>
    %142 = vector.shape_cast %141 : vector<1x24x24xbf16> to vector<24x24xbf16>
    %143 = arith.truncf %140 : vector<24x256xf32> to vector<24x256xbf16>
    %cst_149 = arith.constant dense<0.000000e+00> : vector<24x256xf32>
    %144 = tpu.matmul %142, %143, %cst_149 {dimension_numbers = #tpu.dot_dimension_numbers<[1], [0], [0], [1], [0, 0, 1, 1], [], []>} : vector<24x24xbf16>, vector<24x256xbf16>, vector<24x256xf32> -> vector<24x256xf32>
    %c16_i32_150 = arith.constant 16 : i32
    %145 = tpu.dynamic_rotate %103 by %c16_i32_150 dim 1 : vector<24x256xf32>, i32 -> vector<24x256xf32>
    %146 = vector.broadcast %124 : vector<1x256xf32> to vector<24x256xf32>
    %147 = arith.mulf %145, %146 : vector<24x256xf32>
    %c1_151 = arith.constant 1 : index
    %c0_152 = arith.constant 0 : index
    %c0_153 = arith.constant 0 : index
    %148 = vector.load %arg10[%c1_151, %c0_152, %c0_153] : memref<9x24x24xbf16, #tpu.memory_space<vmem>>, vector<1x24x24xbf16>
    %149 = vector.shape_cast %148 : vector<1x24x24xbf16> to vector<24x24xbf16>
    %150 = arith.truncf %147 : vector<24x256xf32> to vector<24x256xbf16>
    %cst_154 = arith.constant dense<0.000000e+00> : vector<24x256xf32>
    %151 = tpu.matmul %149, %150, %cst_154 {dimension_numbers = #tpu.dot_dimension_numbers<[1], [0], [0], [1], [0, 0, 1, 1], [], []>} : vector<24x24xbf16>, vector<24x256xbf16>, vector<24x256xf32> -> vector<24x256xf32>
    %152 = arith.addf %144, %151 : vector<24x256xf32>
    %c15_i32 = arith.constant 15 : i32
    %153 = tpu.dynamic_rotate %103 by %c15_i32 dim 1 : vector<24x256xf32>, i32 -> vector<24x256xf32>
    %154 = arith.mulf %124, %136 : vector<1x256xf32>
    %155 = vector.broadcast %154 : vector<1x256xf32> to vector<24x256xf32>
    %156 = arith.mulf %153, %155 : vector<24x256xf32>
    %c2_155 = arith.constant 2 : index
    %c0_156 = arith.constant 0 : index
    %c0_157 = arith.constant 0 : index
    %157 = vector.load %arg10[%c2_155, %c0_156, %c0_157] : memref<9x24x24xbf16, #tpu.memory_space<vmem>>, vector<1x24x24xbf16>
    %158 = vector.shape_cast %157 : vector<1x24x24xbf16> to vector<24x24xbf16>
    %159 = arith.truncf %156 : vector<24x256xf32> to vector<24x256xbf16>
    %cst_158 = arith.constant dense<0.000000e+00> : vector<24x256xf32>
    %160 = tpu.matmul %158, %159, %cst_158 {dimension_numbers = #tpu.dot_dimension_numbers<[1], [0], [0], [1], [0, 0, 1, 1], [], []>} : vector<24x24xbf16>, vector<24x256xbf16>, vector<24x256xf32> -> vector<24x256xf32>
    %161 = arith.addf %152, %160 : vector<24x256xf32>
    %c1_i32_159 = arith.constant 1 : i32
    %162 = tpu.dynamic_rotate %103 by %c1_i32_159 dim 1 : vector<24x256xf32>, i32 -> vector<24x256xf32>
    %163 = vector.broadcast %132 : vector<1x256xf32> to vector<24x256xf32>
    %164 = arith.mulf %162, %163 : vector<24x256xf32>
    %c3_160 = arith.constant 3 : index
    %c0_161 = arith.constant 0 : index
    %c0_162 = arith.constant 0 : index
    %165 = vector.load %arg10[%c3_160, %c0_161, %c0_162] : memref<9x24x24xbf16, #tpu.memory_space<vmem>>, vector<1x24x24xbf16>
    %166 = vector.shape_cast %165 : vector<1x24x24xbf16> to vector<24x24xbf16>
    %167 = arith.truncf %164 : vector<24x256xf32> to vector<24x256xbf16>
    %cst_163 = arith.constant dense<0.000000e+00> : vector<24x256xf32>
    %168 = tpu.matmul %166, %167, %cst_163 {dimension_numbers = #tpu.dot_dimension_numbers<[1], [0], [0], [1], [0, 0, 1, 1], [], []>} : vector<24x24xbf16>, vector<24x256xbf16>, vector<24x256xf32> -> vector<24x256xf32>
    %169 = arith.addf %161, %168 : vector<24x256xf32>
    %c4_164 = arith.constant 4 : index
    %c0_165 = arith.constant 0 : index
    %c0_166 = arith.constant 0 : index
    %170 = vector.load %arg10[%c4_164, %c0_165, %c0_166] : memref<9x24x24xbf16, #tpu.memory_space<vmem>>, vector<1x24x24xbf16>
    %171 = vector.shape_cast %170 : vector<1x24x24xbf16> to vector<24x24xbf16>
    %172 = arith.truncf %103 : vector<24x256xf32> to vector<24x256xbf16>
    %cst_167 = arith.constant dense<0.000000e+00> : vector<24x256xf32>
    %173 = tpu.matmul %171, %172, %cst_167 {dimension_numbers = #tpu.dot_dimension_numbers<[1], [0], [0], [1], [0, 0, 1, 1], [], []>} : vector<24x24xbf16>, vector<24x256xbf16>, vector<24x256xf32> -> vector<24x256xf32>
    %174 = arith.addf %169, %173 : vector<24x256xf32>
    %c255_i32 = arith.constant 255 : i32
    %175 = tpu.dynamic_rotate %103 by %c255_i32 dim 1 : vector<24x256xf32>, i32 -> vector<24x256xf32>
    %176 = vector.broadcast %136 : vector<1x256xf32> to vector<24x256xf32>
    %177 = arith.mulf %175, %176 : vector<24x256xf32>
    %c5_168 = arith.constant 5 : index
    %c0_169 = arith.constant 0 : index
    %c0_170 = arith.constant 0 : index
    %178 = vector.load %arg10[%c5_168, %c0_169, %c0_170] : memref<9x24x24xbf16, #tpu.memory_space<vmem>>, vector<1x24x24xbf16>
    %179 = vector.shape_cast %178 : vector<1x24x24xbf16> to vector<24x24xbf16>
    %180 = arith.truncf %177 : vector<24x256xf32> to vector<24x256xbf16>
    %cst_171 = arith.constant dense<0.000000e+00> : vector<24x256xf32>
    %181 = tpu.matmul %179, %180, %cst_171 {dimension_numbers = #tpu.dot_dimension_numbers<[1], [0], [0], [1], [0, 0, 1, 1], [], []>} : vector<24x24xbf16>, vector<24x256xbf16>, vector<24x256xf32> -> vector<24x256xf32>
    %182 = arith.addf %174, %181 : vector<24x256xf32>
    %c241_i32 = arith.constant 241 : i32
    %183 = tpu.dynamic_rotate %103 by %c241_i32 dim 1 : vector<24x256xf32>, i32 -> vector<24x256xf32>
    %184 = arith.mulf %128, %132 : vector<1x256xf32>
    %185 = vector.broadcast %184 : vector<1x256xf32> to vector<24x256xf32>
    %186 = arith.mulf %183, %185 : vector<24x256xf32>
    %c6_172 = arith.constant 6 : index
    %c0_173 = arith.constant 0 : index
    %c0_174 = arith.constant 0 : index
    %187 = vector.load %arg10[%c6_172, %c0_173, %c0_174] : memref<9x24x24xbf16, #tpu.memory_space<vmem>>, vector<1x24x24xbf16>
    %188 = vector.shape_cast %187 : vector<1x24x24xbf16> to vector<24x24xbf16>
    %189 = arith.truncf %186 : vector<24x256xf32> to vector<24x256xbf16>
    %cst_175 = arith.constant dense<0.000000e+00> : vector<24x256xf32>
    %190 = tpu.matmul %188, %189, %cst_175 {dimension_numbers = #tpu.dot_dimension_numbers<[1], [0], [0], [1], [0, 0, 1, 1], [], []>} : vector<24x24xbf16>, vector<24x256xbf16>, vector<24x256xf32> -> vector<24x256xf32>
    %191 = arith.addf %182, %190 : vector<24x256xf32>
    %c240_i32_176 = arith.constant 240 : i32
    %192 = tpu.dynamic_rotate %103 by %c240_i32_176 dim 1 : vector<24x256xf32>, i32 -> vector<24x256xf32>
    %193 = vector.broadcast %128 : vector<1x256xf32> to vector<24x256xf32>
    %194 = arith.mulf %192, %193 : vector<24x256xf32>
    %c7_177 = arith.constant 7 : index
    %c0_178 = arith.constant 0 : index
    %c0_179 = arith.constant 0 : index
    %195 = vector.load %arg10[%c7_177, %c0_178, %c0_179] : memref<9x24x24xbf16, #tpu.memory_space<vmem>>, vector<1x24x24xbf16>
    %196 = vector.shape_cast %195 : vector<1x24x24xbf16> to vector<24x24xbf16>
    %197 = arith.truncf %194 : vector<24x256xf32> to vector<24x256xbf16>
    %cst_180 = arith.constant dense<0.000000e+00> : vector<24x256xf32>
    %198 = tpu.matmul %196, %197, %cst_180 {dimension_numbers = #tpu.dot_dimension_numbers<[1], [0], [0], [1], [0, 0, 1, 1], [], []>} : vector<24x24xbf16>, vector<24x256xbf16>, vector<24x256xf32> -> vector<24x256xf32>
    %199 = arith.addf %191, %198 : vector<24x256xf32>
    %c239_i32 = arith.constant 239 : i32
    %200 = tpu.dynamic_rotate %103 by %c239_i32 dim 1 : vector<24x256xf32>, i32 -> vector<24x256xf32>
    %201 = arith.mulf %128, %136 : vector<1x256xf32>
    %202 = vector.broadcast %201 : vector<1x256xf32> to vector<24x256xf32>
    %203 = arith.mulf %200, %202 : vector<24x256xf32>
    %c8_181 = arith.constant 8 : index
    %c0_182 = arith.constant 0 : index
    %c0_183 = arith.constant 0 : index
    %204 = vector.load %arg10[%c8_181, %c0_182, %c0_183] : memref<9x24x24xbf16, #tpu.memory_space<vmem>>, vector<1x24x24xbf16>
    %205 = vector.shape_cast %204 : vector<1x24x24xbf16> to vector<24x24xbf16>
    %206 = arith.truncf %203 : vector<24x256xf32> to vector<24x256xbf16>
    %cst_184 = arith.constant dense<0.000000e+00> : vector<24x256xf32>
    %207 = tpu.matmul %205, %206, %cst_184 {dimension_numbers = #tpu.dot_dimension_numbers<[1], [0], [0], [1], [0, 0, 1, 1], [], []>} : vector<24x24xbf16>, vector<24x256xbf16>, vector<24x256xf32> -> vector<24x256xf32>
    %208 = arith.addf %199, %207 : vector<24x256xf32>
    %c0_185 = arith.constant 0 : index
    %c0_186 = arith.constant 0 : index
    %209 = vector.load %arg11[%c0_185, %c0_186] : memref<24x1xf32, #tpu.memory_space<vmem>>, vector<24x1xf32>
    %210 = vector.broadcast %209 : vector<24x1xf32> to vector<24x256xf32>
    %211 = arith.addf %208, %210 : vector<24x256xf32>
    %cst_187 = arith.constant 0.000000e+00 : f32
    %212 = vector.broadcast %cst_187 : f32 to vector<24x256xf32>
    %213 = arith.cmpf oge, %211, %212 : vector<24x256xf32>
    %cst_188 = arith.constant 0.00999999977 : f32
    %214 = vector.broadcast %cst_188 : f32 to vector<24x256xf32>
    %215 = arith.mulf %214, %211 : vector<24x256xf32>
    %216 = arith.select %213, %211, %215 : vector<24x256xi1>, vector<24x256xf32>
    %c0_189 = arith.constant 0 : index
    %c0_190 = arith.constant 0 : index
    %217 = vector.load %arg12[%c0_189, %c0_190] : memref<4x24xbf16, #tpu.memory_space<vmem>>, vector<4x24xbf16>
    %218 = arith.truncf %216 : vector<24x256xf32> to vector<24x256xbf16>
    %cst_191 = arith.constant dense<0.000000e+00> : vector<4x256xf32>
    %219 = tpu.matmul %217, %218, %cst_191 {dimension_numbers = #tpu.dot_dimension_numbers<[1], [0], [0], [1], [0, 0, 1, 1], [], []>} : vector<4x24xbf16>, vector<24x256xbf16>, vector<4x256xf32> -> vector<4x256xf32>
    %c0_192 = arith.constant 0 : index
    %c0_193 = arith.constant 0 : index
    %220 = vector.load %arg13[%c0_192, %c0_193] : memref<4x1xf32, #tpu.memory_space<vmem>>, vector<4x1xf32>
    %221 = vector.broadcast %220 : vector<4x1xf32> to vector<4x256xf32>
    %222 = arith.addf %219, %221 : vector<4x256xf32>
    %c0_194 = arith.constant 0 : index
    %c0_195 = arith.constant 0 : index
    %c0_196 = arith.constant 0 : index
    %223 = vector.load %arg14[%c0_194, %c0_195, %c0_196] : memref<1x4x256xf32, #tpu.memory_space<vmem>>, vector<1x4x256xf32>
    %224 = vector.shape_cast %223 : vector<1x4x256xf32> to vector<4x256xf32>
    %225 = vector.shape_cast %222 : vector<4x256xf32> to vector<1x4x256xf32>
    tpu.vector_store %arg14[%c0_194, %c0_195, %c0_196], %225 {strides = array<i32>} : memref<1x4x256xf32, #tpu.memory_space<vmem>>, vector<1x4x256xf32>,
    return
  }
  func.func @transform_0(%arg0: i32) -> (i32, i32, i32) {
    %c0_i32 = arith.constant 0 : i32
    %c0_i32_0 = arith.constant 0 : i32
    %c0_i32_1 = arith.constant 0 : i32
    return %arg0, %c0_i32, %c0_i32_0 : i32, i32, i32
  }
  func.func @transform_1(%arg0: i32) -> (i32, i32, i32) {
    %c0_i32 = arith.constant 0 : i32
    %c0_i32_0 = arith.constant 0 : i32
    %c0_i32_1 = arith.constant 0 : i32
    return %arg0, %c0_i32, %c0_i32_0 : i32, i32, i32
  }
  func.func @transform_2(%arg0: i32) -> (i32, i32, i32) {
    %c0_i32 = arith.constant 0 : i32
    %c0_i32_0 = arith.constant 0 : i32
    %c0_i32_1 = arith.constant 0 : i32
    return %arg0, %c0_i32, %c0_i32_0 : i32, i32, i32
  }
  func.func @transform_3(%arg0: i32) -> (i32, i32) {
    %c0_i32 = arith.constant 0 : i32
    %c0_i32_0 = arith.constant 0 : i32
    %c0_i32_1 = arith.constant 0 : i32
    return %c0_i32, %c0_i32_0 : i32, i32
  }
  func.func @transform_4(%arg0: i32) -> (i32, i32) {
    %c0_i32 = arith.constant 0 : i32
    %c0_i32_0 = arith.constant 0 : i32
    %c0_i32_1 = arith.constant 0 : i32
    return %c0_i32, %c0_i32_0 : i32, i32
  }
  func.func @transform_5(%arg0: i32) -> (i32, i32) {
    %c0_i32 = arith.constant 0 : i32
    %c0_i32_0 = arith.constant 0 : i32
    %c0_i32_1 = arith.constant 0 : i32
    return %c0_i32, %c0_i32_0 : i32, i32
  }
  func.func @transform_6(%arg0: i32) -> (i32, i32) {
    %c0_i32 = arith.constant 0 : i32
    %c0_i32_0 = arith.constant 0 : i32
    %c0_i32_1 = arith.constant 0 : i32
    return %c0_i32, %c0_i32_0 : i32, i32
  }
  func.func @transform_7(%arg0: i32) -> (i32, i32, i32) {
    %c0_i32 = arith.constant 0 : i32
    %c0_i32_0 = arith.constant 0 : i32
    %c0_i32_1 = arith.constant 0 : i32
    %c0_i32_2 = arith.constant 0 : i32
    return %c0_i32, %c0_i32_0, %c0_i32_1 : i32, i32, i32
  }
  func.func @transform_8(%arg0: i32) -> (i32, i32) {
    %c0_i32 = arith.constant 0 : i32
    %c0_i32_0 = arith.constant 0 : i32
    %c0_i32_1 = arith.constant 0 : i32
    return %c0_i32, %c0_i32_0 : i32, i32
  }
  func.func @transform_9(%arg0: i32) -> (i32, i32, i32) {
    %c0_i32 = arith.constant 0 : i32
    %c0_i32_0 = arith.constant 0 : i32
    %c0_i32_1 = arith.constant 0 : i32
    %c0_i32_2 = arith.constant 0 : i32
    return %c0_i32, %c0_i32_0, %c0_i32_1 : i32, i32, i32
  }
  func.func @transform_10(%arg0: i32) -> (i32, i32) {
    %c0_i32 = arith.constant 0 : i32
    %c0_i32_0 = arith.constant 0 : i32
    %c0_i32_1 = arith.constant 0 : i32
    return %c0_i32, %c0_i32_0 : i32, i32
  }
  func.func @transform_11(%arg0: i32) -> (i32, i32) {
    %c0_i32 = arith.constant 0 : i32
    %c0_i32_0 = arith.constant 0 : i32
    %c0_i32_1 = arith.constant 0 : i32
    return %c0_i32, %c0_i32_0 : i32, i32
  }
  func.func @transform_12(%arg0: i32) -> (i32, i32) {
    %c0_i32 = arith.constant 0 : i32
    %c0_i32_0 = arith.constant 0 : i32
    %c0_i32_1 = arith.constant 0 : i32
    return %c0_i32, %c0_i32_0 : i32, i32
  }
  func.func @transform_13(%arg0: i32) -> (i32, i32, i32) {
    %c0_i32 = arith.constant 0 : i32
    %c0_i32_0 = arith.constant 0 : i32
    %c0_i32_1 = arith.constant 0 : i32
    return %arg0, %c0_i32, %c0_i32_0 : i32, i32, i32
  }
}

</mosaic_0001>

<llo_original>
// kernel: hb_combine_block_forward.1
$region0: #{hb_combine_block_forward.1}
  #allocation0 [shape = 'u32[]', space=smem, size = 0x4, offset = 0x4, fixed_abs, tag = 'smem constant byte address 0x4 - core index']
  #allocation1 [shape = 'u32[144,128]{1,0:T(1,128)}', space=vmem, size = 0x12000, scoped, tag = 'internal scratch']
  #allocation2 [shape = 'f32[64,16]{1,0:T(8,128)}', space=vmem, size = 0x8000, scoped, tag = 'scratch operand']
  #allocation3 [shape = 'f32[4,256]{1,0:T(4,128)}', space=vmem, size = 0x1000, scoped, tag = 'scratch operand']
  %s0 = inlined_call_operand.vmem [shape: f32[2,32,8], index: 0, kind: input, shape index: {}]
  %s1 = inlined_call_operand.vmem [shape: f32[2,4,256], index: 1, kind: input, shape index: {}]
  %s2 = inlined_call_operand.vmem [shape: f32[2,128,32], index: 2, kind: input, shape index: {}]
  %s3 = inlined_call_operand.vmem [shape: f32[8,16], index: 3, kind: input, shape index: {}]
  %s4 = inlined_call_operand.vmem [shape: f32[64,32], index: 4, kind: input, shape index: {}]
  %s5 = inlined_call_operand.vmem [shape: f32[32,16], index: 5, kind: input, shape index: {}]
  %s6 = inlined_call_operand.vmem [shape: f32[64,128], index: 6, kind: input, shape index: {}]
  %s7 = inlined_call_operand.vmem [shape: bf16[3,24,4], index: 7, kind: input, shape index: {}]
  %s8 = inlined_call_operand.vmem [shape: f32[24,1], index: 8, kind: input, shape index: {}]
  %s9 = inlined_call_operand.vmem [shape: bf16[9,24,24], index: 9, kind: input, shape index: {}]
  %s10 = inlined_call_operand.vmem [shape: f32[24,1], index: 10, kind: input, shape index: {}]
  %s11 = inlined_call_operand.vmem [shape: bf16[4,24], index: 11, kind: input, shape index: {}]
  %s12 = inlined_call_operand.vmem [shape: f32[4,1], index: 12, kind: input, shape index: {}]
  %s13 = inlined_call_operand.vmem [shape: f32[2,4,256], index: 13, kind: output, shape index: {}]
  %s14 = sld [smem:[#allocation0]]
  $region85: #{hb_combine_block_forward.1} parent=0
    _
  %s16 = ssub.s32 1, %s14
  %s17 = scalar_select 0, %s16, %s14
  loop: start=0, step=1, limit=4
  $region2: #{hb_combine_block_forward.1} parent=0 // loop_pre_header
    _
  $region3: #{hb_combine_block_forward.1} parent=0 // loop_header
    %s19 = sphi 0, %s23
    %p20 = scmp.ge.s32.totalorder %s19, 4
    %s29 = sphi 0, %s31
    %s32 = sphi 0, %s29
    %s33 = sphi 0, %s32
    %s49 = sphi 0, %s33
    %s55 = sphi 0, %s57
    %s58 = sphi 0, %s55
    %s59 = sphi 0, %s58
    %s75 = sphi 0, %s59
    %s81 = sphi 0, %s83
    %s84 = sphi 0, %s81
    %s85 = sphi 0, %s84
    %s101 = sphi 0, %s85
    %s105 = sphi 0, %s105
    %s107 = sphi 0, %s105
    %s108 = sphi 0, %s107
    %s122 = sphi 0, %s108
    %s126 = sphi 0, %s126
    %s128 = sphi 0, %s126
    %s129 = sphi 0, %s128
    %s143 = sphi 0, %s129
    %s147 = sphi 0, %s147
    %s149 = sphi 0, %s147
    %s150 = sphi 0, %s149
    %s164 = sphi 0, %s150
    %s168 = sphi 0, %s168
    %s170 = sphi 0, %s168
    %s171 = sphi 0, %s170
    %s185 = sphi 0, %s171
    %s189 = sphi 0, %s189
    %s191 = sphi 0, %s189
    %s192 = sphi 0, %s191
    %s206 = sphi 0, %s192
    %s210 = sphi 0, %s210
    %s212 = sphi 0, %s210
    %s213 = sphi 0, %s212
    %s227 = sphi 0, %s213
    %s231 = sphi 0, %s231
    %s233 = sphi 0, %s231
    %s234 = sphi 0, %s233
    %s248 = sphi 0, %s234
    %s252 = sphi 0, %s252
    %s254 = sphi 0, %s252
    %s255 = sphi 0, %s254
    %s269 = sphi 0, %s255
    %s273 = sphi 0, %s273
    %s275 = sphi 0, %s273
    %s276 = sphi 0, %s275
    %s290 = sphi 0, %s276
    %s294 = sphi 0, %s294
    %s296 = sphi 0, %s294
    %s297 = sphi 0, %s296
    %s311 = sphi 0, %s297
    %s317 = sphi 0, %s319
    %s320 = sphi 0, %s317
    %s321 = sphi 0, %s320
    %s337 = sphi 0, %s321
  $region4: #{hb_combine_block_forward.1} parent=0 // loop_header_branch
    %22 = sbr.rel (%p20) target = $region8
  $region5: #{hb_combine_block_forward.1} parent=0 // loop_body
    %s24 = ssub.s32 %s19, 1
    %s25 = ssub.s32 %s19, 2
    %s26 = sadd.s32 %s19, 1
    %s27 = ssub.s32 %s19, %s26
    %p28 = scmp.eq.s32.totalorder %s27, 0
    %s30 = sadd.s32 %s29, 1
    %s31 = scalar_select %p28, %s29, %s30
    %p34 = pneg %p28
    %p35 = scmp.eq.s32.totalorder %s19, 1
    %p36 = por %p34, %p35
    %p37 = scmp.ne.s32.totalorder %s29, %s32
    %p38 = scmp.eq.s32.totalorder %s19, 0
    %p39 = por %p37, %p38
    %p40 = scmp.ne.s32.totalorder %s29, %s32
    %p41 = scmp.eq.s32.totalorder %s24, 1
    %p42 = por %p40, %p41
    %p43 = scmp.ne.s32.totalorder %s32, %s33
    %p44 = scmp.eq.s32.totalorder %s24, 0
    %p45 = por %p43, %p44
    %p46 = scmp.ne.s32.totalorder %s32, %s33
    %p47 = scmp.eq.s32.totalorder %s25, 1
    %p48 = por %p46, %p47
    %p50 = scmp.ne.s32.totalorder %s33, %s49
    %p51 = scmp.eq.s32.totalorder %s25, 0
    %p52 = por %p50, %p51
    %s53 = ssub.s32 %s19, %s26
    %p54 = scmp.eq.s32.totalorder %s53, 0
    %s56 = sadd.s32 %s55, 1
    %s57 = scalar_select %p54, %s55, %s56
    %p60 = pneg %p54
    %p61 = scmp.eq.s32.totalorder %s19, 1
    %p62 = por %p60, %p61
    %p63 = scmp.ne.s32.totalorder %s55, %s58
    %p64 = scmp.eq.s32.totalorder %s19, 0
    %p65 = por %p63, %p64
    %p66 = scmp.ne.s32.totalorder %s55, %s58
    %p67 = scmp.eq.s32.totalorder %s24, 1
    %p68 = por %p66, %p67
    %p69 = scmp.ne.s32.totalorder %s58, %s59
    %p70 = scmp.eq.s32.totalorder %s24, 0
    %p71 = por %p69, %p70
    %p72 = scmp.ne.s32.totalorder %s58, %s59
    %p73 = scmp.eq.s32.totalorder %s25, 1
    %p74 = por %p72, %p73
    %p76 = scmp.ne.s32.totalorder %s59, %s75
    %p77 = scmp.eq.s32.totalorder %s25, 0
    %p78 = por %p76, %p77
    %s79 = ssub.s32 %s19, %s26
    %p80 = scmp.eq.s32.totalorder %s79, 0
    %s82 = sadd.s32 %s81, 1
    %s83 = scalar_select %p80, %s81, %s82
    %p86 = pneg %p80
    %p87 = scmp.eq.s32.totalorder %s19, 1
    %p88 = por %p86, %p87
    %p89 = scmp.ne.s32.totalorder %s81, %s84
    %p90 = scmp.eq.s32.totalorder %s19, 0
    %p91 = por %p89, %p90
    %p92 = scmp.ne.s32.totalorder %s81, %s84
    %p93 = scmp.eq.s32.totalorder %s24, 1
    %p94 = por %p92, %p93
    %p95 = scmp.ne.s32.totalorder %s84, %s85
    %p96 = scmp.eq.s32.totalorder %s24, 0
    %p97 = por %p95, %p96
    %p98 = scmp.ne.s32.totalorder %s84, %s85
    %p99 = scmp.eq.s32.totalorder %s25, 1
    %p100 = por %p98, %p99
    %p102 = scmp.ne.s32.totalorder %s85, %s101
    %p103 = scmp.eq.s32.totalorder %s25, 0
    %p104 = por %p102, %p103
    %s106 = sadd.s32 %s105, 1
    %p109 = scmp.eq.s32.totalorder %s19, 1
    %p110 = scmp.ne.s32.totalorder %s105, %s107
    %p111 = scmp.eq.s32.totalorder %s19, 0
    %p112 = por %p110, %p111
    %p113 = scmp.ne.s32.totalorder %s105, %s107
    %p114 = scmp.eq.s32.totalorder %s24, 1
    %p115 = por %p113, %p114
    %p116 = scmp.ne.s32.totalorder %s107, %s108
    %p117 = scmp.eq.s32.totalorder %s24, 0
    %p118 = por %p116, %p117
    %p119 = scmp.ne.s32.totalorder %s107, %s108
    %p120 = scmp.eq.s32.totalorder %s25, 1
    %p121 = por %p119, %p120
    %p123 = scmp.ne.s32.totalorder %s108, %s122
    %p124 = scmp.eq.s32.totalorder %s25, 0
    %p125 = por %p123, %p124
    %s127 = sadd.s32 %s126, 1
    %p130 = scmp.eq.s32.totalorder %s19, 1
    %p131 = scmp.ne.s32.totalorder %s126, %s128
    %p132 = scmp.eq.s32.totalorder %s19, 0
    %p133 = por %p131, %p132
    %p134 = scmp.ne.s32.totalorder %s126, %s128
    %p135 = scmp.eq.s32.totalorder %s24, 1
    %p136 = por %p134, %p135
    %p137 = scmp.ne.s32.totalorder %s128, %s129
    %p138 = scmp.eq.s32.totalorder %s24, 0
    %p139 = por %p137, %p138
    %p140 = scmp.ne.s32.totalorder %s128, %s129
    %p141 = scmp.eq.s32.totalorder %s25, 1
    %p142 = por %p140, %p141
    %p144 = scmp.ne.s32.totalorder %s129, %s143
    %p145 = scmp.eq.s32.totalorder %s25, 0
    %p146 = por %p144, %p145
    %s148 = sadd.s32 %s147, 1
    %p151 = scmp.eq.s32.totalorder %s19, 1
    %p152 = scmp.ne.s32.totalorder %s147, %s149
    %p153 = scmp.eq.s32.totalorder %s19, 0
    %p154 = por %p152, %p153
    %p155 = scmp.ne.s32.totalorder %s147, %s149
    %p156 = scmp.eq.s32.totalorder %s24, 1
    %p157 = por %p155, %p156
    %p158 = scmp.ne.s32.totalorder %s149, %s150
    %p159 = scmp.eq.s32.totalorder %s24, 0
    %p160 = por %p158, %p159
    %p161 = scmp.ne.s32.totalorder %s149, %s150
    %p162 = scmp.eq.s32.totalorder %s25, 1
    %p163 = por %p161, %p162
    %p165 = scmp.ne.s32.totalorder %s150, %s164
    %p166 = scmp.eq.s32.totalorder %s25, 0
    %p167 = por %p165, %p166
    %s169 = sadd.s32 %s168, 1
    %p172 = scmp.eq.s32.totalorder %s19, 1
    %p173 = scmp.ne.s32.totalorder %s168, %s170
    %p174 = scmp.eq.s32.totalorder %s19, 0
    %p175 = por %p173, %p174
    %p176 = scmp.ne.s32.totalorder %s168, %s170
    %p177 = scmp.eq.s32.totalorder %s24, 1
    %p178 = por %p176, %p177
    %p179 = scmp.ne.s32.totalorder %s170, %s171
    %p180 = scmp.eq.s32.totalorder %s24, 0
    %p181 = por %p179, %p180
    %p182 = scmp.ne.s32.totalorder %s170, %s171
    %p183 = scmp.eq.s32.totalorder %s25, 1
    %p184 = por %p182, %p183
    %p186 = scmp.ne.s32.totalorder %s171, %s185
    %p187 = scmp.eq.s32.totalorder %s25, 0
    %p188 = por %p186, %p187
    %s190 = sadd.s32 %s189, 1
    %p193 = scmp.eq.s32.totalorder %s19, 1
    %p194 = scmp.ne.s32.totalorder %s189, %s191
    %p195 = scmp.eq.s32.totalorder %s19, 0
    %p196 = por %p194, %p195
    %p197 = scmp.ne.s32.totalorder %s189, %s191
    %p198 = scmp.eq.s32.totalorder %s24, 1
    %p199 = por %p197, %p198
    %p200 = scmp.ne.s32.totalorder %s191, %s192
    %p201 = scmp.eq.s32.totalorder %s24, 0
    %p202 = por %p200, %p201
    %p203 = scmp.ne.s32.totalorder %s191, %s192
    %p204 = scmp.eq.s32.totalorder %s25, 1
    %p205 = por %p203, %p204
    %p207 = scmp.ne.s32.totalorder %s192, %s206
    %p208 = scmp.eq.s32.totalorder %s25, 0
    %p209 = por %p207, %p208
    %s211 = sadd.s32 %s210, 1
    %p214 = scmp.eq.s32.totalorder %s19, 1
    %p215 = scmp.ne.s32.totalorder %s210, %s212
    %p216 = scmp.eq.s32.totalorder %s19, 0
    %p217 = por %p215, %p216
    %p218 = scmp.ne.s32.totalorder %s210, %s212
    %p219 = scmp.eq.s32.totalorder %s24, 1
    %p220 = por %p218, %p219
    %p221 = scmp.ne.s32.totalorder %s212, %s213
    %p222 = scmp.eq.s32.totalorder %s24, 0
    %p223 = por %p221, %p222
    %p224 = scmp.ne.s32.totalorder %s212, %s213
    %p225 = scmp.eq.s32.totalorder %s25, 1
    %p226 = por %p224, %p225
    %p228 = scmp.ne.s32.totalorder %s213, %s227
    %p229 = scmp.eq.s32.totalorder %s25, 0
    %p230 = por %p228, %p229
    %s232 = sadd.s32 %s231, 1
    %p235 = scmp.eq.s32.totalorder %s19, 1
    %p236 = scmp.ne.s32.totalorder %s231, %s233
    %p237 = scmp.eq.s32.totalorder %s19, 0
    %p238 = por %p236, %p237
    %p239 = scmp.ne.s32.totalorder %s231, %s233
    %p240 = scmp.eq.s32.totalorder %s24, 1
    %p241 = por %p239, %p240
    %p242 = scmp.ne.s32.totalorder %s233, %s234
    %p243 = scmp.eq.s32.totalorder %s24, 0
    %p244 = por %p242, %p243
    %p245 = scmp.ne.s32.totalorder %s233, %s234
    %p246 = scmp.eq.s32.totalorder %s25, 1
    %p247 = por %p245, %p246
    %p249 = scmp.ne.s32.totalorder %s234, %s248
    %p250 = scmp.eq.s32.totalorder %s25, 0
    %p251 = por %p249, %p250
    %s253 = sadd.s32 %s252, 1
    %p256 = scmp.eq.s32.totalorder %s19, 1
    %p257 = scmp.ne.s32.totalorder %s252, %s254
    %p258 = scmp.eq.s32.totalorder %s19, 0
    %p259 = por %p257, %p258
    %p260 = scmp.ne.s32.totalorder %s252, %s254
    %p261 = scmp.eq.s32.totalorder %s24, 1
    %p262 = por %p260, %p261
    %p263 = scmp.ne.s32.totalorder %s254, %s255
    %p264 = scmp.eq.s32.totalorder %s24, 0
    %p265 = por %p263, %p264
    %p266 = scmp.ne.s32.totalorder %s254, %s255
    %p267 = scmp.eq.s32.totalorder %s25, 1
    %p268 = por %p266, %p267
    %p270 = scmp.ne.s32.totalorder %s255, %s269
    %p271 = scmp.eq.s32.totalorder %s25, 0
    %p272 = por %p270, %p271
    %s274 = sadd.s32 %s273, 1
    %p277 = scmp.eq.s32.totalorder %s19, 1
    %p278 = scmp.ne.s32.totalorder %s273, %s275
    %p279 = scmp.eq.s32.totalorder %s19, 0
    %p280 = por %p278, %p279
    %p281 = scmp.ne.s32.totalorder %s273, %s275
    %p282 = scmp.eq.s32.totalorder %s24, 1
    %p283 = por %p281, %p282
    %p284 = scmp.ne.s32.totalorder %s275, %s276
    %p285 = scmp.eq.s32.totalorder %s24, 0
    %p286 = por %p284, %p285
    %p287 = scmp.ne.s32.totalorder %s275, %s276
    %p288 = scmp.eq.s32.totalorder %s25, 1
    %p289 = por %p287, %p288
    %p291 = scmp.ne.s32.totalorder %s276, %s290
    %p292 = scmp.eq.s32.totalorder %s25, 0
    %p293 = por %p291, %p292
    %s295 = sadd.s32 %s294, 1
    %p298 = scmp.eq.s32.totalorder %s19, 1
    %p299 = scmp.ne.s32.totalorder %s294, %s296
    %p300 = scmp.eq.s32.totalorder %s19, 0
    %p301 = por %p299, %p300
    %p302 = scmp.ne.s32.totalorder %s294, %s296
    %p303 = scmp.eq.s32.totalorder %s24, 1
    %p304 = por %p302, %p303
    %p305 = scmp.ne.s32.totalorder %s296, %s297
    %p306 = scmp.eq.s32.totalorder %s24, 0
    %p307 = por %p305, %p306
    %p308 = scmp.ne.s32.totalorder %s296, %s297
    %p309 = scmp.eq.s32.totalorder %s25, 1
    %p310 = por %p308, %p309
    %p312 = scmp.ne.s32.totalorder %s297, %s311
    %p313 = scmp.eq.s32.totalorder %s25, 0
    %p314 = por %p312, %p313
    %s315 = ssub.s32 %s19, %s26
    %p316 = scmp.eq.s32.totalorder %s315, 0
    %s318 = sadd.s32 %s317, 1
    %s319 = scalar_select %p316, %s317, %s318
    %p322 = pneg %p316
    %p323 = scmp.eq.s32.totalorder %s19, 1
    %p324 = por %p322, %p323
    %p325 = scmp.ne.s32.totalorder %s317, %s320
    %p326 = scmp.eq.s32.totalorder %s19, 0
    %p327 = por %p325, %p326
    %p328 = scmp.ne.s32.totalorder %s317, %s320
    %p329 = scmp.eq.s32.totalorder %s24, 1
    %p330 = por %p328, %p329
    %p331 = scmp.ne.s32.totalorder %s320, %s321
    %p332 = scmp.eq.s32.totalorder %s24, 0
    %p333 = por %p331, %p332
    %p334 = scmp.ne.s32.totalorder %s320, %s321
    %p335 = scmp.eq.s32.totalorder %s25, 1
    %p336 = por %p334, %p335
    %p338 = scmp.ne.s32.totalorder %s321, %s337
    %p339 = scmp.eq.s32.totalorder %s25, 0
    %p340 = por %p338, %p339
    %p341 = scmp.le.s32.totalorder 1, %s19
    %p342 = scmp.lt.s32.totalorder %s19, 3
    %p343 = pnand %p341, %p342
    %p344 = pneg %p343
    // Predicated region
    $region9: #{hb_combine_block_forward.1} parent=5 // pred_check
      _
    $region10: #{hb_combine_block_forward.1} parent=5 // pred_check_branch
      %346 = sbr.rel (%p343) target = $region12
    $region11: #{hb_combine_block_forward.1} parent=5 // pred_region
      %s347 = ssub.s32 %s19, 1
      // Predicated region
      $region13: #{hb_combine_block_forward.1} parent=11 // pred_check
        %p348 = pneg %p118
      $region14: #{hb_combine_block_forward.1} parent=11 // pred_check_branch
        %350 = sbr.rel (%p348) target = $region16
      $region15: #{hb_combine_block_forward.1} parent=11 // pred_region
        _
      $region16: #{hb_combine_block_forward.1} parent=11 // pred_fallthru
        _
      // Predicated region
      $region17: #{hb_combine_block_forward.1} parent=11 // pred_check
        %p351 = pneg %p139
      $region18: #{hb_combine_block_forward.1} parent=11 // pred_check_branch
        %353 = sbr.rel (%p351) target = $region20
      $region19: #{hb_combine_block_forward.1} parent=11 // pred_region
        _
      $region20: #{hb_combine_block_forward.1} parent=11 // pred_fallthru
        _
      // Predicated region
      $region21: #{hb_combine_block_forward.1} parent=11 // pred_check
        %p354 = pneg %p160
      $region22: #{hb_combine_block_forward.1} parent=11 // pred_check_branch
        %356 = sbr.rel (%p354) target = $region24
      $region23: #{hb_combine_block_forward.1} parent=11 // pred_region
        _
      $region24: #{hb_combine_block_forward.1} parent=11 // pred_fallthru
        _
      // Predicated region
      $region25: #{hb_combine_block_forward.1} parent=11 // pred_check
        %p357 = pneg %p181
      $region26: #{hb_combine_block_forward.1} parent=11 // pred_check_branch
        %359 = sbr.rel (%p357) target = $region28
      $region27: #{hb_combine_block_forward.1} parent=11 // pred_region
        _
      $region28: #{hb_combine_block_forward.1} parent=11 // pred_fallthru
        _
      // Predicated region
      $region29: #{hb_combine_block_forward.1} parent=11 // pred_check
        %p360 = pneg %p202
      $region30: #{hb_combine_block_forward.1} parent=11 // pred_check_branch
        %362 = sbr.rel (%p360) target = $region32
      $region31: #{hb_combine_block_forward.1} parent=11 // pred_region
        _
      $region32: #{hb_combine_block_forward.1} parent=11 // pred_fallthru
        _
      // Predicated region
      $region33: #{hb_combine_block_forward.1} parent=11 // pred_check
        %p363 = pneg %p223
      $region34: #{hb_combine_block_forward.1} parent=11 // pred_check_branch
        %365 = sbr.rel (%p363) target = $region36
      $region35: #{hb_combine_block_forward.1} parent=11 // pred_region
        _
      $region36: #{hb_combine_block_forward.1} parent=11 // pred_fallthru
        _
      // Predicated region
      $region37: #{hb_combine_block_forward.1} parent=11 // pred_check
        %p366 = pneg %p244
      $region38: #{hb_combine_block_forward.1} parent=11 // pred_check_branch
        %368 = sbr.rel (%p366) target = $region40
      $region39: #{hb_combine_block_forward.1} parent=11 // pred_region
        _
      $region40: #{hb_combine_block_forward.1} parent=11 // pred_fallthru
        _
      // Predicated region
      $region41: #{hb_combine_block_forward.1} parent=11 // pred_check
        %p369 = pneg %p265
      $region42: #{hb_combine_block_forward.1} parent=11 // pred_check_branch
        %371 = sbr.rel (%p369) target = $region44
      $region43: #{hb_combine_block_forward.1} parent=11 // pred_region
        _
      $region44: #{hb_combine_block_forward.1} parent=11 // pred_fallthru
        _
      // Predicated region
      $region45: #{hb_combine_block_forward.1} parent=11 // pred_check
        %p372 = pneg %p286
      $region46: #{hb_combine_block_forward.1} parent=11 // pred_check_branch
        %374 = sbr.rel (%p372) target = $region48
      $region47: #{hb_combine_block_forward.1} parent=11 // pred_region
        _
      $region48: #{hb_combine_block_forward.1} parent=11 // pred_fallthru
        _
      // Predicated region
      $region49: #{hb_combine_block_forward.1} parent=11 // pred_check
        %p375 = pneg %p307
      $region50: #{hb_combine_block_forward.1} parent=11 // pred_check_branch
        %377 = sbr.rel (%p375) target = $region52
      $region51: #{hb_combine_block_forward.1} parent=11 // pred_region
        _
      $region52: #{hb_combine_block_forward.1} parent=11 // pred_fallthru
        _
    $region12: #{hb_combine_block_forward.1} parent=5 // pred_fallthru
      _
    %p378 = scmp.lt.s32.totalorder %s19, 2
    // Predicated region
    $region53: #{hb_combine_block_forward.1} parent=5 // pred_check
      %p379 = pneg %p378
    $region54: #{hb_combine_block_forward.1} parent=5 // pred_check_branch
      %381 = sbr.rel (%p379) target = $region56
    $region55: #{hb_combine_block_forward.1} parent=5 // pred_region
      // Predicated region
      $region57: #{hb_combine_block_forward.1} parent=55 // pred_check
        %p382 = pneg %p39
      $region58: #{hb_combine_block_forward.1} parent=55 // pred_check_branch
        %384 = sbr.rel (%p382) target = $region60
      $region59: #{hb_combine_block_forward.1} parent=55 // pred_region
        %p385 = scmp.lt.s32.totalorder %s19, 1
        %s386 = scalar_select %p385, %s19, 1
        %s387 = smul.addr %s386, 4
        %s388 = smul.addr %s387, 8
        %s389 = scalar_lea.vmem %s0, %s388
      $region60: #{hb_combine_block_forward.1} parent=55 // pred_fallthru
        _
      // Predicated region
      $region61: #{hb_combine_block_forward.1} parent=55 // pred_check
        %p390 = pneg %p65
      $region62: #{hb_combine_block_forward.1} parent=55 // pred_check_branch
        %392 = sbr.rel (%p390) target = $region64
      $region63: #{hb_combine_block_forward.1} parent=55 // pred_region
        %p393 = scmp.lt.s32.totalorder %s19, 1
        %s394 = scalar_select %p393, %s19, 1
        %s395 = smul.addr %s394, 2
        %s396 = smul.addr %s395, 4
        %s397 = scalar_lea.vmem %s1, %s396
      $region64: #{hb_combine_block_forward.1} parent=55 // pred_fallthru
        _
      // Predicated region
      $region65: #{hb_combine_block_forward.1} parent=55 // pred_check
        %p398 = pneg %p91
      $region66: #{hb_combine_block_forward.1} parent=55 // pred_check_branch
        %400 = sbr.rel (%p398) target = $region68
      $region67: #{hb_combine_block_forward.1} parent=55 // pred_region
        %p401 = scmp.lt.s32.totalorder %s19, 1
        %s402 = scalar_select %p401, %s19, 1
        %s403 = smul.addr %s402, 16
        %s404 = smul.addr %s403, 8
        %s405 = scalar_lea.vmem %s2, %s404
      $region68: #{hb_combine_block_forward.1} parent=55 // pred_fallthru
        _
    $region56: #{hb_combine_block_forward.1} parent=5 // pred_fallthru
      _
    %p406 = scmp.le.s32.totalorder 1, %s19
    %p407 = scmp.lt.s32.totalorder %s19, 3
    %p408 = pnand %p406, %p407
    %p409 = pneg %p408
    // Predicated region
    $region69: #{hb_combine_block_forward.1} parent=5 // pred_check
      _
    $region70: #{hb_combine_block_forward.1} parent=5 // pred_check_branch
      %411 = sbr.rel (%p408) target = $region72
    $region71: #{hb_combine_block_forward.1} parent=5 // pred_region
      %s412 = ssub.s32 %s19, 1
      %p413 = scmp.lt.s32.totalorder %s24, 1
      %s414 = scalar_select %p413, %s24, 1
      %s415 = smul.addr %s414, 4
      %s416 = smul.addr %s415, 8
      %s417 = scalar_lea.vmem %s0, %s416
      %p418 = pneg %p45
      %p419 = pneg %p42
      %p420 = scmp.lt.s32.totalorder %s24, 1
      %s421 = scalar_select %p420, %s24, 1
      %s422 = smul.addr %s421, 2
      %s423 = smul.addr %s422, 4
      %s424 = scalar_lea.vmem %s1, %s423
      %p425 = pneg %p71
      %p426 = pneg %p68
      %p427 = scmp.lt.s32.totalorder %s24, 1
      %s428 = scalar_select %p427, %s24, 1
      %s429 = smul.addr %s428, 16
      %s430 = smul.addr %s429, 8
      %s431 = scalar_lea.vmem %s2, %s430
      %p432 = pneg %p97
      %p433 = pneg %p94
      %p434 = pneg %p118
      %p435 = pneg %p115
      %p436 = pneg %p139
      %p437 = pneg %p136
      %p438 = pneg %p160
      %p439 = pneg %p157
      %p440 = pneg %p181
      %p441 = pneg %p178
      %p442 = pneg %p202
      %p443 = pneg %p199
      %p444 = pneg %p223
      %p445 = pneg %p220
      %p446 = pneg %p244
      %p447 = pneg %p241
      %p448 = pneg %p265
      %p449 = pneg %p262
      %p450 = pneg %p286
      %p451 = pneg %p283
      %p452 = pneg %p307
      %p453 = pneg %p304
      %p454 = pneg %p333
      %p455 = pneg %p330
      %p456 = scmp.lt.s32.totalorder %s24, 1
      %s457 = scalar_select %p456, %s24, 1
      %s458 = smul.addr %s457, 2
      %s459 = smul.addr %s458, 4
      %s460 = scalar_lea.vmem %s13, %s459
      %p461 = scmp.lt.s32.totalorder %s24, 1
      %s462 = scalar_select %p461, %s24, 1
      %s463 = smul.addr %s462, 4
      %s464 = smul.addr %s463, 8
      %s465 = scalar_lea.vmem %s0, %s464
      %p466 = scmp.lt.s32.totalorder %s24, 1
      %s467 = scalar_select %p466, %s24, 1
      %s468 = smul.addr %s467, 2
      %s469 = smul.addr %s468, 4
      %s470 = scalar_lea.vmem %s1, %s469
      %p471 = scmp.lt.s32.totalorder %s24, 1
      %s472 = scalar_select %p471, %s24, 1
      %s473 = smul.addr %s472, 16
      %s474 = smul.addr %s473, 8
      %s475 = scalar_lea.vmem %s2, %s474
      %p476 = scmp.lt.s32.totalorder %s24, 1
      %s477 = scalar_select %p476, %s24, 1
      %s478 = smul.addr %s477, 2
      %s479 = smul.addr %s478, 4
      %s480 = scalar_lea.vmem %s13, %s479
      %v482 = vld [vmem:[%s465] sm:$0xff]
      %v483 = vld [vmem:[%s465 + $0x8] sm:$0xff]
      %v484 = vld [vmem:[%s465 + $0x10] sm:$0xff]
      %v485 = vld [vmem:[%s465 + $0x18] sm:$0xff]
      %v486 = vld [vmem:[%s3] sm:$0xff]
      %vm487 = vcmask 64512
      %v489 = vsel %vm487, %v482, 0
      %v492 = vsel %vm487, %v483, 0
      %v495 = vsel %vm487, %v484, 0
      %v498 = vsel %vm487, %v485, 0
      %500 = vmatprep.subr.mxu0 0.0
      %501 = vmatpush1.msra.mxu0 0.0
      %502 = vmatprep.subr.mxu0 0.0
      %503 = vmatpush1.msra.mxu0 0.0
      %504 = vmatprep.subr.mxu0 0.0
      %505 = vmatpush1.msra.mxu0 0.0
      %506 = vmatprep.subr.mxu0 0.0
      %507 = vmatpush1.msra.mxu0 0.0
      %508 = vmatprep.subr.mxu0 0.0
      %509 = vmatpush1.msra.mxu0 0.0
      %510 = vmatprep.subr.mxu0 0.0
      %511 = vmatpush1.msra.mxu0 0.0
      %512 = vmatprep.subr.mxu0 0.0
      %513 = vmatpush1.msra.mxu0 0.0
      %514 = vmatprep.subr.mxu0 0.0
      %515 = vmatpush1.msra.mxu0 0.0
      %516 = vmatprep.subr.mxu0 0.0
      %517 = vmatpush1.msra.mxu0 0.0
      %518 = vmatprep.subr.mxu0 0.0
      %519 = vmatpush1.msra.mxu0 0.0
      %520 = vmatprep.subr.mxu0 0.0
      %521 = vmatpush1.msra.mxu0 0.0
      %522 = vmatprep.subr.mxu0 0.0
      %523 = vmatpush1.msra.mxu0 0.0
      %524 = vmatprep.subr.mxu0 0.0
      %525 = vmatpush1.msra.mxu0 0.0
      %526 = vmatprep.subr.mxu0 0.0
      %527 = vmatpush1.msra.mxu0 0.0
      %528 = vmatprep.subr.mxu0 0.0
      %529 = vmatpush1.msra.mxu0 0.0
      %530 = vmatprep.subr.mxu0 0.0
      %531 = vmatpush1.msra.mxu0 %v486
      %532 = vmatprep.subr.mxu0 0.0
      %533 = vmatpush2.msra.mxu0 0.0
      %534 = vmatprep.subr.mxu0 0.0
      %535 = vmatpush2.msra.mxu0 0.0
      %536 = vmatprep.subr.mxu0 0.0
      %537 = vmatpush2.msra.mxu0 0.0
      %538 = vmatprep.subr.mxu0 0.0
      %539 = vmatpush2.msra.mxu0 0.0
      %540 = vmatprep.subr.mxu0 0.0
      %541 = vmatpush2.msra.mxu0 0.0
      %542 = vmatprep.subr.mxu0 0.0
      %543 = vmatpush2.msra.mxu0 0.0
      %544 = vmatprep.subr.mxu0 0.0
      %545 = vmatpush2.msra.mxu0 0.0
      %546 = vmatprep.subr.mxu0 0.0
      %547 = vmatpush2.msra.mxu0 0.0
      %548 = vmatprep.subr.mxu0 0.0
      %549 = vmatpush2.msra.mxu0 0.0
      %550 = vmatprep.subr.mxu0 0.0
      %551 = vmatpush2.msra.mxu0 0.0
      %552 = vmatprep.subr.mxu0 0.0
      %553 = vmatpush2.msra.mxu0 0.0
      %554 = vmatprep.subr.mxu0 0.0
      %555 = vmatpush2.msra.mxu0 0.0
      %556 = vmatprep.subr.mxu0 0.0
      %557 = vmatpush2.msra.mxu0 0.0
      %558 = vmatprep.subr.mxu0 0.0
      %559 = vmatpush2.msra.mxu0 0.0
      %560 = vmatprep.subr.mxu0 0.0
      %561 = vmatpush2.msra.mxu0 0.0
      %562 = vmatprep.subr.mxu0 0.0
      %563 = vmatpush2.msra.mxu0 0.0
      %564 = vmatprep.mubr.f32.mxu0 0.0
      %565 = vmatmul.mubr.f32.gmra.mxu0 %v489
      %v566 = vpop.f32.mrf.mxu0
      %v567 = vadd.f32 0.0, %v566
      %v568 = vpop.f32.mrf.mxu0
      %569 = vmatprep.mubr.f32.mxu0 0.0
      %570 = vmatmul.mubr.f32.gmra.mxu0 %v492
      %v571 = vpop.f32.mrf.mxu0
      %v572 = vadd.f32 0.0, %v571
      %v573 = vpop.f32.mrf.mxu0
      %574 = vmatprep.mubr.f32.mxu0 0.0
      %575 = vmatmul.mubr.f32.gmra.mxu0 %v495
      %v576 = vpop.f32.mrf.mxu0
      %v577 = vadd.f32 0.0, %v576
      %v578 = vpop.f32.mrf.mxu0
      %579 = vmatprep.mubr.f32.mxu0 0.0
      %580 = vmatmul.mubr.f32.gmra.mxu0 %v498
      %v581 = vpop.f32.mrf.mxu0
      %v582 = vadd.f32 0.0, %v581
      %v583 = vpop.f32.mrf.mxu0
      %584 = vdwg.mxu0
      %v585 = vld [vmem:[%s4] sm:$0xff]
      %v586 = vld [vmem:[%s4 + $0x8] sm:$0xff]
      %v587 = vld [vmem:[%s4 + $0x10] sm:$0xff]
      %v588 = vld [vmem:[%s4 + $0x18] sm:$0xff]
      %v589 = vld [vmem:[%s4 + $0x20] sm:$0xff]
      %v590 = vld [vmem:[%s4 + $0x28] sm:$0xff]
      %v591 = vld [vmem:[%s4 + $0x30] sm:$0xff]
      %v592 = vld [vmem:[%s4 + $0x38] sm:$0xff]
      %vm593 = vcmask 261120
      %v595 = vsel %vm593, %v585, 0
      %v598 = vsel %vm593, %v586, 0
      %v601 = vsel %vm593, %v587, 0
      %v604 = vsel %vm593, %v588, 0
      %v607 = vsel %vm593, %v589, 0
      %v610 = vsel %vm593, %v590, 0
      %v613 = vsel %vm593, %v591, 0
      %v616 = vsel %vm593, %v592, 0
      %618 = vmatprep.subr.mxu0 0.0
      %619 = vmatpush1.msra.mxu0 0.0
      %620 = vmatprep.subr.mxu0 0.0
      %621 = vmatpush1.msra.mxu0 0.0
      %622 = vmatprep.subr.mxu0 0.0
      %623 = vmatpush1.msra.mxu0 0.0
      %624 = vmatprep.subr.mxu0 0.0
      %625 = vmatpush1.msra.mxu0 0.0
      %626 = vmatprep.subr.mxu0 0.0
      %627 = vmatpush1.msra.mxu0 0.0
      %628 = vmatprep.subr.mxu0 0.0
      %629 = vmatpush1.msra.mxu0 0.0
      %630 = vmatprep.subr.mxu0 0.0
      %631 = vmatpush1.msra.mxu0 0.0
      %632 = vmatprep.subr.mxu0 0.0
      %633 = vmatpush1.msra.mxu0 0.0
      %634 = vmatprep.subr.mxu0 0.0
      %635 = vmatpush1.msra.mxu0 0.0
      %636 = vmatprep.subr.mxu0 0.0
      %637 = vmatpush1.msra.mxu0 0.0
      %638 = vmatprep.subr.mxu0 0.0
      %639 = vmatpush1.msra.mxu0 0.0
      %640 = vmatprep.subr.mxu0 0.0
      %641 = vmatpush1.msra.mxu0 0.0
      %642 = vmatprep.subr.mxu0 0.0
      %643 = vmatpush1.msra.mxu0 %v582
      %644 = vmatprep.subr.mxu0 0.0
      %645 = vmatpush1.msra.mxu0 %v577
      %646 = vmatprep.subr.mxu0 0.0
      %647 = vmatpush1.msra.mxu0 %v572
      %648 = vmatprep.subr.mxu0 0.0
      %649 = vmatpush1.msra.mxu0 %v567
      %650 = vmatprep.subr.mxu0 0.0
      %651 = vmatpush2.msra.mxu0 0.0
      %652 = vmatprep.subr.mxu0 0.0
      %653 = vmatpush2.msra.mxu0 0.0
      %654 = vmatprep.subr.mxu0 0.0
      %655 = vmatpush2.msra.mxu0 0.0
      %656 = vmatprep.subr.mxu0 0.0
      %657 = vmatpush2.msra.mxu0 0.0
      %658 = vmatprep.subr.mxu0 0.0
      %659 = vmatpush2.msra.mxu0 0.0
      %660 = vmatprep.subr.mxu0 0.0
      %661 = vmatpush2.msra.mxu0 0.0
      %662 = vmatprep.subr.mxu0 0.0
      %663 = vmatpush2.msra.mxu0 0.0
      %664 = vmatprep.subr.mxu0 0.0
      %665 = vmatpush2.msra.mxu0 0.0
      %666 = vmatprep.subr.mxu0 0.0
      %667 = vmatpush2.msra.mxu0 0.0
      %668 = vmatprep.subr.mxu0 0.0
      %669 = vmatpush2.msra.mxu0 0.0
      %670 = vmatprep.subr.mxu0 0.0
      %671 = vmatpush2.msra.mxu0 0.0
      %672 = vmatprep.subr.mxu0 0.0
      %673 = vmatpush2.msra.mxu0 0.0
      %674 = vmatprep.subr.mxu0 0.0
      %675 = vmatpush2.msra.mxu0 0.0
      %676 = vmatprep.subr.mxu0 0.0
      %677 = vmatpush2.msra.mxu0 0.0
      %678 = vmatprep.subr.mxu0 0.0
      %679 = vmatpush2.msra.mxu0 0.0
      %680 = vmatprep.subr.mxu0 0.0
      %681 = vmatpush2.msra.mxu0 0.0
      %682 = vmatprep.mubr.f32.mxu0 0.0
      %683 = vmatmul.mubr.f32.gmra.mxu0 %v595
      %v684 = vpop.f32.mrf.mxu0
      %v685 = vadd.f32 0.0, %v684
      %v686 = vpop.f32.mrf.mxu0
      %687 = vmatprep.mubr.f32.mxu0 0.0
      %688 = vmatmul.mubr.f32.gmra.mxu0 %v598
      %v689 = vpop.f32.mrf.mxu0
      %v690 = vadd.f32 0.0, %v689
      %v691 = vpop.f32.mrf.mxu0
      %692 = vmatprep.mubr.f32.mxu0 0.0
      %693 = vmatmul.mubr.f32.gmra.mxu0 %v601
      %v694 = vpop.f32.mrf.mxu0
      %v695 = vadd.f32 0.0, %v694
      %v696 = vpop.f32.mrf.mxu0
      %697 = vmatprep.mubr.f32.mxu0 0.0
      %698 = vmatmul.mubr.f32.gmra.mxu0 %v604
      %v699 = vpop.f32.mrf.mxu0
      %v700 = vadd.f32 0.0, %v699
      %v701 = vpop.f32.mrf.mxu0
      %702 = vmatprep.mubr.f32.mxu0 0.0
      %703 = vmatmul.mubr.f32.gmra.mxu0 %v607
      %v704 = vpop.f32.mrf.mxu0
      %v705 = vadd.f32 0.0, %v704
      %v706 = vpop.f32.mrf.mxu0
      %707 = vmatprep.mubr.f32.mxu0 0.0
      %708 = vmatmul.mubr.f32.gmra.mxu0 %v610
      %v709 = vpop.f32.mrf.mxu0
      %v710 = vadd.f32 0.0, %v709
      %v711 = vpop.f32.mrf.mxu0
      %712 = vmatprep.mubr.f32.mxu0 0.0
      %713 = vmatmul.mubr.f32.gmra.mxu0 %v613
      %v714 = vpop.f32.mrf.mxu0
      %v715 = vadd.f32 0.0, %v714
      %v716 = vpop.f32.mrf.mxu0
      %717 = vmatprep.mubr.f32.mxu0 0.0
      %718 = vmatmul.mubr.f32.gmra.mxu0 %v616
      %v719 = vpop.f32.mrf.mxu0
      %v720 = vadd.f32 0.0, %v719
      %v721 = vpop.f32.mrf.mxu0
      %722 = vdwg.mxu0
      %vm723 = vcmask 130048
      %724 = vst.msk [vmem:[#allocation2] sm:$0xff] %vm723, %v685
      %725 = vst.msk [vmem:[#allocation2 + $0x8] sm:$0xff] %vm723, %v690
      %726 = vst.msk [vmem:[#allocation2 + $0x10] sm:$0xff] %vm723, %v695
      %727 = vst.msk [vmem:[#allocation2 + $0x18] sm:$0xff] %vm723, %v700
      %728 = vst.msk [vmem:[#allocation2 + $0x20] sm:$0xff] %vm723, %v705
      %729 = vst.msk [vmem:[#allocation2 + $0x28] sm:$0xff] %vm723, %v710
      %730 = vst.msk [vmem:[#allocation2 + $0x30] sm:$0xff] %vm723, %v715
      %731 = vst.msk [vmem:[#allocation2 + $0x38] sm:$0xff] %vm723, %v720
      %v732 = vld [vmem:[#allocation2] ss:$16 sm:$0x3]
      %v733 = vld [vmem:[#allocation2] ss:$16 sm:$0xc]
      %v734 = vor.u32 %v732, %v733
      %vm735 = vcmask 125952
      %736 = vst.msk [vmem:[#allocation3] sm:$0xf] %vm735, %v734
      %s737 = scalar_lea.vmem [#allocation2], 1
      %v738 = vld [vmem:[%s737] ss:$16 sm:$0x3]
      %v739 = vld [vmem:[%s737] ss:$16 sm:$0xc]
      %v740 = vor.u32 %v738, %v739
      %742 = vrot.lane.b32.xlu0 %v740, 16
      %v743 = vpop.permute.xlu0 %742
      %vm745 = vcmask 257152
      %746 = vst.msk [vmem:[#allocation3] sm:$0xf] %vm745, %v743
      %s747 = scalar_lea.vmem [#allocation2], 2
      %v748 = vld [vmem:[%s747] ss:$16 sm:$0x3]
      %v749 = vld [vmem:[%s747] ss:$16 sm:$0xc]
      %v750 = vor.u32 %v748, %v749
      %752 = vrot.lane.b32.xlu0 %v750, 32
      %v753 = vpop.permute.xlu0 %752
      %vm755 = vcmask 388352
      %756 = vst.msk [vmem:[#allocation3] sm:$0xf] %vm755, %v753
      %s757 = scalar_lea.vmem [#allocation2], 3
      %v758 = vld [vmem:[%s757] ss:$16 sm:$0x3]
      %v759 = vld [vmem:[%s757] ss:$16 sm:$0xc]
      %v760 = vor.u32 %v758, %v759
      %762 = vrot.lane.b32.xlu0 %v760, 48
      %v763 = vpop.permute.xlu0 %762
      %vm765 = vcmask 519552
      %766 = vst.msk [vmem:[#allocation3] sm:$0xf] %vm765, %v763
      %s767 = scalar_lea.vmem [#allocation2], 4
      %v768 = vld [vmem:[%s767] ss:$16 sm:$0x3]
      %v769 = vld [vmem:[%s767] ss:$16 sm:$0xc]
      %v770 = vor.u32 %v768, %v769
      %772 = vrot.lane.b32.xlu0 %v770, 64
      %v773 = vpop.permute.xlu0 %772
      %vm775 = vcmask 650752
      %776 = vst.msk [vmem:[#allocation3] sm:$0xf] %vm775, %v773
      %s777 = scalar_lea.vmem [#allocation2], 5
      %v778 = vld [vmem:[%s777] ss:$16 sm:$0x3]
      %v779 = vld [vmem:[%s777] ss:$16 sm:$0xc]
      %v780 = vor.u32 %v778, %v779
      %782 = vrot.lane.b32.xlu0 %v780, 80
      %v783 = vpop.permute.xlu0 %782
      %vm785 = vcmask 781952
      %786 = vst.msk [vmem:[#allocation3] sm:$0xf] %vm785, %v783
      %s787 = scalar_lea.vmem [#allocation2], 6
      %v788 = vld [vmem:[%s787] ss:$16 sm:$0x3]
      %v789 = vld [vmem:[%s787] ss:$16 sm:$0xc]
      %v790 = vor.u32 %v788, %v789
      %792 = vrot.lane.b32.xlu0 %v790, 96
      %v793 = vpop.permute.xlu0 %792
      %vm795 = vcmask 913152
      %796 = vst.msk [vmem:[#allocation3] sm:$0xf] %vm795, %v793
      %s797 = scalar_lea.vmem [#allocation2], 7
      %v798 = vld [vmem:[%s797] ss:$16 sm:$0x3]
      %v799 = vld [vmem:[%s797] ss:$16 sm:$0xc]
      %v800 = vor.u32 %v798, %v799
      %802 = vrot.lane.b32.xlu0 %v800, 112
      %v803 = vpop.permute.xlu0 %802
      %vm805 = vcmask 1044352
      %806 = vst.msk [vmem:[#allocation3] sm:$0xf] %vm805, %v803
      %s807 = scalar_lea.vmem [#allocation2], 8
      %v808 = vld [vmem:[%s807] ss:$16 sm:$0x3]
      %v809 = vld [vmem:[%s807] ss:$16 sm:$0xc]
      %v810 = vor.u32 %v808, %v809
      %811 = vst.msk [vmem:[#allocation3 + $0x4] sm:$0xf] %vm735, %v810
      %s812 = scalar_lea.vmem [#allocation2], 9
      %v813 = vld [vmem:[%s812] ss:$16 sm:$0x3]
      %v814 = vld [vmem:[%s812] ss:$16 sm:$0xc]
      %v815 = vor.u32 %v813, %v814
      %817 = vrot.lane.b32.xlu0 %v815, 16
      %v818 = vpop.permute.xlu0 %817
      %820 = vst.msk [vmem:[#allocation3 + $0x4] sm:$0xf] %vm745, %v818
      %s821 = scalar_lea.vmem [#allocation2], 10
      %v822 = vld [vmem:[%s821] ss:$16 sm:$0x3]
      %v823 = vld [vmem:[%s821] ss:$16 sm:$0xc]
      %v824 = vor.u32 %v822, %v823
      %826 = vrot.lane.b32.xlu0 %v824, 32
      %v827 = vpop.permute.xlu0 %826
      %829 = vst.msk [vmem:[#allocation3 + $0x4] sm:$0xf] %vm755, %v827
      %s830 = scalar_lea.vmem [#allocation2], 11
      %v831 = vld [vmem:[%s830] ss:$16 sm:$0x3]
      %v832 = vld [vmem:[%s830] ss:$16 sm:$0xc]
      %v833 = vor.u32 %v831, %v832
      %835 = vrot.lane.b32.xlu0 %v833, 48
      %v836 = vpop.permute.xlu0 %835
      %838 = vst.msk [vmem:[#allocation3 + $0x4] sm:$0xf] %vm765, %v836
      %s839 = scalar_lea.vmem [#allocation2], 12
      %v840 = vld [vmem:[%s839] ss:$16 sm:$0x3]
      %v841 = vld [vmem:[%s839] ss:$16 sm:$0xc]
      %v842 = vor.u32 %v840, %v841
      %844 = vrot.lane.b32.xlu0 %v842, 64
      %v845 = vpop.permute.xlu0 %844
      %847 = vst.msk [vmem:[#allocation3 + $0x4] sm:$0xf] %vm775, %v845
      %s848 = scalar_lea.vmem [#allocation2], 13
      %v849 = vld [vmem:[%s848] ss:$16 sm:$0x3]
      %v850 = vld [vmem:[%s848] ss:$16 sm:$0xc]
      %v851 = vor.u32 %v849, %v850
      %853 = vrot.lane.b32.xlu0 %v851, 80
      %v854 = vpop.permute.xlu0 %853
      %856 = vst.msk [vmem:[#allocation3 + $0x4] sm:$0xf] %vm785, %v854
      %s857 = scalar_lea.vmem [#allocation2], 14
      %v858 = vld [vmem:[%s857] ss:$16 sm:$0x3]
      %v859 = vld [vmem:[%s857] ss:$16 sm:$0xc]
      %v860 = vor.u32 %v858, %v859
      %862 = vrot.lane.b32.xlu0 %v860, 96
      %v863 = vpop.permute.xlu0 %862
      %865 = vst.msk [vmem:[#allocation3 + $0x4] sm:$0xf] %vm795, %v863
      %s866 = scalar_lea.vmem [#allocation2], 15
      %v867 = vld [vmem:[%s866] ss:$16 sm:$0x3]
      %v868 = vld [vmem:[%s866] ss:$16 sm:$0xc]
      %v869 = vor.u32 %v867, %v868
      %871 = vrot.lane.b32.xlu0 %v869, 112
      %v872 = vpop.permute.xlu0 %871
      %874 = vst.msk [vmem:[#allocation3 + $0x4] sm:$0xf] %vm805, %v872
      %v875 = vld [vmem:[#allocation3] sm:$0xff]
      %v877 = vcombine.high %v875, %v875
      %v879 = vpack.c.bf16 %v875, %v875
      %v880 = vpack.c.bf16 %v877, %v877
      %v881 = vld [vmem:[%s7] sm:$0xf]
      %v882 = vld [vmem:[%s7 + $0x4] sm:$0xf]
      %v883 = vld [vmem:[%s7 + $0x8] sm:$0xf]
      %v884 = vld [vmem:[%s470] sm:$0xff]
      %v886 = vcombine.high %v884, %v884
      %v888 = vpack.c.bf16 %v884, %v884
      %v889 = vpack.c.bf16 %v886, %v886
      %s890 = scalar_lea.vmem %s7, 12
      %v891 = vld [vmem:[%s890] sm:$0xf]
      %v892 = vld [vmem:[%s890 + $0x4] sm:$0xf]
      %v893 = vld [vmem:[%s890 + $0x8] sm:$0xf]
      %v897 = vunpack.c.l.b16 %v891
      %v898 = vunpack.c.l.b16 %v892
      %v899 = vunpack.c.l.b16 %v893
      %v900 = vpack.c.b16 %v898, %v897
      %v901 = vpack.c.b16 %v899, %v899
      %vm902 = vcmask 31744
      %v904 = vsel %vm902, %v900, 0
      %v907 = vsel %vm902, %v901, 0
      %vm909 = vcmask 1041408
      %v911 = vsel %vm909, %v888, 0
      %v914 = vsel %vm909, %v889, 0
      %916 = vmatprep.subr.bf16.mxu0 0
      %917 = vmatpush1.bf16.msra.mxu0 0
      %918 = vmatprep.subr.bf16.mxu0 0
      %919 = vmatpush1.bf16.msra.mxu0 0
      %920 = vmatprep.subr.bf16.mxu0 0
      %921 = vmatpush1.bf16.msra.mxu0 0
      %922 = vmatprep.subr.bf16.mxu0 0
      %923 = vmatpush1.bf16.msra.mxu0 0
      %924 = vmatprep.subr.bf16.mxu0 0
      %925 = vmatpush1.bf16.msra.mxu0 0
      %926 = vmatprep.subr.bf16.mxu0 0
      %927 = vmatpush1.bf16.msra.mxu0 0
      %928 = vmatprep.subr.bf16.mxu0 0
      %929 = vmatpush1.bf16.msra.mxu0 0
      %930 = vmatprep.subr.bf16.mxu0 %v914
      %931 = vmatpush1.bf16.msra.mxu0 %v911
      %932 = vmatprep.subr.bf16.mxu0 0
      %933 = vmatpush2.bf16.msra.mxu0 0
      %934 = vmatprep.subr.bf16.mxu0 0
      %935 = vmatpush2.bf16.msra.mxu0 0
      %936 = vmatprep.subr.bf16.mxu0 0
      %937 = vmatpush2.bf16.msra.mxu0 0
      %938 = vmatprep.subr.bf16.mxu0 0
      %939 = vmatpush2.bf16.msra.mxu0 0
      %940 = vmatprep.subr.bf16.mxu0 0
      %941 = vmatpush2.bf16.msra.mxu0 0
      %942 = vmatprep.subr.bf16.mxu0 0
      %943 = vmatpush2.bf16.msra.mxu0 0
      %944 = vmatprep.subr.bf16.mxu0 0
      %945 = vmatpush2.bf16.msra.mxu0 0
      %946 = vmatprep.subr.bf16.mxu0 0
      %947 = vmatpush2.bf16.msra.mxu0 0
      %948 = vmatprep.mubr.bf16.mxu0 0
      %949 = vmatmul.mubr.bf16.gmra.mxu0 %v904
      %v950 = vpop.f32.mrf.mxu0
      %v951 = vadd.f32 0.0, %v950
      %v952 = vpop.f32.mrf.mxu0
      %v953 = vadd.f32 0.0, %v952
      %v954 = vpop.f32.mrf.mxu0
      %v955 = vadd.f32 0.0, %v954
      %v956 = vpop.f32.mrf.mxu0
      %v957 = vadd.f32 0.0, %v956
      %958 = vmatprep.mubr.bf16.mxu0 0
      %959 = vmatmul.mubr.bf16.gmra.mxu0 %v907
      %v960 = vpop.f32.mrf.mxu0
      %v961 = vadd.f32 0.0, %v960
      %v962 = vpop.f32.mrf.mxu0
      %v963 = vadd.f32 0.0, %v962
      %v964 = vpop.f32.mrf.mxu0
      %v965 = vpop.f32.mrf.mxu0
      %966 = vdwg.mxu0
      %v970 = vunpack.c.l.b16 %v881
      %v971 = vunpack.c.l.b16 %v882
      %v972 = vunpack.c.l.b16 %v883
      %v973 = vpack.c.b16 %v971, %v970
      %v974 = vpack.c.b16 %v972, %v972
      %v976 = vsel %vm902, %v973, 0
      %v979 = vsel %vm902, %v974, 0
      %v982 = vsel %vm909, %v879, 0
      %v985 = vsel %vm909, %v880, 0
      %987 = vmatprep.subr.bf16.mxu0 0
      %988 = vmatpush1.bf16.msra.mxu0 0
      %989 = vmatprep.subr.bf16.mxu0 0
      %990 = vmatpush1.bf16.msra.mxu0 0
      %991 = vmatprep.subr.bf16.mxu0 0
      %992 = vmatpush1.bf16.msra.mxu0 0
      %993 = vmatprep.subr.bf16.mxu0 0
      %994 = vmatpush1.bf16.msra.mxu0 0
      %995 = vmatprep.subr.bf16.mxu0 0
      %996 = vmatpush1.bf16.msra.mxu0 0
      %997 = vmatprep.subr.bf16.mxu0 0
      %998 = vmatpush1.bf16.msra.mxu0 0
      %999 = vmatprep.subr.bf16.mxu0 0
      %1000 = vmatpush1.bf16.msra.mxu0 0
      %1001 = vmatprep.subr.bf16.mxu0 %v985
      %1002 = vmatpush1.bf16.msra.mxu0 %v982
      %1003 = vmatprep.subr.bf16.mxu0 0
      %1004 = vmatpush2.bf16.msra.mxu0 0
      %1005 = vmatprep.subr.bf16.mxu0 0
      %1006 = vmatpush2.bf16.msra.mxu0 0
      %1007 = vmatprep.subr.bf16.mxu0 0
      %1008 = vmatpush2.bf16.msra.mxu0 0
      %1009 = vmatprep.subr.bf16.mxu0 0
      %1010 = vmatpush2.bf16.msra.mxu0 0
      %1011 = vmatprep.subr.bf16.mxu0 0
      %1012 = vmatpush2.bf16.msra.mxu0 0
      %1013 = vmatprep.subr.bf16.mxu0 0
      %1014 = vmatpush2.bf16.msra.mxu0 0
      %1015 = vmatprep.subr.bf16.mxu0 0
      %1016 = vmatpush2.bf16.msra.mxu0 0
      %1017 = vmatprep.subr.bf16.mxu0 0
      %1018 = vmatpush2.bf16.msra.mxu0 0
      %1019 = vmatprep.mubr.bf16.mxu0 0
      %1020 = vmatmul.mubr.bf16.gmra.mxu0 %v976
      %v1021 = vpop.f32.mrf.mxu0
      %v1022 = vadd.f32 %v951, %v1021
      %v1023 = vpop.f32.mrf.mxu0
      %v1024 = vadd.f32 %v953, %v1023
      %v1025 = vpop.f32.mrf.mxu0
      %v1026 = vadd.f32 %v955, %v1025
      %v1027 = vpop.f32.mrf.mxu0
      %v1028 = vadd.f32 %v957, %v1027
      %1029 = vmatprep.mubr.bf16.mxu0 0
      %1030 = vmatmul.mubr.bf16.gmra.mxu0 %v979
      %v1031 = vpop.f32.mrf.mxu0
      %v1032 = vadd.f32 %v961, %v1031
      %v1033 = vpop.f32.mrf.mxu0
      %v1034 = vadd.f32 %v963, %v1033
      %v1035 = vpop.f32.mrf.mxu0
      %v1036 = vpop.f32.mrf.mxu0
      %1037 = vdwg.mxu0
      %v1038 = vld [vmem:[%s475] sm:$0xff]
      %v1039 = vld [vmem:[%s475 + $0x8] sm:$0xff]
      %v1040 = vld [vmem:[%s475 + $0x10] sm:$0xff]
      %v1041 = vld [vmem:[%s475 + $0x18] sm:$0xff]
      %v1042 = vld [vmem:[%s475 + $0x20] sm:$0xff]
      %v1043 = vld [vmem:[%s475 + $0x28] sm:$0xff]
      %v1044 = vld [vmem:[%s475 + $0x30] sm:$0xff]
      %v1045 = vld [vmem:[%s475 + $0x38] sm:$0xff]
      %v1046 = vld [vmem:[%s475 + $0x40] sm:$0xff]
      %v1047 = vld [vmem:[%s475 + $0x48] sm:$0xff]
      %v1048 = vld [vmem:[%s475 + $0x50] sm:$0xff]
      %v1049 = vld [vmem:[%s475 + $0x58] sm:$0xff]
      %v1050 = vld [vmem:[%s475 + $0x60] sm:$0xff]
      %v1051 = vld [vmem:[%s475 + $0x68] sm:$0xff]
      %v1052 = vld [vmem:[%s475 + $0x70] sm:$0xff]
      %v1053 = vld [vmem:[%s475 + $0x78] sm:$0xff]
      %v1054 = vld [vmem:[%s5] sm:$0xff]
      %v1055 = vld [vmem:[%s5 + $0x8] sm:$0xff]
      %v1056 = vld [vmem:[%s5 + $0x10] sm:$0xff]
      %v1057 = vld [vmem:[%s5 + $0x18] sm:$0xff]
      %v1059 = vsel %vm593, %v1038, 0
      %v1062 = vsel %vm593, %v1039, 0
      %v1065 = vsel %vm593, %v1040, 0
      %v1068 = vsel %vm593, %v1041, 0
      %v1071 = vsel %vm593, %v1042, 0
      %v1074 = vsel %vm593, %v1043, 0
      %v1077 = vsel %vm593, %v1044, 0
      %v1080 = vsel %vm593, %v1045, 0
      %v1083 = vsel %vm593, %v1046, 0
      %v1086 = vsel %vm593, %v1047, 0
      %v1089 = vsel %vm593, %v1048, 0
      %v1092 = vsel %vm593, %v1049, 0
      %v1095 = vsel %vm593, %v1050, 0
      %v1098 = vsel %vm593, %v1051, 0
      %v1101 = vsel %vm593, %v1052, 0
      %v1104 = vsel %vm593, %v1053, 0
      %1106 = vmatprep.subr.mxu0 0.0
      %1107 = vmatpush1.msra.mxu0 0.0
      %1108 = vmatprep.subr.mxu0 0.0
      %1109 = vmatpush1.msra.mxu0 0.0
      %1110 = vmatprep.subr.mxu0 0.0
      %1111 = vmatpush1.msra.mxu0 0.0
      %1112 = vmatprep.subr.mxu0 0.0
      %1113 = vmatpush1.msra.mxu0 0.0
      %1114 = vmatprep.subr.mxu0 0.0
      %1115 = vmatpush1.msra.mxu0 0.0
      %1116 = vmatprep.subr.mxu0 0.0
      %1117 = vmatpush1.msra.mxu0 0.0
      %1118 = vmatprep.subr.mxu0 0.0
      %1119 = vmatpush1.msra.mxu0 0.0
      %1120 = vmatprep.subr.mxu0 0.0
      %1121 = vmatpush1.msra.mxu0 0.0
      %1122 = vmatprep.subr.mxu0 0.0
      %1123 = vmatpush1.msra.mxu0 0.0
      %1124 = vmatprep.subr.mxu0 0.0
      %1125 = vmatpush1.msra.mxu0 0.0
      %1126 = vmatprep.subr.mxu0 0.0
      %1127 = vmatpush1.msra.mxu0 0.0
      %1128 = vmatprep.subr.mxu0 0.0
      %1129 = vmatpush1.msra.mxu0 0.0
      %1130 = vmatprep.subr.mxu0 0.0
      %1131 = vmatpush1.msra.mxu0 %v1057
      %1132 = vmatprep.subr.mxu0 0.0
      %1133 = vmatpush1.msra.mxu0 %v1056
      %1134 = vmatprep.subr.mxu0 0.0
      %1135 = vmatpush1.msra.mxu0 %v1055
      %1136 = vmatprep.subr.mxu0 0.0
      %1137 = vmatpush1.msra.mxu0 %v1054
      %1138 = vmatprep.subr.mxu0 0.0
      %1139 = vmatpush2.msra.mxu0 0.0
      %1140 = vmatprep.subr.mxu0 0.0
      %1141 = vmatpush2.msra.mxu0 0.0
      %1142 = vmatprep.subr.mxu0 0.0
      %1143 = vmatpush2.msra.mxu0 0.0
      %1144 = vmatprep.subr.mxu0 0.0
      %1145 = vmatpush2.msra.mxu0 0.0
      %1146 = vmatprep.subr.mxu0 0.0
      %1147 = vmatpush2.msra.mxu0 0.0
      %1148 = vmatprep.subr.mxu0 0.0
      %1149 = vmatpush2.msra.mxu0 0.0
      %1150 = vmatprep.subr.mxu0 0.0
      %1151 = vmatpush2.msra.mxu0 0.0
      %1152 = vmatprep.subr.mxu0 0.0
      %1153 = vmatpush2.msra.mxu0 0.0
      %1154 = vmatprep.subr.mxu0 0.0
      %1155 = vmatpush2.msra.mxu0 0.0
      %1156 = vmatprep.subr.mxu0 0.0
      %1157 = vmatpush2.msra.mxu0 0.0
      %1158 = vmatprep.subr.mxu0 0.0
      %1159 = vmatpush2.msra.mxu0 0.0
      %1160 = vmatprep.subr.mxu0 0.0
      %1161 = vmatpush2.msra.mxu0 0.0
      %1162 = vmatprep.subr.mxu0 0.0
      %1163 = vmatpush2.msra.mxu0 0.0
      %1164 = vmatprep.subr.mxu0 0.0
      %1165 = vmatpush2.msra.mxu0 0.0
      %1166 = vmatprep.subr.mxu0 0.0
      %1167 = vmatpush2.msra.mxu0 0.0
      %1168 = vmatprep.subr.mxu0 0.0
      %1169 = vmatpush2.msra.mxu0 0.0
      %1170 = vmatprep.mubr.f32.mxu0 0.0
      %1171 = vmatmul.mubr.f32.gmra.mxu0 %v1059
      %v1172 = vpop.f32.mrf.mxu0
      %v1173 = vadd.f32 0.0, %v1172
      %v1174 = vpop.f32.mrf.mxu0
      %1175 = vmatprep.mubr.f32.mxu0 0.0
      %1176 = vmatmul.mubr.f32.gmra.mxu0 %v1062
      %v1177 = vpop.f32.mrf.mxu0
      %v1178 = vadd.f32 0.0, %v1177
      %v1179 = vpop.f32.mrf.mxu0
      %1180 = vmatprep.mubr.f32.mxu0 0.0
      %1181 = vmatmul.mubr.f32.gmra.mxu0 %v1065
      %v1182 = vpop.f32.mrf.mxu0
      %v1183 = vadd.f32 0.0, %v1182
      %v1184 = vpop.f32.mrf.mxu0
      %1185 = vmatprep.mubr.f32.mxu0 0.0
      %1186 = vmatmul.mubr.f32.gmra.mxu0 %v1068
      %v1187 = vpop.f32.mrf.mxu0
      %v1188 = vadd.f32 0.0, %v1187
      %v1189 = vpop.f32.mrf.mxu0
      %1190 = vmatprep.mubr.f32.mxu0 0.0
      %1191 = vmatmul.mubr.f32.gmra.mxu0 %v1071
      %v1192 = vpop.f32.mrf.mxu0
      %v1193 = vadd.f32 0.0, %v1192
      %v1194 = vpop.f32.mrf.mxu0
      %1195 = vmatprep.mubr.f32.mxu0 0.0
      %1196 = vmatmul.mubr.f32.gmra.mxu0 %v1074
      %v1197 = vpop.f32.mrf.mxu0
      %v1198 = vadd.f32 0.0, %v1197
      %v1199 = vpop.f32.mrf.mxu0
      %1200 = vmatprep.mubr.f32.mxu0 0.0
      %1201 = vmatmul.mubr.f32.gmra.mxu0 %v1077
      %v1202 = vpop.f32.mrf.mxu0
      %v1203 = vadd.f32 0.0, %v1202
      %v1204 = vpop.f32.mrf.mxu0
      %1205 = vmatprep.mubr.f32.mxu0 0.0
      %1206 = vmatmul.mubr.f32.gmra.mxu0 %v1080
      %v1207 = vpop.f32.mrf.mxu0
      %v1208 = vadd.f32 0.0, %v1207
      %v1209 = vpop.f32.mrf.mxu0
      %1210 = vmatprep.mubr.f32.mxu0 0.0
      %1211 = vmatmul.mubr.f32.gmra.mxu0 %v1083
      %v1212 = vpop.f32.mrf.mxu0
      %v1213 = vadd.f32 0.0, %v1212
      %v1214 = vpop.f32.mrf.mxu0
      %1215 = vmatprep.mubr.f32.mxu0 0.0
      %1216 = vmatmul.mubr.f32.gmra.mxu0 %v1086
      %v1217 = vpop.f32.mrf.mxu0
      %v1218 = vadd.f32 0.0, %v1217
      %v1219 = vpop.f32.mrf.mxu0
      %1220 = vmatprep.mubr.f32.mxu0 0.0
      %1221 = vmatmul.mubr.f32.gmra.mxu0 %v1089
      %v1222 = vpop.f32.mrf.mxu0
      %v1223 = vadd.f32 0.0, %v1222
      %v1224 = vpop.f32.mrf.mxu0
      %1225 = vmatprep.mubr.f32.mxu0 0.0
      %1226 = vmatmul.mubr.f32.gmra.mxu0 %v1092
      %v1227 = vpop.f32.mrf.mxu0
      %v1228 = vadd.f32 0.0, %v1227
      %v1229 = vpop.f32.mrf.mxu0
      %1230 = vmatprep.mubr.f32.mxu0 0.0
      %1231 = vmatmul.mubr.f32.gmra.mxu0 %v1095
      %v1232 = vpop.f32.mrf.mxu0
      %v1233 = vadd.f32 0.0, %v1232
      %v1234 = vpop.f32.mrf.mxu0
      %1235 = vmatprep.mubr.f32.mxu0 0.0
      %1236 = vmatmul.mubr.f32.gmra.mxu0 %v1098
      %v1237 = vpop.f32.mrf.mxu0
      %v1238 = vadd.f32 0.0, %v1237
      %v1239 = vpop.f32.mrf.mxu0
      %1240 = vmatprep.mubr.f32.mxu0 0.0
      %1241 = vmatmul.mubr.f32.gmra.mxu0 %v1101
      %v1242 = vpop.f32.mrf.mxu0
      %v1243 = vadd.f32 0.0, %v1242
      %v1244 = vpop.f32.mrf.mxu0
      %1245 = vmatprep.mubr.f32.mxu0 0.0
      %1246 = vmatmul.mubr.f32.gmra.mxu0 %v1104
      %v1247 = vpop.f32.mrf.mxu0
      %v1248 = vadd.f32 0.0, %v1247
      %v1249 = vpop.f32.mrf.mxu0
      %1250 = vdwg.mxu0
      %v1251 = vld [vmem:[%s6] sm:$0xff]
      %v1252 = vld [vmem:[%s6 + $0x8] sm:$0xff]
      %v1253 = vld [vmem:[%s6 + $0x10] sm:$0xff]
      %v1254 = vld [vmem:[%s6 + $0x18] sm:$0xff]
      %v1255 = vld [vmem:[%s6 + $0x20] sm:$0xff]
      %v1256 = vld [vmem:[%s6 + $0x28] sm:$0xff]
      %v1257 = vld [vmem:[%s6 + $0x30] sm:$0xff]
      %v1258 = vld [vmem:[%s6 + $0x38] sm:$0xff]
      %1259 = vmatprep.subr.mxu0 0.0
      %1260 = vmatpush1.msra.mxu0 %v1248
      %1261 = vmatprep.subr.mxu0 0.0
      %1262 = vmatpush1.msra.mxu0 %v1243
      %1263 = vmatprep.subr.mxu0 0.0
      %1264 = vmatpush1.msra.mxu0 %v1238
      %1265 = vmatprep.subr.mxu0 0.0
      %1266 = vmatpush1.msra.mxu0 %v1233
      %1267 = vmatprep.subr.mxu0 0.0
      %1268 = vmatpush1.msra.mxu0 %v1228
      %1269 = vmatprep.subr.mxu0 0.0
      %1270 = vmatpush1.msra.mxu0 %v1223
      %1271 = vmatprep.subr.mxu0 0.0
      %1272 = vmatpush1.msra.mxu0 %v1218
      %1273 = vmatprep.subr.mxu0 0.0
      %1274 = vmatpush1.msra.mxu0 %v1213
      %1275 = vmatprep.subr.mxu0 0.0
      %1276 = vmatpush1.msra.mxu0 %v1208
      %1277 = vmatprep.subr.mxu0 0.0
      %1278 = vmatpush1.msra.mxu0 %v1203
      %1279 = vmatprep.subr.mxu0 0.0
      %1280 = vmatpush1.msra.mxu0 %v1198
      %1281 = vmatprep.subr.mxu0 0.0
      %1282 = vmatpush1.msra.mxu0 %v1193
      %1283 = vmatprep.subr.mxu0 0.0
      %1284 = vmatpush1.msra.mxu0 %v1188
      %1285 = vmatprep.subr.mxu0 0.0
      %1286 = vmatpush1.msra.mxu0 %v1183
      %1287 = vmatprep.subr.mxu0 0.0
      %1288 = vmatpush1.msra.mxu0 %v1178
      %1289 = vmatprep.subr.mxu0 0.0
      %1290 = vmatpush1.msra.mxu0 %v1173
      %1291 = vmatprep.subr.mxu0 0.0
      %1292 = vmatpush2.msra.mxu0 0.0
      %1293 = vmatprep.subr.mxu0 0.0
      %1294 = vmatpush2.msra.mxu0 0.0
      %1295 = vmatprep.subr.mxu0 0.0
      %1296 = vmatpush2.msra.mxu0 0.0
      %1297 = vmatprep.subr.mxu0 0.0
      %1298 = vmatpush2.msra.mxu0 0.0
      %1299 = vmatprep.subr.mxu0 0.0
      %1300 = vmatpush2.msra.mxu0 0.0
      %1301 = vmatprep.subr.mxu0 0.0
      %1302 = vmatpush2.msra.mxu0 0.0
      %1303 = vmatprep.subr.mxu0 0.0
      %1304 = vmatpush2.msra.mxu0 0.0
      %1305 = vmatprep.subr.mxu0 0.0
      %1306 = vmatpush2.msra.mxu0 0.0
      %1307 = vmatprep.subr.mxu0 0.0
      %1308 = vmatpush2.msra.mxu0 0.0
      %1309 = vmatprep.subr.mxu0 0.0
      %1310 = vmatpush2.msra.mxu0 0.0
      %1311 = vmatprep.subr.mxu0 0.0
      %1312 = vmatpush2.msra.mxu0 0.0
      %1313 = vmatprep.subr.mxu0 0.0
      %1314 = vmatpush2.msra.mxu0 0.0
      %1315 = vmatprep.subr.mxu0 0.0
      %1316 = vmatpush2.msra.mxu0 0.0
      %1317 = vmatprep.subr.mxu0 0.0
      %1318 = vmatpush2.msra.mxu0 0.0
      %1319 = vmatprep.subr.mxu0 0.0
      %1320 = vmatpush2.msra.mxu0 0.0
      %1321 = vmatprep.subr.mxu0 0.0
      %1322 = vmatpush2.msra.mxu0 0.0
      %1323 = vmatprep.mubr.f32.mxu0 0.0
      %1324 = vmatmul.mubr.f32.gmra.mxu0 %v1251
      %v1325 = vpop.f32.mrf.mxu0
      %v1326 = vadd.f32 0.0, %v1325
      %v1327 = vpop.f32.mrf.mxu0
      %1328 = vmatprep.mubr.f32.mxu0 0.0
      %1329 = vmatmul.mubr.f32.gmra.mxu0 %v1252
      %v1330 = vpop.f32.mrf.mxu0
      %v1331 = vadd.f32 0.0, %v1330
      %v1332 = vpop.f32.mrf.mxu0
      %1333 = vmatprep.mubr.f32.mxu0 0.0
      %1334 = vmatmul.mubr.f32.gmra.mxu0 %v1253
      %v1335 = vpop.f32.mrf.mxu0
      %v1336 = vadd.f32 0.0, %v1335
      %v1337 = vpop.f32.mrf.mxu0
      %1338 = vmatprep.mubr.f32.mxu0 0.0
      %1339 = vmatmul.mubr.f32.gmra.mxu0 %v1254
      %v1340 = vpop.f32.mrf.mxu0
      %v1341 = vadd.f32 0.0, %v1340
      %v1342 = vpop.f32.mrf.mxu0
      %1343 = vmatprep.mubr.f32.mxu0 0.0
      %1344 = vmatmul.mubr.f32.gmra.mxu0 %v1255
      %v1345 = vpop.f32.mrf.mxu0
      %v1346 = vadd.f32 0.0, %v1345
      %v1347 = vpop.f32.mrf.mxu0
      %1348 = vmatprep.mubr.f32.mxu0 0.0
      %1349 = vmatmul.mubr.f32.gmra.mxu0 %v1256
      %v1350 = vpop.f32.mrf.mxu0
      %v1351 = vadd.f32 0.0, %v1350
      %v1352 = vpop.f32.mrf.mxu0
      %1353 = vmatprep.mubr.f32.mxu0 0.0
      %1354 = vmatmul.mubr.f32.gmra.mxu0 %v1257
      %v1355 = vpop.f32.mrf.mxu0
      %v1356 = vadd.f32 0.0, %v1355
      %v1357 = vpop.f32.mrf.mxu0
      %1358 = vmatprep.mubr.f32.mxu0 0.0
      %1359 = vmatmul.mubr.f32.gmra.mxu0 %v1258
      %v1360 = vpop.f32.mrf.mxu0
      %v1361 = vadd.f32 0.0, %v1360
      %v1362 = vpop.f32.mrf.mxu0
      %1363 = vdwg.mxu0
      %1364 = vst.msk [vmem:[#allocation2] sm:$0xff] %vm723, %v1326
      %1365 = vst.msk [vmem:[#allocation2 + $0x8] sm:$0xff] %vm723, %v1331
      %1366 = vst.msk [vmem:[#allocation2 + $0x10] sm:$0xff] %vm723, %v1336
      %1367 = vst.msk [vmem:[#allocation2 + $0x18] sm:$0xff] %vm723, %v1341
      %1368 = vst.msk [vmem:[#allocation2 + $0x20] sm:$0xff] %vm723, %v1346
      %1369 = vst.msk [vmem:[#allocation2 + $0x28] sm:$0xff] %vm723, %v1351
      %1370 = vst.msk [vmem:[#allocation2 + $0x30] sm:$0xff] %vm723, %v1356
      %1371 = vst.msk [vmem:[#allocation2 + $0x38] sm:$0xff] %vm723, %v1361
      %v1372 = vld [vmem:[#allocation2] ss:$16 sm:$0x3]
      %v1373 = vld [vmem:[#allocation2] ss:$16 sm:$0xc]
      %v1374 = vor.u32 %v1372, %v1373
      %1375 = vst.msk [vmem:[#allocation3] sm:$0xf] %vm735, %v1374
      %v1376 = vld [vmem:[%s737] ss:$16 sm:$0x3]
      %v1377 = vld [vmem:[%s737] ss:$16 sm:$0xc]
      %v1378 = vor.u32 %v1376, %v1377
      %1380 = vrot.lane.b32.xlu0 %v1378, 16
      %v1381 = vpop.permute.xlu0 %1380
      %1383 = vst.msk [vmem:[#allocation3] sm:$0xf] %vm745, %v1381
      %v1384 = vld [vmem:[%s747] ss:$16 sm:$0x3]
      %v1385 = vld [vmem:[%s747] ss:$16 sm:$0xc]
      %v1386 = vor.u32 %v1384, %v1385
      %1388 = vrot.lane.b32.xlu0 %v1386, 32
      %v1389 = vpop.permute.xlu0 %1388
      %1391 = vst.msk [vmem:[#allocation3] sm:$0xf] %vm755, %v1389
      %v1392 = vld [vmem:[%s757] ss:$16 sm:$0x3]
      %v1393 = vld [vmem:[%s757] ss:$16 sm:$0xc]
      %v1394 = vor.u32 %v1392, %v1393
      %1396 = vrot.lane.b32.xlu0 %v1394, 48
      %v1397 = vpop.permute.xlu0 %1396
      %1399 = vst.msk [vmem:[#allocation3] sm:$0xf] %vm765, %v1397
      %v1400 = vld [vmem:[%s767] ss:$16 sm:$0x3]
      %v1401 = vld [vmem:[%s767] ss:$16 sm:$0xc]
      %v1402 = vor.u32 %v1400, %v1401
      %1404 = vrot.lane.b32.xlu0 %v1402, 64
      %v1405 = vpop.permute.xlu0 %1404
      %1407 = vst.msk [vmem:[#allocation3] sm:$0xf] %vm775, %v1405
      %v1408 = vld [vmem:[%s777] ss:$16 sm:$0x3]
      %v1409 = vld [vmem:[%s777] ss:$16 sm:$0xc]
      %v1410 = vor.u32 %v1408, %v1409
      %1412 = vrot.lane.b32.xlu0 %v1410, 80
      %v1413 = vpop.permute.xlu0 %1412
      %1415 = vst.msk [vmem:[#allocation3] sm:$0xf] %vm785, %v1413
      %v1416 = vld [vmem:[%s787] ss:$16 sm:$0x3]
      %v1417 = vld [vmem:[%s787] ss:$16 sm:$0xc]
      %v1418 = vor.u32 %v1416, %v1417
      %1420 = vrot.lane.b32.xlu0 %v1418, 96
      %v1421 = vpop.permute.xlu0 %1420
      %1423 = vst.msk [vmem:[#allocation3] sm:$0xf] %vm795, %v1421
      %v1424 = vld [vmem:[%s797] ss:$16 sm:$0x3]
      %v1425 = vld [vmem:[%s797] ss:$16 sm:$0xc]
      %v1426 = vor.u32 %v1424, %v1425
      %1428 = vrot.lane.b32.xlu0 %v1426, 112
      %v1429 = vpop.permute.xlu0 %1428
      %1431 = vst.msk [vmem:[#allocation3] sm:$0xf] %vm805, %v1429
      %v1432 = vld [vmem:[%s807] ss:$16 sm:$0x3]
      %v1433 = vld [vmem:[%s807] ss:$16 sm:$0xc]
      %v1434 = vor.u32 %v1432, %v1433
      %1435 = vst.msk [vmem:[#allocation3 + $0x4] sm:$0xf] %vm735, %v1434
      %v1436 = vld [vmem:[%s812] ss:$16 sm:$0x3]
      %v1437 = vld [vmem:[%s812] ss:$16 sm:$0xc]
      %v1438 = vor.u32 %v1436, %v1437
      %1440 = vrot.lane.b32.xlu0 %v1438, 16
      %v1441 = vpop.permute.xlu0 %1440
      %1443 = vst.msk [vmem:[#allocation3 + $0x4] sm:$0xf] %vm745, %v1441
      %v1444 = vld [vmem:[%s821] ss:$16 sm:$0x3]
      %v1445 = vld [vmem:[%s821] ss:$16 sm:$0xc]
      %v1446 = vor.u32 %v1444, %v1445
      %1448 = vrot.lane.b32.xlu0 %v1446, 32
      %v1449 = vpop.permute.xlu0 %1448
      %1451 = vst.msk [vmem:[#allocation3 + $0x4] sm:$0xf] %vm755, %v1449
      %v1452 = vld [vmem:[%s830] ss:$16 sm:$0x3]
      %v1453 = vld [vmem:[%s830] ss:$16 sm:$0xc]
      %v1454 = vor.u32 %v1452, %v1453
      %1456 = vrot.lane.b32.xlu0 %v1454, 48
      %v1457 = vpop.permute.xlu0 %1456
      %1459 = vst.msk [vmem:[#allocation3 + $0x4] sm:$0xf] %vm765, %v1457
      %v1460 = vld [vmem:[%s839] ss:$16 sm:$0x3]
      %v1461 = vld [vmem:[%s839] ss:$16 sm:$0xc]
      %v1462 = vor.u32 %v1460, %v1461
      %1464 = vrot.lane.b32.xlu0 %v1462, 64
      %v1465 = vpop.permute.xlu0 %1464
      %1467 = vst.msk [vmem:[#allocation3 + $0x4] sm:$0xf] %vm775, %v1465
      %v1468 = vld [vmem:[%s848] ss:$16 sm:$0x3]
      %v1469 = vld [vmem:[%s848] ss:$16 sm:$0xc]
      %v1470 = vor.u32 %v1468, %v1469
      %1472 = vrot.lane.b32.xlu0 %v1470, 80
      %v1473 = vpop.permute.xlu0 %1472
      %1475 = vst.msk [vmem:[#allocation3 + $0x4] sm:$0xf] %vm785, %v1473
      %v1476 = vld [vmem:[%s857] ss:$16 sm:$0x3]
      %v1477 = vld [vmem:[%s857] ss:$16 sm:$0xc]
      %v1478 = vor.u32 %v1476, %v1477
      %1480 = vrot.lane.b32.xlu0 %v1478, 96
      %v1481 = vpop.permute.xlu0 %1480
      %1483 = vst.msk [vmem:[#allocation3 + $0x4] sm:$0xf] %vm795, %v1481
      %v1484 = vld [vmem:[%s866] ss:$16 sm:$0x3]
      %v1485 = vld [vmem:[%s866] ss:$16 sm:$0xc]
      %v1486 = vor.u32 %v1484, %v1485
      %1488 = vrot.lane.b32.xlu0 %v1486, 112
      %v1489 = vpop.permute.xlu0 %1488
      %1491 = vst.msk [vmem:[#allocation3 + $0x4] sm:$0xf] %vm805, %v1489
      %v1492 = vld [vmem:[#allocation3] sm:$0xff]
      %v1494 = vcombine.high %v1492, %v1492
      %v1496 = vpack.c.bf16 %v1492, %v1492
      %v1497 = vpack.c.bf16 %v1494, %v1494
      %s1498 = scalar_lea.vmem %s7, 24
      %v1499 = vld [vmem:[%s1498] sm:$0xf]
      %v1500 = vld [vmem:[%s1498 + $0x4] sm:$0xf]
      %v1501 = vld [vmem:[%s1498 + $0x8] sm:$0xf]
      %v1505 = vunpack.c.l.b16 %v1499
      %v1506 = vunpack.c.l.b16 %v1500
      %v1507 = vunpack.c.l.b16 %v1501
      %v1508 = vpack.c.b16 %v1506, %v1505
      %v1509 = vpack.c.b16 %v1507, %v1507
      %v1511 = vsel %vm902, %v1508, 0
      %v1514 = vsel %vm902, %v1509, 0
      %v1517 = vsel %vm909, %v1496, 0
      %v1520 = vsel %vm909, %v1497, 0
      %1522 = vmatprep.subr.bf16.mxu0 0
      %1523 = vmatpush1.bf16.msra.mxu0 0
      %1524 = vmatprep.subr.bf16.mxu0 0
      %1525 = vmatpush1.bf16.msra.mxu0 0
      %1526 = vmatprep.subr.bf16.mxu0 0
      %1527 = vmatpush1.bf16.msra.mxu0 0
      %1528 = vmatprep.subr.bf16.mxu0 0
      %1529 = vmatpush1.bf16.msra.mxu0 0
      %1530 = vmatprep.subr.bf16.mxu0 0
      %1531 = vmatpush1.bf16.msra.mxu0 0
      %1532 = vmatprep.subr.bf16.mxu0 0
      %1533 = vmatpush1.bf16.msra.mxu0 0
      %1534 = vmatprep.subr.bf16.mxu0 0
      %1535 = vmatpush1.bf16.msra.mxu0 0
      %1536 = vmatprep.subr.bf16.mxu0 %v1520
      %1537 = vmatpush1.bf16.msra.mxu0 %v1517
      %1538 = vmatprep.subr.bf16.mxu0 0
      %1539 = vmatpush2.bf16.msra.mxu0 0
      %1540 = vmatprep.subr.bf16.mxu0 0
      %1541 = vmatpush2.bf16.msra.mxu0 0
      %1542 = vmatprep.subr.bf16.mxu0 0
      %1543 = vmatpush2.bf16.msra.mxu0 0
      %1544 = vmatprep.subr.bf16.mxu0 0
      %1545 = vmatpush2.bf16.msra.mxu0 0
      %1546 = vmatprep.subr.bf16.mxu0 0
      %1547 = vmatpush2.bf16.msra.mxu0 0
      %1548 = vmatprep.subr.bf16.mxu0 0
      %1549 = vmatpush2.bf16.msra.mxu0 0
      %1550 = vmatprep.subr.bf16.mxu0 0
      %1551 = vmatpush2.bf16.msra.mxu0 0
      %1552 = vmatprep.subr.bf16.mxu0 0
      %1553 = vmatpush2.bf16.msra.mxu0 0
      %1554 = vmatprep.mubr.bf16.mxu0 0
      %1555 = vmatmul.mubr.bf16.gmra.mxu0 %v1511
      %v1556 = vpop.f32.mrf.mxu0
      %v1557 = vadd.f32 0.0, %v1556
      %v1558 = vpop.f32.mrf.mxu0
      %v1559 = vadd.f32 0.0, %v1558
      %v1560 = vpop.f32.mrf.mxu0
      %v1561 = vadd.f32 0.0, %v1560
      %v1562 = vpop.f32.mrf.mxu0
      %v1563 = vadd.f32 0.0, %v1562
      %1564 = vmatprep.mubr.bf16.mxu0 0
      %1565 = vmatmul.mubr.bf16.gmra.mxu0 %v1514
      %v1566 = vpop.f32.mrf.mxu0
      %v1567 = vadd.f32 0.0, %v1566
      %v1568 = vpop.f32.mrf.mxu0
      %v1569 = vadd.f32 0.0, %v1568
      %v1570 = vpop.f32.mrf.mxu0
      %v1571 = vpop.f32.mrf.mxu0
      %1572 = vdwg.mxu0
      %v1573 = vadd.f32 %v1022, %v1557
      %v1574 = vadd.f32 %v1024, %v1559
      %v1575 = vadd.f32 %v1026, %v1561
      %v1576 = vadd.f32 %v1028, %v1563
      %v1577 = vadd.f32 %v1032, %v1567
      %v1578 = vadd.f32 %v1034, %v1569
      %v1579 = vld [vmem:[%s8] sm:$0xff]
      %v1580 = vld [vmem:[%s8 + $0x8] sm:$0xff]
      %v1581 = vld [vmem:[%s8 + $0x10] sm:$0xff]
      %1583 = vset.pattern.permute.xlu0 0
      %1584 = vperm.xlu0 %1583, %v1579
      %v1585 = vpop.permute.xlu0 %1584
      %1588 = vset.pattern.permute.xlu0 0
      %1589 = vperm.xlu0 %1588, %v1580
      %v1590 = vpop.permute.xlu0 %1589
      %1593 = vset.pattern.permute.xlu0 0
      %1594 = vperm.xlu0 %1593, %v1581
      %v1595 = vpop.permute.xlu0 %1594
      %v1597 = vadd.f32 %v1573, %v1585
      %v1598 = vadd.f32 %v1574, %v1585
      %v1599 = vadd.f32 %v1575, %v1590
      %v1600 = vadd.f32 %v1576, %v1590
      %v1601 = vadd.f32 %v1577, %v1595
      %v1602 = vadd.f32 %v1578, %v1595
      %vm1603 = vcmp.ge.f32.partialorder %v1597, 0.0
      %vm1604 = vcmp.ge.f32.partialorder %v1598, 0.0
      %vm1605 = vcmp.ge.f32.partialorder %v1599, 0.0
      %vm1606 = vcmp.ge.f32.partialorder %v1600, 0.0
      %vm1607 = vcmp.ge.f32.partialorder %v1601, 0.0
      %vm1608 = vcmp.ge.f32.partialorder %v1602, 0.0
      %v1609 = vmul.f32 %v1597, 0.01
      %v1610 = vmul.f32 %v1598, 0.01
      %v1611 = vmul.f32 %v1599, 0.01
      %v1612 = vmul.f32 %v1600, 0.01
      %v1613 = vmul.f32 %v1601, 0.01
      %v1614 = vmul.f32 %v1602, 0.01
      %v1615 = vsel %vm1603, %v1597, %v1609
      %v1616 = vsel %vm1604, %v1598, %v1610
      %v1617 = vsel %vm1605, %v1599, %v1611
      %v1618 = vsel %vm1606, %v1600, %v1612
      %v1619 = vsel %vm1607, %v1601, %v1613
      %v1620 = vsel %vm1608, %v1602, %v1614
      %v1621 = vlaneseq
      %v1622 = vand.u32 %v1621, 127
      %v1623 = vadd.s32 %v1622, 128
      %vm1624 = vcmp.lt.s32.totalorder %v1622, 0
      %v1625 = vsub.s32 0, %v1622
      %v1626 = vsel %vm1624, %v1625, %v1622
      %v1627 = vshrl.u32 %v1626, 4
      %v1628 = vand.u32 %v1626, 15
      %v1629 = vsub.s32 0, %v1628
      %v1630 = vsel %vm1624, %v1629, %v1628
      %vm1631 = vcmp.lt.s32.totalorder %v1623, 0
      %v1632 = vsub.s32 0, %v1623
      %v1633 = vsel %vm1631, %v1632, %v1623
      %v1634 = vshrl.u32 %v1633, 4
      %v1635 = vand.u32 %v1633, 15
      %v1636 = vsub.s32 0, %v1635
      %v1637 = vsel %vm1631, %v1636, %v1635
      %vm1638 = vcmp.ne.s32.totalorder %v1630, 0
      %vm1639 = vcmp.ne.s32.totalorder %v1637, 0
      %vm1640 = vcmp.lt.s32.totalorder %v1630, 0
      %vm1641 = vcmp.lt.s32.totalorder %v1637, 0
      %vm1642 = vmand %vm1640, %vm1638
      %vm1643 = vmand %vm1641, %vm1639
      %v1644 = vadd.s32 %v1630, 16
      %v1645 = vadd.s32 %v1637, 16
      %v1646 = vsel %vm1642, %v1644, %v1630
      %v1647 = vsel %vm1643, %v1645, %v1637
      %vm1648 = vcmp.ge.s32.totalorder %v1622, 16
      %vm1649 = vcmp.ge.s32.totalorder %v1623, 16
      %v1650 = vsel %vm1648, 1, 0
      %v1651 = vsel %vm1649, 1, 0
      %v1652 = vcvt.s32.f32 %v1650
      %v1653 = vcvt.s32.f32 %v1651
      %vm1654 = vcmp.lt.s32.totalorder %v1622, 240
      %vm1655 = vcmp.lt.s32.totalorder %v1623, 240
      %v1656 = vsel %vm1654, 1, 0
      %v1657 = vsel %vm1655, 1, 0
      %v1658 = vcvt.s32.f32 %v1656
      %v1659 = vcvt.s32.f32 %v1657
      %vm1660 = vcmp.ge.s32.totalorder %v1646, 1
      %vm1661 = vcmp.ge.s32.totalorder %v1647, 1
      %v1662 = vsel %vm1660, 1, 0
      %v1663 = vsel %vm1661, 1, 0
      %v1664 = vcvt.s32.f32 %v1662
      %v1665 = vcvt.s32.f32 %v1663
      %vm1666 = vcmp.le.s32.totalorder %v1646, 14
      %vm1667 = vcmp.le.s32.totalorder %v1647, 14
      %v1668 = vsel %vm1666, 1, 0
      %v1669 = vsel %vm1667, 1, 0
      %v1670 = vcvt.s32.f32 %v1668
      %v1671 = vcvt.s32.f32 %v1669
      %1672 = vrot.lane.b32.xlu0 %v1615, 17
      %v1673 = vpop.permute.xlu0 %1672
      %1674 = vrot.lane.b32.xlu0 %v1617, 17
      %v1675 = vpop.permute.xlu0 %1674
      %1676 = vrot.lane.b32.xlu0 %v1619, 17
      %v1677 = vpop.permute.xlu0 %1676
      %1678 = vrot.lane.b32.xlu0 %v1616, 17
      %v1679 = vpop.permute.xlu0 %1678
      %1680 = vrot.lane.b32.xlu0 %v1618, 17
      %v1681 = vpop.permute.xlu0 %1680
      %1682 = vrot.lane.b32.xlu0 %v1620, 17
      %v1683 = vpop.permute.xlu0 %1682
      %vm1684 = vcmp.lt.s32.totalorder %v1622, 17
      %v1685 = vsel %vm1684, %v1673, %v1679
      %v1686 = vsel %vm1684, %v1675, %v1681
      %v1687 = vsel %vm1684, %v1677, %v1683
      %v1688 = vsel %vm1684, %v1679, %v1673
      %v1689 = vsel %vm1684, %v1681, %v1675
      %v1690 = vsel %vm1684, %v1683, %v1677
      %v1691 = vmul.f32 %v1652, %v1664
      %v1692 = vmul.f32 %v1653, %v1665
      %v1693 = vmul.f32 %v1688, %v1691
      %v1694 = vmul.f32 %v1685, %v1692
      %v1695 = vmul.f32 %v1689, %v1691
      %v1696 = vmul.f32 %v1686, %v1692
      %v1697 = vmul.f32 %v1690, %v1691
      %v1698 = vmul.f32 %v1687, %v1692
      %v1699 = vld [vmem:[%s9] sm:$0xf]
      %v1700 = vld [vmem:[%s9 + $0x4] sm:$0xf]
      %v1701 = vld [vmem:[%s9 + $0x8] sm:$0xf]
      %v1702 = vpack.c.bf16 %v1695, %v1693
      %v1703 = vpack.c.bf16 %v1696, %v1694
      %v1704 = vpack.c.bf16 %v1697, %v1697
      %v1705 = vpack.c.bf16 %v1698, %v1698
      %1706 = vrot.lane.b32.xlu0 %v1615, 16
      %v1707 = vpop.permute.xlu0 %1706
      %1708 = vrot.lane.b32.xlu0 %v1617, 16
      %v1709 = vpop.permute.xlu0 %1708
      %1710 = vrot.lane.b32.xlu0 %v1619, 16
      %v1711 = vpop.permute.xlu0 %1710
      %1712 = vrot.lane.b32.xlu0 %v1616, 16
      %v1713 = vpop.permute.xlu0 %1712
      %1714 = vrot.lane.b32.xlu0 %v1618, 16
      %v1715 = vpop.permute.xlu0 %1714
      %1716 = vrot.lane.b32.xlu0 %v1620, 16
      %v1717 = vpop.permute.xlu0 %1716
      %vm1718 = vcmp.lt.s32.totalorder %v1622, 16
      %v1719 = vsel %vm1718, %v1707, %v1713
      %v1720 = vsel %vm1718, %v1709, %v1715
      %v1721 = vsel %vm1718, %v1711, %v1717
      %v1722 = vsel %vm1718, %v1713, %v1707
      %v1723 = vsel %vm1718, %v1715, %v1709
      %v1724 = vsel %vm1718, %v1717, %v1711
      %v1725 = vmul.f32 %v1722, %v1652
      %v1726 = vmul.f32 %v1719, %v1653
      %v1727 = vmul.f32 %v1723, %v1652
      %v1728 = vmul.f32 %v1720, %v1653
      %v1729 = vmul.f32 %v1724, %v1652
      %v1730 = vmul.f32 %v1721, %v1653
      %s1731 = scalar_lea.vmem %s9, 12
      %v1732 = vld [vmem:[%s1731] sm:$0xf]
      %v1733 = vld [vmem:[%s1731 + $0x4] sm:$0xf]
      %v1734 = vld [vmem:[%s1731 + $0x8] sm:$0xf]
      %v1735 = vpack.c.bf16 %v1727, %v1725
      %v1736 = vpack.c.bf16 %v1728, %v1726
      %v1737 = vpack.c.bf16 %v1729, %v1729
      %v1738 = vpack.c.bf16 %v1730, %v1730
      %v1742 = vunpack.c.l.b16 %v1732
      %v1743 = vunpack.c.l.b16 %v1733
      %v1744 = vunpack.c.l.b16 %v1734
      %v1745 = vpack.c.b16 %v1743, %v1742
      %v1746 = vpack.c.b16 %v1744, %v1744
      %vm1747 = vcmask 195584
      %v1749 = vsel %vm1747, %v1745, 0
      %v1752 = vsel %vm1747, %v1746, 0
      %vm1754 = vcmask 1043456
      %v1756 = vsel %vm1754, %v1737, 0
      %v1759 = vsel %vm1754, %v1738, 0
      %1761 = vmatprep.subr.bf16.mxu0 0
      %1762 = vmatpush1.bf16.msra.mxu0 0
      %1763 = vmatprep.subr.bf16.mxu0 0
      %1764 = vmatpush1.bf16.msra.mxu0 0
      %1765 = vmatprep.subr.bf16.mxu0 0
      %1766 = vmatpush1.bf16.msra.mxu0 0
      %1767 = vmatprep.subr.bf16.mxu0 0
      %1768 = vmatpush1.bf16.msra.mxu0 0
      %1769 = vmatprep.subr.bf16.mxu0 0
      %1770 = vmatpush1.bf16.msra.mxu0 0
      %1771 = vmatprep.subr.bf16.mxu0 0
      %1772 = vmatpush1.bf16.msra.mxu0 0
      %1773 = vmatprep.subr.bf16.mxu0 %v1759
      %1774 = vmatpush1.bf16.msra.mxu0 %v1756
      %1775 = vmatprep.subr.bf16.mxu0 %v1736
      %1776 = vmatpush1.bf16.msra.mxu0 %v1735
      %1777 = vmatprep.subr.bf16.mxu0 0
      %1778 = vmatpush2.bf16.msra.mxu0 0
      %1779 = vmatprep.subr.bf16.mxu0 0
      %1780 = vmatpush2.bf16.msra.mxu0 0
      %1781 = vmatprep.subr.bf16.mxu0 0
      %1782 = vmatpush2.bf16.msra.mxu0 0
      %1783 = vmatprep.subr.bf16.mxu0 0
      %1784 = vmatpush2.bf16.msra.mxu0 0
      %1785 = vmatprep.subr.bf16.mxu0 0
      %1786 = vmatpush2.bf16.msra.mxu0 0
      %1787 = vmatprep.subr.bf16.mxu0 0
      %1788 = vmatpush2.bf16.msra.mxu0 0
      %1789 = vmatprep.subr.bf16.mxu0 0
      %1790 = vmatpush2.bf16.msra.mxu0 0
      %1791 = vmatprep.subr.bf16.mxu0 0
      %1792 = vmatpush2.bf16.msra.mxu0 0
      %1793 = vmatprep.mubr.bf16.mxu0 0
      %1794 = vmatmul.mubr.bf16.gmra.mxu0 %v1749
      %v1795 = vpop.f32.mrf.mxu0
      %v1796 = vadd.f32 0.0, %v1795
      %v1797 = vpop.f32.mrf.mxu0
      %v1798 = vadd.f32 0.0, %v1797
      %v1799 = vpop.f32.mrf.mxu0
      %v1800 = vadd.f32 0.0, %v1799
      %v1801 = vpop.f32.mrf.mxu0
      %v1802 = vadd.f32 0.0, %v1801
      %1803 = vmatprep.mubr.bf16.mxu0 0
      %1804 = vmatmul.mubr.bf16.gmra.mxu0 %v1752
      %v1805 = vpop.f32.mrf.mxu0
      %v1806 = vadd.f32 0.0, %v1805
      %v1807 = vpop.f32.mrf.mxu0
      %v1808 = vadd.f32 0.0, %v1807
      %v1809 = vpop.f32.mrf.mxu0
      %v1810 = vpop.f32.mrf.mxu0
      %1811 = vdwg.mxu0
      %v1815 = vunpack.c.l.b16 %v1699
      %v1816 = vunpack.c.l.b16 %v1700
      %v1817 = vunpack.c.l.b16 %v1701
      %v1818 = vpack.c.b16 %v1816, %v1815
      %v1819 = vpack.c.b16 %v1817, %v1817
      %v1821 = vsel %vm1747, %v1818, 0
      %v1824 = vsel %vm1747, %v1819, 0
      %v1827 = vsel %vm1754, %v1704, 0
      %v1830 = vsel %vm1754, %v1705, 0
      %1832 = vmatprep.subr.bf16.mxu0 0
      %1833 = vmatpush1.bf16.msra.mxu0 0
      %1834 = vmatprep.subr.bf16.mxu0 0
      %1835 = vmatpush1.bf16.msra.mxu0 0
      %1836 = vmatprep.subr.bf16.mxu0 0
      %1837 = vmatpush1.bf16.msra.mxu0 0
      %1838 = vmatprep.subr.bf16.mxu0 0
      %1839 = vmatpush1.bf16.msra.mxu0 0
      %1840 = vmatprep.subr.bf16.mxu0 0
      %1841 = vmatpush1.bf16.msra.mxu0 0
      %1842 = vmatprep.subr.bf16.mxu0 0
      %1843 = vmatpush1.bf16.msra.mxu0 0
      %1844 = vmatprep.subr.bf16.mxu0 %v1830
      %1845 = vmatpush1.bf16.msra.mxu0 %v1827
      %1846 = vmatprep.subr.bf16.mxu0 %v1703
      %1847 = vmatpush1.bf16.msra.mxu0 %v1702
      %1848 = vmatprep.subr.bf16.mxu0 0
      %1849 = vmatpush2.bf16.msra.mxu0 0
      %1850 = vmatprep.subr.bf16.mxu0 0
      %1851 = vmatpush2.bf16.msra.mxu0 0
      %1852 = vmatprep.subr.bf16.mxu0 0
      %1853 = vmatpush2.bf16.msra.mxu0 0
      %1854 = vmatprep.subr.bf16.mxu0 0
      %1855 = vmatpush2.bf16.msra.mxu0 0
      %1856 = vmatprep.subr.bf16.mxu0 0
      %1857 = vmatpush2.bf16.msra.mxu0 0
      %1858 = vmatprep.subr.bf16.mxu0 0
      %1859 = vmatpush2.bf16.msra.mxu0 0
      %1860 = vmatprep.subr.bf16.mxu0 0
      %1861 = vmatpush2.bf16.msra.mxu0 0
      %1862 = vmatprep.subr.bf16.mxu0 0
      %1863 = vmatpush2.bf16.msra.mxu0 0
      %1864 = vmatprep.mubr.bf16.mxu0 0
      %1865 = vmatmul.mubr.bf16.gmra.mxu0 %v1821
      %v1866 = vpop.f32.mrf.mxu0
      %v1867 = vadd.f32 %v1796, %v1866
      %v1868 = vpop.f32.mrf.mxu0
      %v1869 = vadd.f32 %v1798, %v1868
      %v1870 = vpop.f32.mrf.mxu0
      %v1871 = vadd.f32 %v1800, %v1870
      %v1872 = vpop.f32.mrf.mxu0
      %v1873 = vadd.f32 %v1802, %v1872
      %1874 = vmatprep.mubr.bf16.mxu0 0
      %1875 = vmatmul.mubr.bf16.gmra.mxu0 %v1824
      %v1876 = vpop.f32.mrf.mxu0
      %v1877 = vadd.f32 %v1806, %v1876
      %v1878 = vpop.f32.mrf.mxu0
      %v1879 = vadd.f32 %v1808, %v1878
      %v1880 = vpop.f32.mrf.mxu0
      %v1881 = vpop.f32.mrf.mxu0
      %1882 = vdwg.mxu0
      %1883 = vrot.lane.b32.xlu0 %v1615, 15
      %v1884 = vpop.permute.xlu0 %1883
      %1885 = vrot.lane.b32.xlu0 %v1617, 15
      %v1886 = vpop.permute.xlu0 %1885
      %1887 = vrot.lane.b32.xlu0 %v1619, 15
      %v1888 = vpop.permute.xlu0 %1887
      %1889 = vrot.lane.b32.xlu0 %v1616, 15
      %v1890 = vpop.permute.xlu0 %1889
      %1891 = vrot.lane.b32.xlu0 %v1618, 15
      %v1892 = vpop.permute.xlu0 %1891
      %1893 = vrot.lane.b32.xlu0 %v1620, 15
      %v1894 = vpop.permute.xlu0 %1893
      %vm1895 = vcmp.lt.s32.totalorder %v1622, 15
      %v1896 = vsel %vm1895, %v1884, %v1890
      %v1897 = vsel %vm1895, %v1886, %v1892
      %v1898 = vsel %vm1895, %v1888, %v1894
      %v1899 = vsel %vm1895, %v1890, %v1884
      %v1900 = vsel %vm1895, %v1892, %v1886
      %v1901 = vsel %vm1895, %v1894, %v1888
      %v1902 = vmul.f32 %v1652, %v1670
      %v1903 = vmul.f32 %v1653, %v1671
      %v1904 = vmul.f32 %v1899, %v1902
      %v1905 = vmul.f32 %v1896, %v1903
      %v1906 = vmul.f32 %v1900, %v1902
      %v1907 = vmul.f32 %v1897, %v1903
      %v1908 = vmul.f32 %v1901, %v1902
      %v1909 = vmul.f32 %v1898, %v1903
      %s1910 = scalar_lea.vmem %s9, 24
      %v1911 = vld [vmem:[%s1910] sm:$0xf]
      %v1912 = vld [vmem:[%s1910 + $0x4] sm:$0xf]
      %v1913 = vld [vmem:[%s1910 + $0x8] sm:$0xf]
      %v1914 = vpack.c.bf16 %v1906, %v1904
      %v1915 = vpack.c.bf16 %v1907, %v1905
      %v1916 = vpack.c.bf16 %v1908, %v1908
      %v1917 = vpack.c.bf16 %v1909, %v1909
      %v1921 = vunpack.c.l.b16 %v1911
      %v1922 = vunpack.c.l.b16 %v1912
      %v1923 = vunpack.c.l.b16 %v1913
      %v1924 = vpack.c.b16 %v1922, %v1921
      %v1925 = vpack.c.b16 %v1923, %v1923
      %v1927 = vsel %vm1747, %v1924, 0
      %v1930 = vsel %vm1747, %v1925, 0
      %v1933 = vsel %vm1754, %v1916, 0
      %v1936 = vsel %vm1754, %v1917, 0
      %1938 = vmatprep.subr.bf16.mxu0 0
      %1939 = vmatpush1.bf16.msra.mxu0 0
      %1940 = vmatprep.subr.bf16.mxu0 0
      %1941 = vmatpush1.bf16.msra.mxu0 0
      %1942 = vmatprep.subr.bf16.mxu0 0
      %1943 = vmatpush1.bf16.msra.mxu0 0
      %1944 = vmatprep.subr.bf16.mxu0 0
      %1945 = vmatpush1.bf16.msra.mxu0 0
      %1946 = vmatprep.subr.bf16.mxu0 0
      %1947 = vmatpush1.bf16.msra.mxu0 0
      %1948 = vmatprep.subr.bf16.mxu0 0
      %1949 = vmatpush1.bf16.msra.mxu0 0
      %1950 = vmatprep.subr.bf16.mxu0 %v1936
      %1951 = vmatpush1.bf16.msra.mxu0 %v1933
      %1952 = vmatprep.subr.bf16.mxu0 %v1915
      %1953 = vmatpush1.bf16.msra.mxu0 %v1914
      %1954 = vmatprep.subr.bf16.mxu0 0
      %1955 = vmatpush2.bf16.msra.mxu0 0
      %1956 = vmatprep.subr.bf16.mxu0 0
      %1957 = vmatpush2.bf16.msra.mxu0 0
      %1958 = vmatprep.subr.bf16.mxu0 0
      %1959 = vmatpush2.bf16.msra.mxu0 0
      %1960 = vmatprep.subr.bf16.mxu0 0
      %1961 = vmatpush2.bf16.msra.mxu0 0
      %1962 = vmatprep.subr.bf16.mxu0 0
      %1963 = vmatpush2.bf16.msra.mxu0 0
      %1964 = vmatprep.subr.bf16.mxu0 0
      %1965 = vmatpush2.bf16.msra.mxu0 0
      %1966 = vmatprep.subr.bf16.mxu0 0
      %1967 = vmatpush2.bf16.msra.mxu0 0
      %1968 = vmatprep.subr.bf16.mxu0 0
      %1969 = vmatpush2.bf16.msra.mxu0 0
      %1970 = vmatprep.mubr.bf16.mxu0 0
      %1971 = vmatmul.mubr.bf16.gmra.mxu0 %v1927
      %v1972 = vpop.f32.mrf.mxu0
      %v1973 = vadd.f32 0.0, %v1972
      %v1974 = vpop.f32.mrf.mxu0
      %v1975 = vadd.f32 0.0, %v1974
      %v1976 = vpop.f32.mrf.mxu0
      %v1977 = vadd.f32 0.0, %v1976
      %v1978 = vpop.f32.mrf.mxu0
      %v1979 = vadd.f32 0.0, %v1978
      %1980 = vmatprep.mubr.bf16.mxu0 0
      %1981 = vmatmul.mubr.bf16.gmra.mxu0 %v1930
      %v1982 = vpop.f32.mrf.mxu0
      %v1983 = vadd.f32 0.0, %v1982
      %v1984 = vpop.f32.mrf.mxu0
      %v1985 = vadd.f32 0.0, %v1984
      %v1986 = vpop.f32.mrf.mxu0
      %v1987 = vpop.f32.mrf.mxu0
      %1988 = vdwg.mxu0
      %v1989 = vadd.f32 %v1867, %v1973
      %v1990 = vadd.f32 %v1869, %v1975
      %v1991 = vadd.f32 %v1871, %v1977
      %v1992 = vadd.f32 %v1873, %v1979
      %v1993 = vadd.f32 %v1877, %v1983
      %v1994 = vadd.f32 %v1879, %v1985
      %1995 = vrot.lane.b32.xlu0 %v1615, 1
      %v1996 = vpop.permute.xlu0 %1995
      %1997 = vrot.lane.b32.xlu0 %v1617, 1
      %v1998 = vpop.permute.xlu0 %1997
      %1999 = vrot.lane.b32.xlu0 %v1619, 1
      %v2000 = vpop.permute.xlu0 %1999
      %2001 = vrot.lane.b32.xlu0 %v1616, 1
      %v2002 = vpop.permute.xlu0 %2001
      %2003 = vrot.lane.b32.xlu0 %v1618, 1
      %v2004 = vpop.permute.xlu0 %2003
      %2005 = vrot.lane.b32.xlu0 %v1620, 1
      %v2006 = vpop.permute.xlu0 %2005
      %vm2007 = vcmp.lt.s32.totalorder %v1622, 1
      %v2008 = vsel %vm2007, %v1996, %v2002
      %v2009 = vsel %vm2007, %v1998, %v2004
      %v2010 = vsel %vm2007, %v2000, %v2006
      %v2011 = vsel %vm2007, %v2002, %v1996
      %v2012 = vsel %vm2007, %v2004, %v1998
      %v2013 = vsel %vm2007, %v2006, %v2000
      %v2014 = vmul.f32 %v2011, %v1664
      %v2015 = vmul.f32 %v2008, %v1665
      %v2016 = vmul.f32 %v2012, %v1664
      %v2017 = vmul.f32 %v2009, %v1665
      %v2018 = vmul.f32 %v2013, %v1664
      %v2019 = vmul.f32 %v2010, %v1665
      %s2020 = scalar_lea.vmem %s9, 36
      %v2021 = vld [vmem:[%s2020] sm:$0xf]
      %v2022 = vld [vmem:[%s2020 + $0x4] sm:$0xf]
      %v2023 = vld [vmem:[%s2020 + $0x8] sm:$0xf]
      %v2024 = vpack.c.bf16 %v2016, %v2014
      %v2025 = vpack.c.bf16 %v2017, %v2015
      %v2026 = vpack.c.bf16 %v2018, %v2018
      %v2027 = vpack.c.bf16 %v2019, %v2019
      %v2031 = vunpack.c.l.b16 %v2021
      %v2032 = vunpack.c.l.b16 %v2022
      %v2033 = vunpack.c.l.b16 %v2023
      %v2034 = vpack.c.b16 %v2032, %v2031
      %v2035 = vpack.c.b16 %v2033, %v2033
      %v2037 = vsel %vm1747, %v2034, 0
      %v2040 = vsel %vm1747, %v2035, 0
      %v2043 = vsel %vm1754, %v2026, 0
      %v2046 = vsel %vm1754, %v2027, 0
      %2048 = vmatprep.subr.bf16.mxu0 0
      %2049 = vmatpush1.bf16.msra.mxu0 0
      %2050 = vmatprep.subr.bf16.mxu0 0
      %2051 = vmatpush1.bf16.msra.mxu0 0
      %2052 = vmatprep.subr.bf16.mxu0 0
      %2053 = vmatpush1.bf16.msra.mxu0 0
      %2054 = vmatprep.subr.bf16.mxu0 0
      %2055 = vmatpush1.bf16.msra.mxu0 0
      %2056 = vmatprep.subr.bf16.mxu0 0
      %2057 = vmatpush1.bf16.msra.mxu0 0
      %2058 = vmatprep.subr.bf16.mxu0 0
      %2059 = vmatpush1.bf16.msra.mxu0 0
      %2060 = vmatprep.subr.bf16.mxu0 %v2046
      %2061 = vmatpush1.bf16.msra.mxu0 %v2043
      %2062 = vmatprep.subr.bf16.mxu0 %v2025
      %2063 = vmatpush1.bf16.msra.mxu0 %v2024
      %2064 = vmatprep.subr.bf16.mxu0 0
      %2065 = vmatpush2.bf16.msra.mxu0 0
      %2066 = vmatprep.subr.bf16.mxu0 0
      %2067 = vmatpush2.bf16.msra.mxu0 0
      %2068 = vmatprep.subr.bf16.mxu0 0
      %2069 = vmatpush2.bf16.msra.mxu0 0
      %2070 = vmatprep.subr.bf16.mxu0 0
      %2071 = vmatpush2.bf16.msra.mxu0 0
      %2072 = vmatprep.subr.bf16.mxu0 0
      %2073 = vmatpush2.bf16.msra.mxu0 0
      %2074 = vmatprep.subr.bf16.mxu0 0
      %2075 = vmatpush2.bf16.msra.mxu0 0
      %2076 = vmatprep.subr.bf16.mxu0 0
      %2077 = vmatpush2.bf16.msra.mxu0 0
      %2078 = vmatprep.subr.bf16.mxu0 0
      %2079 = vmatpush2.bf16.msra.mxu0 0
      %2080 = vmatprep.mubr.bf16.mxu0 0
      %2081 = vmatmul.mubr.bf16.gmra.mxu0 %v2037
      %v2082 = vpop.f32.mrf.mxu0
      %v2083 = vadd.f32 0.0, %v2082
      %v2084 = vpop.f32.mrf.mxu0
      %v2085 = vadd.f32 0.0, %v2084
      %v2086 = vpop.f32.mrf.mxu0
      %v2087 = vadd.f32 0.0, %v2086
      %v2088 = vpop.f32.mrf.mxu0
      %v2089 = vadd.f32 0.0, %v2088
      %2090 = vmatprep.mubr.bf16.mxu0 0
      %2091 = vmatmul.mubr.bf16.gmra.mxu0 %v2040
      %v2092 = vpop.f32.mrf.mxu0
      %v2093 = vadd.f32 0.0, %v2092
      %v2094 = vpop.f32.mrf.mxu0
      %v2095 = vadd.f32 0.0, %v2094
      %v2096 = vpop.f32.mrf.mxu0
      %v2097 = vpop.f32.mrf.mxu0
      %2098 = vdwg.mxu0
      %v2099 = vadd.f32 %v1989, %v2083
      %v2100 = vadd.f32 %v1990, %v2085
      %v2101 = vadd.f32 %v1991, %v2087
      %v2102 = vadd.f32 %v1992, %v2089
      %v2103 = vadd.f32 %v1993, %v2093
      %v2104 = vadd.f32 %v1994, %v2095
      %s2105 = scalar_lea.vmem %s9, 48
      %v2106 = vld [vmem:[%s2105] sm:$0xf]
      %v2107 = vld [vmem:[%s2105 + $0x4] sm:$0xf]
      %v2108 = vld [vmem:[%s2105 + $0x8] sm:$0xf]
      %v2109 = vpack.c.bf16 %v1617, %v1615
      %v2110 = vpack.c.bf16 %v1618, %v1616
      %v2111 = vpack.c.bf16 %v1619, %v1619
      %v2112 = vpack.c.bf16 %v1620, %v1620
      %v2116 = vunpack.c.l.b16 %v2106
      %v2117 = vunpack.c.l.b16 %v2107
      %v2118 = vunpack.c.l.b16 %v2108
      %v2119 = vpack.c.b16 %v2117, %v2116
      %v2120 = vpack.c.b16 %v2118, %v2118
      %v2122 = vsel %vm1747, %v2119, 0
      %v2125 = vsel %vm1747, %v2120, 0
      %v2128 = vsel %vm1754, %v2111, 0
      %v2131 = vsel %vm1754, %v2112, 0
      %2133 = vmatprep.subr.bf16.mxu0 0
      %2134 = vmatpush1.bf16.msra.mxu0 0
      %2135 = vmatprep.subr.bf16.mxu0 0
      %2136 = vmatpush1.bf16.msra.mxu0 0
      %2137 = vmatprep.subr.bf16.mxu0 0
      %2138 = vmatpush1.bf16.msra.mxu0 0
      %2139 = vmatprep.subr.bf16.mxu0 0
      %2140 = vmatpush1.bf16.msra.mxu0 0
      %2141 = vmatprep.subr.bf16.mxu0 0
      %2142 = vmatpush1.bf16.msra.mxu0 0
      %2143 = vmatprep.subr.bf16.mxu0 0
      %2144 = vmatpush1.bf16.msra.mxu0 0
      %2145 = vmatprep.subr.bf16.mxu0 %v2131
      %2146 = vmatpush1.bf16.msra.mxu0 %v2128
      %2147 = vmatprep.subr.bf16.mxu0 %v2110
      %2148 = vmatpush1.bf16.msra.mxu0 %v2109
      %2149 = vmatprep.subr.bf16.mxu0 0
      %2150 = vmatpush2.bf16.msra.mxu0 0
      %2151 = vmatprep.subr.bf16.mxu0 0
      %2152 = vmatpush2.bf16.msra.mxu0 0
      %2153 = vmatprep.subr.bf16.mxu0 0
      %2154 = vmatpush2.bf16.msra.mxu0 0
      %2155 = vmatprep.subr.bf16.mxu0 0
      %2156 = vmatpush2.bf16.msra.mxu0 0
      %2157 = vmatprep.subr.bf16.mxu0 0
      %2158 = vmatpush2.bf16.msra.mxu0 0
      %2159 = vmatprep.subr.bf16.mxu0 0
      %2160 = vmatpush2.bf16.msra.mxu0 0
      %2161 = vmatprep.subr.bf16.mxu0 0
      %2162 = vmatpush2.bf16.msra.mxu0 0
      %2163 = vmatprep.subr.bf16.mxu0 0
      %2164 = vmatpush2.bf16.msra.mxu0 0
      %2165 = vmatprep.mubr.bf16.mxu0 0
      %2166 = vmatmul.mubr.bf16.gmra.mxu0 %v2122
      %v2167 = vpop.f32.mrf.mxu0
      %v2168 = vadd.f32 0.0, %v2167
      %v2169 = vpop.f32.mrf.mxu0
      %v2170 = vadd.f32 0.0, %v2169
      %v2171 = vpop.f32.mrf.mxu0
      %v2172 = vadd.f32 0.0, %v2171
      %v2173 = vpop.f32.mrf.mxu0
      %v2174 = vadd.f32 0.0, %v2173
      %2175 = vmatprep.mubr.bf16.mxu0 0
      %2176 = vmatmul.mubr.bf16.gmra.mxu0 %v2125
      %v2177 = vpop.f32.mrf.mxu0
      %v2178 = vadd.f32 0.0, %v2177
      %v2179 = vpop.f32.mrf.mxu0
      %v2180 = vadd.f32 0.0, %v2179
      %v2181 = vpop.f32.mrf.mxu0
      %v2182 = vpop.f32.mrf.mxu0
      %2183 = vdwg.mxu0
      %v2184 = vadd.f32 %v2099, %v2168
      %v2185 = vadd.f32 %v2100, %v2170
      %v2186 = vadd.f32 %v2101, %v2172
      %v2187 = vadd.f32 %v2102, %v2174
      %v2188 = vadd.f32 %v2103, %v2178
      %v2189 = vadd.f32 %v2104, %v2180
      %2190 = vrot.lane.b32.xlu0 %v1615, 127
      %v2191 = vpop.permute.xlu0 %2190
      %2192 = vrot.lane.b32.xlu0 %v1617, 127
      %v2193 = vpop.permute.xlu0 %2192
      %2194 = vrot.lane.b32.xlu0 %v1619, 127
      %v2195 = vpop.permute.xlu0 %2194
      %2196 = vrot.lane.b32.xlu0 %v1616, 127
      %v2197 = vpop.permute.xlu0 %2196
      %2198 = vrot.lane.b32.xlu0 %v1618, 127
      %v2199 = vpop.permute.xlu0 %2198
      %2200 = vrot.lane.b32.xlu0 %v1620, 127
      %v2201 = vpop.permute.xlu0 %2200
      %vm2202 = vcmp.lt.s32.totalorder %v1622, 127
      %v2203 = vsel %vm2202, %v2191, %v2197
      %v2204 = vsel %vm2202, %v2193, %v2199
      %v2205 = vsel %vm2202, %v2195, %v2201
      %v2206 = vsel %vm2202, %v2197, %v2191
      %v2207 = vsel %vm2202, %v2199, %v2193
      %v2208 = vsel %vm2202, %v2201, %v2195
      %v2209 = vmul.f32 %v2203, %v1670
      %v2210 = vmul.f32 %v2206, %v1671
      %v2211 = vmul.f32 %v2204, %v1670
      %v2212 = vmul.f32 %v2207, %v1671
      %v2213 = vmul.f32 %v2205, %v1670
      %v2214 = vmul.f32 %v2208, %v1671
      %s2215 = scalar_lea.vmem %s9, 60
      %v2216 = vld [vmem:[%s2215] sm:$0xf]
      %v2217 = vld [vmem:[%s2215 + $0x4] sm:$0xf]
      %v2218 = vld [vmem:[%s2215 + $0x8] sm:$0xf]
      %v2219 = vpack.c.bf16 %v2211, %v2209
      %v2220 = vpack.c.bf16 %v2212, %v2210
      %v2221 = vpack.c.bf16 %v2213, %v2213
      %v2222 = vpack.c.bf16 %v2214, %v2214
      %v2226 = vunpack.c.l.b16 %v2216
      %v2227 = vunpack.c.l.b16 %v2217
      %v2228 = vunpack.c.l.b16 %v2218
      %v2229 = vpack.c.b16 %v2227, %v2226
      %v2230 = vpack.c.b16 %v2228, %v2228
      %v2232 = vsel %vm1747, %v2229, 0
      %v2235 = vsel %vm1747, %v2230, 0
      %v2238 = vsel %vm1754, %v2221, 0
      %v2241 = vsel %vm1754, %v2222, 0
      %2243 = vmatprep.subr.bf16.mxu0 0
      %2244 = vmatpush1.bf16.msra.mxu0 0
      %2245 = vmatprep.subr.bf16.mxu0 0
      %2246 = vmatpush1.bf16.msra.mxu0 0
      %2247 = vmatprep.subr.bf16.mxu0 0
      %2248 = vmatpush1.bf16.msra.mxu0 0
      %2249 = vmatprep.subr.bf16.mxu0 0
      %2250 = vmatpush1.bf16.msra.mxu0 0
      %2251 = vmatprep.subr.bf16.mxu0 0
      %2252 = vmatpush1.bf16.msra.mxu0 0
      %2253 = vmatprep.subr.bf16.mxu0 0
      %2254 = vmatpush1.bf16.msra.mxu0 0
      %2255 = vmatprep.subr.bf16.mxu0 %v2241
      %2256 = vmatpush1.bf16.msra.mxu0 %v2238
      %2257 = vmatprep.subr.bf16.mxu0 %v2220
      %2258 = vmatpush1.bf16.msra.mxu0 %v2219
      %2259 = vmatprep.subr.bf16.mxu0 0
      %2260 = vmatpush2.bf16.msra.mxu0 0
      %2261 = vmatprep.subr.bf16.mxu0 0
      %2262 = vmatpush2.bf16.msra.mxu0 0
      %2263 = vmatprep.subr.bf16.mxu0 0
      %2264 = vmatpush2.bf16.msra.mxu0 0
      %2265 = vmatprep.subr.bf16.mxu0 0
      %2266 = vmatpush2.bf16.msra.mxu0 0
      %2267 = vmatprep.subr.bf16.mxu0 0
      %2268 = vmatpush2.bf16.msra.mxu0 0
      %2269 = vmatprep.subr.bf16.mxu0 0
      %2270 = vmatpush2.bf16.msra.mxu0 0
      %2271 = vmatprep.subr.bf16.mxu0 0
      %2272 = vmatpush2.bf16.msra.mxu0 0
      %2273 = vmatprep.subr.bf16.mxu0 0
      %2274 = vmatpush2.bf16.msra.mxu0 0
      %2275 = vmatprep.mubr.bf16.mxu0 0
      %2276 = vmatmul.mubr.bf16.gmra.mxu0 %v2232
      %v2277 = vpop.f32.mrf.mxu0
      %v2278 = vadd.f32 0.0, %v2277
      %v2279 = vpop.f32.mrf.mxu0
      %v2280 = vadd.f32 0.0, %v2279
      %v2281 = vpop.f32.mrf.mxu0
      %v2282 = vadd.f32 0.0, %v2281
      %v2283 = vpop.f32.mrf.mxu0
      %v2284 = vadd.f32 0.0, %v2283
      %2285 = vmatprep.mubr.bf16.mxu0 0
      %2286 = vmatmul.mubr.bf16.gmra.mxu0 %v2235
      %v2287 = vpop.f32.mrf.mxu0
      %v2288 = vadd.f32 0.0, %v2287
      %v2289 = vpop.f32.mrf.mxu0
      %v2290 = vadd.f32 0.0, %v2289
      %v2291 = vpop.f32.mrf.mxu0
      %v2292 = vpop.f32.mrf.mxu0
      %2293 = vdwg.mxu0
      %v2294 = vadd.f32 %v2184, %v2278
      %v2295 = vadd.f32 %v2185, %v2280
      %v2296 = vadd.f32 %v2186, %v2282
      %v2297 = vadd.f32 %v2187, %v2284
      %v2298 = vadd.f32 %v2188, %v2288
      %v2299 = vadd.f32 %v2189, %v2290
      %2300 = vrot.lane.b32.xlu0 %v1615, 113
      %v2301 = vpop.permute.xlu0 %2300
      %2302 = vrot.lane.b32.xlu0 %v1617, 113
      %v2303 = vpop.permute.xlu0 %2302
      %2304 = vrot.lane.b32.xlu0 %v1619, 113
      %v2305 = vpop.permute.xlu0 %2304
      %2306 = vrot.lane.b32.xlu0 %v1616, 113
      %v2307 = vpop.permute.xlu0 %2306
      %2308 = vrot.lane.b32.xlu0 %v1618, 113
      %v2309 = vpop.permute.xlu0 %2308
      %2310 = vrot.lane.b32.xlu0 %v1620, 113
      %v2311 = vpop.permute.xlu0 %2310
      %vm2312 = vcmp.lt.s32.totalorder %v1622, 113
      %v2313 = vsel %vm2312, %v2301, %v2307
      %v2314 = vsel %vm2312, %v2303, %v2309
      %v2315 = vsel %vm2312, %v2305, %v2311
      %v2316 = vsel %vm2312, %v2307, %v2301
      %v2317 = vsel %vm2312, %v2309, %v2303
      %v2318 = vsel %vm2312, %v2311, %v2305
      %v2319 = vmul.f32 %v1658, %v1664
      %v2320 = vmul.f32 %v1659, %v1665
      %v2321 = vmul.f32 %v2313, %v2319
      %v2322 = vmul.f32 %v2316, %v2320
      %v2323 = vmul.f32 %v2314, %v2319
      %v2324 = vmul.f32 %v2317, %v2320
      %v2325 = vmul.f32 %v2315, %v2319
      %v2326 = vmul.f32 %v2318, %v2320
      %s2327 = scalar_lea.vmem %s9, 72
      %v2328 = vld [vmem:[%s2327] sm:$0xf]
      %v2329 = vld [vmem:[%s2327 + $0x4] sm:$0xf]
      %v2330 = vld [vmem:[%s2327 + $0x8] sm:$0xf]
      %v2331 = vpack.c.bf16 %v2323, %v2321
      %v2332 = vpack.c.bf16 %v2324, %v2322
      %v2333 = vpack.c.bf16 %v2325, %v2325
      %v2334 = vpack.c.bf16 %v2326, %v2326
      %v2338 = vunpack.c.l.b16 %v2328
      %v2339 = vunpack.c.l.b16 %v2329
      %v2340 = vunpack.c.l.b16 %v2330
      %v2341 = vpack.c.b16 %v2339, %v2338
      %v2342 = vpack.c.b16 %v2340, %v2340
      %v2344 = vsel %vm1747, %v2341, 0
      %v2347 = vsel %vm1747, %v2342, 0
      %v2350 = vsel %vm1754, %v2333, 0
      %v2353 = vsel %vm1754, %v2334, 0
      %2355 = vmatprep.subr.bf16.mxu0 0
      %2356 = vmatpush1.bf16.msra.mxu0 0
      %2357 = vmatprep.subr.bf16.mxu0 0
      %2358 = vmatpush1.bf16.msra.mxu0 0
      %2359 = vmatprep.subr.bf16.mxu0 0
      %2360 = vmatpush1.bf16.msra.mxu0 0
      %2361 = vmatprep.subr.bf16.mxu0 0
      %2362 = vmatpush1.bf16.msra.mxu0 0
      %2363 = vmatprep.subr.bf16.mxu0 0
      %2364 = vmatpush1.bf16.msra.mxu0 0
      %2365 = vmatprep.subr.bf16.mxu0 0
      %2366 = vmatpush1.bf16.msra.mxu0 0
      %2367 = vmatprep.subr.bf16.mxu0 %v2353
      %2368 = vmatpush1.bf16.msra.mxu0 %v2350
      %2369 = vmatprep.subr.bf16.mxu0 %v2332
      %2370 = vmatpush1.bf16.msra.mxu0 %v2331
      %2371 = vmatprep.subr.bf16.mxu0 0
      %2372 = vmatpush2.bf16.msra.mxu0 0
      %2373 = vmatprep.subr.bf16.mxu0 0
      %2374 = vmatpush2.bf16.msra.mxu0 0
      %2375 = vmatprep.subr.bf16.mxu0 0
      %2376 = vmatpush2.bf16.msra.mxu0 0
      %2377 = vmatprep.subr.bf16.mxu0 0
      %2378 = vmatpush2.bf16.msra.mxu0 0
      %2379 = vmatprep.subr.bf16.mxu0 0
      %2380 = vmatpush2.bf16.msra.mxu0 0
      %2381 = vmatprep.subr.bf16.mxu0 0
      %2382 = vmatpush2.bf16.msra.mxu0 0
      %2383 = vmatprep.subr.bf16.mxu0 0
      %2384 = vmatpush2.bf16.msra.mxu0 0
      %2385 = vmatprep.subr.bf16.mxu0 0
      %2386 = vmatpush2.bf16.msra.mxu0 0
      %2387 = vmatprep.mubr.bf16.mxu0 0
      %2388 = vmatmul.mubr.bf16.gmra.mxu0 %v2344
      %v2389 = vpop.f32.mrf.mxu0
      %v2390 = vadd.f32 0.0, %v2389
      %v2391 = vpop.f32.mrf.mxu0
      %v2392 = vadd.f32 0.0, %v2391
      %v2393 = vpop.f32.mrf.mxu0
      %v2394 = vadd.f32 0.0, %v2393
      %v2395 = vpop.f32.mrf.mxu0
      %v2396 = vadd.f32 0.0, %v2395
      %2397 = vmatprep.mubr.bf16.mxu0 0
      %2398 = vmatmul.mubr.bf16.gmra.mxu0 %v2347
      %v2399 = vpop.f32.mrf.mxu0
      %v2400 = vadd.f32 0.0, %v2399
      %v2401 = vpop.f32.mrf.mxu0
      %v2402 = vadd.f32 0.0, %v2401
      %v2403 = vpop.f32.mrf.mxu0
      %v2404 = vpop.f32.mrf.mxu0
      %2405 = vdwg.mxu0
      %v2406 = vadd.f32 %v2294, %v2390
      %v2407 = vadd.f32 %v2295, %v2392
      %v2408 = vadd.f32 %v2296, %v2394
      %v2409 = vadd.f32 %v2297, %v2396
      %v2410 = vadd.f32 %v2298, %v2400
      %v2411 = vadd.f32 %v2299, %v2402
      %2412 = vrot.lane.b32.xlu0 %v1615, 112
      %v2413 = vpop.permute.xlu0 %2412
      %2414 = vrot.lane.b32.xlu0 %v1617, 112
      %v2415 = vpop.permute.xlu0 %2414
      %2416 = vrot.lane.b32.xlu0 %v1619, 112
      %v2417 = vpop.permute.xlu0 %2416
      %2418 = vrot.lane.b32.xlu0 %v1616, 112
      %v2419 = vpop.permute.xlu0 %2418
      %2420 = vrot.lane.b32.xlu0 %v1618, 112
      %v2421 = vpop.permute.xlu0 %2420
      %2422 = vrot.lane.b32.xlu0 %v1620, 112
      %v2423 = vpop.permute.xlu0 %2422
      %vm2424 = vcmp.lt.s32.totalorder %v1622, 112
      %v2425 = vsel %vm2424, %v2413, %v2419
      %v2426 = vsel %vm2424, %v2415, %v2421
      %v2427 = vsel %vm2424, %v2417, %v2423
      %v2428 = vsel %vm2424, %v2419, %v2413
      %v2429 = vsel %vm2424, %v2421, %v2415
      %v2430 = vsel %vm2424, %v2423, %v2417
      %v2431 = vmul.f32 %v2425, %v1658
      %v2432 = vmul.f32 %v2428, %v1659
      %v2433 = vmul.f32 %v2426, %v1658
      %v2434 = vmul.f32 %v2429, %v1659
      %v2435 = vmul.f32 %v2427, %v1658
      %v2436 = vmul.f32 %v2430, %v1659
      %s2437 = scalar_lea.vmem %s9, 84
      %v2438 = vld [vmem:[%s2437] sm:$0xf]
      %v2439 = vld [vmem:[%s2437 + $0x4] sm:$0xf]
      %v2440 = vld [vmem:[%s2437 + $0x8] sm:$0xf]
      %v2441 = vpack.c.bf16 %v2433, %v2431
      %v2442 = vpack.c.bf16 %v2434, %v2432
      %v2443 = vpack.c.bf16 %v2435, %v2435
      %v2444 = vpack.c.bf16 %v2436, %v2436
      %v2448 = vunpack.c.l.b16 %v2438
      %v2449 = vunpack.c.l.b16 %v2439
      %v2450 = vunpack.c.l.b16 %v2440
      %v2451 = vpack.c.b16 %v2449, %v2448
      %v2452 = vpack.c.b16 %v2450, %v2450
      %v2454 = vsel %vm1747, %v2451, 0
      %v2457 = vsel %vm1747, %v2452, 0
      %v2460 = vsel %vm1754, %v2443, 0
      %v2463 = vsel %vm1754, %v2444, 0
      %2465 = vmatprep.subr.bf16.mxu0 0
      %2466 = vmatpush1.bf16.msra.mxu0 0
      %2467 = vmatprep.subr.bf16.mxu0 0
      %2468 = vmatpush1.bf16.msra.mxu0 0
      %2469 = vmatprep.subr.bf16.mxu0 0
      %2470 = vmatpush1.bf16.msra.mxu0 0
      %2471 = vmatprep.subr.bf16.mxu0 0
      %2472 = vmatpush1.bf16.msra.mxu0 0
      %2473 = vmatprep.subr.bf16.mxu0 0
      %2474 = vmatpush1.bf16.msra.mxu0 0
      %2475 = vmatprep.subr.bf16.mxu0 0
      %2476 = vmatpush1.bf16.msra.mxu0 0
      %2477 = vmatprep.subr.bf16.mxu0 %v2463
      %2478 = vmatpush1.bf16.msra.mxu0 %v2460
      %2479 = vmatprep.subr.bf16.mxu0 %v2442
      %2480 = vmatpush1.bf16.msra.mxu0 %v2441
      %2481 = vmatprep.subr.bf16.mxu0 0
      %2482 = vmatpush2.bf16.msra.mxu0 0
      %2483 = vmatprep.subr.bf16.mxu0 0
      %2484 = vmatpush2.bf16.msra.mxu0 0
      %2485 = vmatprep.subr.bf16.mxu0 0
      %2486 = vmatpush2.bf16.msra.mxu0 0
      %2487 = vmatprep.subr.bf16.mxu0 0
      %2488 = vmatpush2.bf16.msra.mxu0 0
      %2489 = vmatprep.subr.bf16.mxu0 0
      %2490 = vmatpush2.bf16.msra.mxu0 0
      %2491 = vmatprep.subr.bf16.mxu0 0
      %2492 = vmatpush2.bf16.msra.mxu0 0
      %2493 = vmatprep.subr.bf16.mxu0 0
      %2494 = vmatpush2.bf16.msra.mxu0 0
      %2495 = vmatprep.subr.bf16.mxu0 0
      %2496 = vmatpush2.bf16.msra.mxu0 0
      %2497 = vmatprep.mubr.bf16.mxu0 0
      %2498 = vmatmul.mubr.bf16.gmra.mxu0 %v2454
      %v2499 = vpop.f32.mrf.mxu0
      %v2500 = vadd.f32 0.0, %v2499
      %v2501 = vpop.f32.mrf.mxu0
      %v2502 = vadd.f32 0.0, %v2501
      %v2503 = vpop.f32.mrf.mxu0
      %v2504 = vadd.f32 0.0, %v2503
      %v2505 = vpop.f32.mrf.mxu0
      %v2506 = vadd.f32 0.0, %v2505
      %2507 = vmatprep.mubr.bf16.mxu0 0
      %2508 = vmatmul.mubr.bf16.gmra.mxu0 %v2457
      %v2509 = vpop.f32.mrf.mxu0
      %v2510 = vadd.f32 0.0, %v2509
      %v2511 = vpop.f32.mrf.mxu0
      %v2512 = vadd.f32 0.0, %v2511
      %v2513 = vpop.f32.mrf.mxu0
      %v2514 = vpop.f32.mrf.mxu0
      %2515 = vdwg.mxu0
      %v2516 = vadd.f32 %v2406, %v2500
      %v2517 = vadd.f32 %v2407, %v2502
      %v2518 = vadd.f32 %v2408, %v2504
      %v2519 = vadd.f32 %v2409, %v2506
      %v2520 = vadd.f32 %v2410, %v2510
      %v2521 = vadd.f32 %v2411, %v2512
      %2522 = vrot.lane.b32.xlu0 %v1615, 111
      %v2523 = vpop.permute.xlu0 %2522
      %2524 = vrot.lane.b32.xlu0 %v1617, 111
      %v2525 = vpop.permute.xlu0 %2524
      %2526 = vrot.lane.b32.xlu0 %v1619, 111
      %v2527 = vpop.permute.xlu0 %2526
      %2528 = vrot.lane.b32.xlu0 %v1616, 111
      %v2529 = vpop.permute.xlu0 %2528
      %2530 = vrot.lane.b32.xlu0 %v1618, 111
      %v2531 = vpop.permute.xlu0 %2530
      %2532 = vrot.lane.b32.xlu0 %v1620, 111
      %v2533 = vpop.permute.xlu0 %2532
      %vm2534 = vcmp.lt.s32.totalorder %v1622, 111
      %v2535 = vsel %vm2534, %v2523, %v2529
      %v2536 = vsel %vm2534, %v2525, %v2531
      %v2537 = vsel %vm2534, %v2527, %v2533
      %v2538 = vsel %vm2534, %v2529, %v2523
      %v2539 = vsel %vm2534, %v2531, %v2525
      %v2540 = vsel %vm2534, %v2533, %v2527
      %v2541 = vmul.f32 %v1658, %v1670
      %v2542 = vmul.f32 %v1659, %v1671
      %v2543 = vmul.f32 %v2535, %v2541
      %v2544 = vmul.f32 %v2538, %v2542
      %v2545 = vmul.f32 %v2536, %v2541
      %v2546 = vmul.f32 %v2539, %v2542
      %v2547 = vmul.f32 %v2537, %v2541
      %v2548 = vmul.f32 %v2540, %v2542
      %s2549 = scalar_lea.vmem %s9, 96
      %v2550 = vld [vmem:[%s2549] sm:$0xf]
      %v2551 = vld [vmem:[%s2549 + $0x4] sm:$0xf]
      %v2552 = vld [vmem:[%s2549 + $0x8] sm:$0xf]
      %v2553 = vpack.c.bf16 %v2545, %v2543
      %v2554 = vpack.c.bf16 %v2546, %v2544
      %v2555 = vpack.c.bf16 %v2547, %v2547
      %v2556 = vpack.c.bf16 %v2548, %v2548
      %v2560 = vunpack.c.l.b16 %v2550
      %v2561 = vunpack.c.l.b16 %v2551
      %v2562 = vunpack.c.l.b16 %v2552
      %v2563 = vpack.c.b16 %v2561, %v2560
      %v2564 = vpack.c.b16 %v2562, %v2562
      %v2566 = vsel %vm1747, %v2563, 0
      %v2569 = vsel %vm1747, %v2564, 0
      %v2572 = vsel %vm1754, %v2555, 0
      %v2575 = vsel %vm1754, %v2556, 0
      %2577 = vmatprep.subr.bf16.mxu0 0
      %2578 = vmatpush1.bf16.msra.mxu0 0
      %2579 = vmatprep.subr.bf16.mxu0 0
      %2580 = vmatpush1.bf16.msra.mxu0 0
      %2581 = vmatprep.subr.bf16.mxu0 0
      %2582 = vmatpush1.bf16.msra.mxu0 0
      %2583 = vmatprep.subr.bf16.mxu0 0
      %2584 = vmatpush1.bf16.msra.mxu0 0
      %2585 = vmatprep.subr.bf16.mxu0 0
      %2586 = vmatpush1.bf16.msra.mxu0 0
      %2587 = vmatprep.subr.bf16.mxu0 0
      %2588 = vmatpush1.bf16.msra.mxu0 0
      %2589 = vmatprep.subr.bf16.mxu0 %v2575
      %2590 = vmatpush1.bf16.msra.mxu0 %v2572
      %2591 = vmatprep.subr.bf16.mxu0 %v2554
      %2592 = vmatpush1.bf16.msra.mxu0 %v2553
      %2593 = vmatprep.subr.bf16.mxu0 0
      %2594 = vmatpush2.bf16.msra.mxu0 0
      %2595 = vmatprep.subr.bf16.mxu0 0
      %2596 = vmatpush2.bf16.msra.mxu0 0
      %2597 = vmatprep.subr.bf16.mxu0 0
      %2598 = vmatpush2.bf16.msra.mxu0 0
      %2599 = vmatprep.subr.bf16.mxu0 0
      %2600 = vmatpush2.bf16.msra.mxu0 0
      %2601 = vmatprep.subr.bf16.mxu0 0
      %2602 = vmatpush2.bf16.msra.mxu0 0
      %2603 = vmatprep.subr.bf16.mxu0 0
      %2604 = vmatpush2.bf16.msra.mxu0 0
      %2605 = vmatprep.subr.bf16.mxu0 0
      %2606 = vmatpush2.bf16.msra.mxu0 0
      %2607 = vmatprep.subr.bf16.mxu0 0
      %2608 = vmatpush2.bf16.msra.mxu0 0
      %2609 = vmatprep.mubr.bf16.mxu0 0
      %2610 = vmatmul.mubr.bf16.gmra.mxu0 %v2566
      %v2611 = vpop.f32.mrf.mxu0
      %v2612 = vadd.f32 0.0, %v2611
      %v2613 = vpop.f32.mrf.mxu0
      %v2614 = vadd.f32 0.0, %v2613
      %v2615 = vpop.f32.mrf.mxu0
      %v2616 = vadd.f32 0.0, %v2615
      %v2617 = vpop.f32.mrf.mxu0
      %v2618 = vadd.f32 0.0, %v2617
      %2619 = vmatprep.mubr.bf16.mxu0 0
      %2620 = vmatmul.mubr.bf16.gmra.mxu0 %v2569
      %v2621 = vpop.f32.mrf.mxu0
      %v2622 = vadd.f32 0.0, %v2621
      %v2623 = vpop.f32.mrf.mxu0
      %v2624 = vadd.f32 0.0, %v2623
      %v2625 = vpop.f32.mrf.mxu0
      %v2626 = vpop.f32.mrf.mxu0
      %2627 = vdwg.mxu0
      %v2628 = vadd.f32 %v2516, %v2612
      %v2629 = vadd.f32 %v2517, %v2614
      %v2630 = vadd.f32 %v2518, %v2616
      %v2631 = vadd.f32 %v2519, %v2618
      %v2632 = vadd.f32 %v2520, %v2622
      %v2633 = vadd.f32 %v2521, %v2624
      %v2634 = vld [vmem:[%s10] sm:$0xff]
      %v2635 = vld [vmem:[%s10 + $0x8] sm:$0xff]
      %v2636 = vld [vmem:[%s10 + $0x10] sm:$0xff]
      %2638 = vset.pattern.permute.xlu0 0
      %2639 = vperm.xlu0 %2638, %v2634
      %v2640 = vpop.permute.xlu0 %2639
      %2643 = vset.pattern.permute.xlu0 0
      %2644 = vperm.xlu0 %2643, %v2635
      %v2645 = vpop.permute.xlu0 %2644
      %2648 = vset.pattern.permute.xlu0 0
      %2649 = vperm.xlu0 %2648, %v2636
      %v2650 = vpop.permute.xlu0 %2649
      %v2652 = vadd.f32 %v2628, %v2640
      %v2653 = vadd.f32 %v2629, %v2640
      %v2654 = vadd.f32 %v2630, %v2645
      %v2655 = vadd.f32 %v2631, %v2645
      %v2656 = vadd.f32 %v2632, %v2650
      %v2657 = vadd.f32 %v2633, %v2650
      %vm2658 = vcmp.ge.f32.partialorder %v2652, 0.0
      %vm2659 = vcmp.ge.f32.partialorder %v2653, 0.0
      %vm2660 = vcmp.ge.f32.partialorder %v2654, 0.0
      %vm2661 = vcmp.ge.f32.partialorder %v2655, 0.0
      %vm2662 = vcmp.ge.f32.partialorder %v2656, 0.0
      %vm2663 = vcmp.ge.f32.partialorder %v2657, 0.0
      %v2664 = vmul.f32 %v2652, 0.01
      %v2665 = vmul.f32 %v2653, 0.01
      %v2666 = vmul.f32 %v2654, 0.01
      %v2667 = vmul.f32 %v2655, 0.01
      %v2668 = vmul.f32 %v2656, 0.01
      %v2669 = vmul.f32 %v2657, 0.01
      %v2670 = vsel %vm2658, %v2652, %v2664
      %v2671 = vsel %vm2659, %v2653, %v2665
      %v2672 = vsel %vm2660, %v2654, %v2666
      %v2673 = vsel %vm2661, %v2655, %v2667
      %v2674 = vsel %vm2662, %v2656, %v2668
      %v2675 = vsel %vm2663, %v2657, %v2669
      %v2676 = vld [vmem:[%s11] sm:$0x3]
      %v2677 = vpack.c.bf16 %v2672, %v2670
      %v2678 = vpack.c.bf16 %v2673, %v2671
      %v2679 = vpack.c.bf16 %v2674, %v2674
      %v2680 = vpack.c.bf16 %v2675, %v2675
      %v2681 = vld [vmem:[%s12] sm:$0xf]
      %2683 = vset.pattern.permute.xlu0 0
      %2684 = vperm.xlu0 %2683, %v2681
      %v2685 = vpop.permute.xlu0 %2684
      %v2688 = vsel %vm1747, %v2676, 0
      %v2691 = vsel %vm1754, %v2679, 0
      %v2694 = vsel %vm1754, %v2680, 0
      %2696 = vmatprep.subr.bf16.mxu0 0
      %2697 = vmatpush1.bf16.msra.mxu0 0
      %2698 = vmatprep.subr.bf16.mxu0 0
      %2699 = vmatpush1.bf16.msra.mxu0 0
      %2700 = vmatprep.subr.bf16.mxu0 0
      %2701 = vmatpush1.bf16.msra.mxu0 0
      %2702 = vmatprep.subr.bf16.mxu0 0
      %2703 = vmatpush1.bf16.msra.mxu0 0
      %2704 = vmatprep.subr.bf16.mxu0 0
      %2705 = vmatpush1.bf16.msra.mxu0 0
      %2706 = vmatprep.subr.bf16.mxu0 0
      %2707 = vmatpush1.bf16.msra.mxu0 0
      %2708 = vmatprep.subr.bf16.mxu0 %v2694
      %2709 = vmatpush1.bf16.msra.mxu0 %v2691
      %2710 = vmatprep.subr.bf16.mxu0 %v2678
      %2711 = vmatpush1.bf16.msra.mxu0 %v2677
      %2712 = vmatprep.subr.bf16.mxu0 0
      %2713 = vmatpush2.bf16.msra.mxu0 0
      %2714 = vmatprep.subr.bf16.mxu0 0
      %2715 = vmatpush2.bf16.msra.mxu0 0
      %2716 = vmatprep.subr.bf16.mxu0 0
      %2717 = vmatpush2.bf16.msra.mxu0 0
      %2718 = vmatprep.subr.bf16.mxu0 0
      %2719 = vmatpush2.bf16.msra.mxu0 0
      %2720 = vmatprep.subr.bf16.mxu0 0
      %2721 = vmatpush2.bf16.msra.mxu0 0
      %2722 = vmatprep.subr.bf16.mxu0 0
      %2723 = vmatpush2.bf16.msra.mxu0 0
      %2724 = vmatprep.subr.bf16.mxu0 0
      %2725 = vmatpush2.bf16.msra.mxu0 0
      %2726 = vmatprep.subr.bf16.mxu0 0
      %2727 = vmatpush2.bf16.msra.mxu0 0
      %2728 = vmatprep.mubr.bf16.mxu0 0
      %2729 = vmatmul.mubr.bf16.gmra.mxu0 %v2688
      %v2730 = vpop.f32.mrf.mxu0
      %v2731 = vadd.f32 %v2685, %v2730
      %v2732 = vpop.f32.mrf.mxu0
      %v2733 = vadd.f32 %v2685, %v2732
      %v2734 = vpop.f32.mrf.mxu0
      %v2735 = vpop.f32.mrf.mxu0
      %2736 = vdwg.mxu0
      %v2739 = vcombine.low %v2731, %v2733
      %2741 = vst [vmem:[%s480] sm:$0xff] %v2739
      %p2742 = scmp.lt.s32.totalorder %s24, 1
      %s2743 = scalar_select %p2742, %s24, 1
      %s2744 = smul.addr %s2743, 2
      %s2745 = smul.addr %s2744, 4
      %s2746 = scalar_lea.vmem %s13, %s2745
      // Predicated region
      $region73: #{hb_combine_block_forward.1} parent=71 // pred_check
        %p2747 = pneg %p330
      $region74: #{hb_combine_block_forward.1} parent=71 // pred_check_branch
        %2749 = sbr.rel (%p2747) target = $region76
      $region75: #{hb_combine_block_forward.1} parent=71 // pred_region
        _
      $region76: #{hb_combine_block_forward.1} parent=71 // pred_fallthru
        _
    $region72: #{hb_combine_block_forward.1} parent=5 // pred_fallthru
      _
    %p2750 = scmp.le.s32.totalorder 2, %s19
    // Predicated region
    $region77: #{hb_combine_block_forward.1} parent=5 // pred_check
      %p2751 = pneg %p2750
    $region78: #{hb_combine_block_forward.1} parent=5 // pred_check_branch
      %2753 = sbr.rel (%p2751) target = $region80
    $region79: #{hb_combine_block_forward.1} parent=5 // pred_region
      %s2754 = ssub.s32 %s19, 2
      // Predicated region
      $region81: #{hb_combine_block_forward.1} parent=79 // pred_check
        %p2755 = pneg %p336
      $region82: #{hb_combine_block_forward.1} parent=79 // pred_check_branch
        %2757 = sbr.rel (%p2755) target = $region84
      $region83: #{hb_combine_block_forward.1} parent=79 // pred_region
        %p2758 = scmp.lt.s32.totalorder %s25, 1
        %s2759 = scalar_select %p2758, %s25, 1
        %s2760 = smul.addr %s2759, 2
        %s2761 = smul.addr %s2760, 4
        %s2762 = scalar_lea.vmem %s13, %s2761
      $region84: #{hb_combine_block_forward.1} parent=79 // pred_fallthru
        _
    $region80: #{hb_combine_block_forward.1} parent=5 // pred_fallthru
      _
  $region6: #{hb_combine_block_forward.1} parent=0 // loop_footer
    %s23 = sadd.s32 1, %s19
  $region7: #{hb_combine_block_forward.1} parent=0 // loop_footer_branch
    %18 = sbr.rel target = $region3
  $region8: #{hb_combine_block_forward.1} parent=0 // loop_exit
    _

</llo_original>
